<compile_context>
chip_gen: v7x
topology: tpu7x:2x2x1
jax: 0.10.0
libtpu: 0.0.40
codegen_flags: <defaults>
</compile_context>

<pallas_src>
import math
import functools
import numpy as np

import jax
import jax.numpy as jnp
from jax import lax
from jax.experimental import pallas as pl
from jax.experimental.pallas import tpu as pltpu

# -------------------- config (small synthetic sizes) -----------------------
# real module: hidden_size=1024, ResNet50 visual backbone, CLIP RN50 text model
B, T, C, H, W = 2, 8, 3, 16, 16
D_MODEL = 128          # hidden_size (real: 1024); 128 keeps the lane axis dense
N_HEADS = 4            # args.tfm_heads   -> head_dim = 32
N_LAYERS = 2           # args.tfm_layers
D_FF = 256             # transformer feed-forward width (multiple of 128)
N_SENT = 2             # sentences per video caption
L_TOK = 8              # tokens per sentence
VOCAB = 64
D_EMB = 16             # token-embedding dim for the text stand-in (L_TOK*D_EMB=128)

STACKED = ['wqkv', 'bqkv', 'wo', 'bo', 'g1', 'be1',
           'w1', 'b1', 'w2', 'b2', 'g2', 'be2']


# ------------------------------ kernels -------------------------------------
def fused_video_kernel(frames_ref, wimg_ref, bimg_ref, pos_ref,
                       wqkv_ref, bqkv_ref, wo_ref, bo_ref,
                       g1_ref, be1_ref, w1_ref, b1_ref,
                       w2_ref, b2_ref, g2_ref, be2_ref,
                       o_ref, *, nhead, nlayers):
    """Frame projection + positional add + full causal transformer stack for
    one batch element, fully resident in VMEM."""
    f32, bf16 = jnp.float32, jnp.bfloat16

    def mdot(a, bmat):
        # bf16 MXU inputs, f32 accumulation (fast on v5e/v6e/v7x)
        return jnp.dot(a.astype(bf16), bmat.astype(bf16),
                       preferred_element_type=f32)

    def layernorm(x, g, be):
        mu = jnp.mean(x, axis=-1, keepdims=True)
        var = jnp.mean((x - mu) ** 2, axis=-1, keepdims=True)
        return (x - mu) * lax.rsqrt(var + 1e-5) * g + be

    # ---- frame features: avg-pool fused into the projection weight ----------
    # TODO(synk): real path is the frozen ResNet50 ViP/CLIP visual backbone.
    frames = frames_ref[0]                                 # (T, C*H*W)
    x = mdot(frames, wimg_ref[...]) + bimg_ref[...]        # (T, D)
    x = x + pos_ref[...]                                   # positional embedding (fused)

    t, d = x.shape
    hd = d // nhead
    scale = 1.0 / math.sqrt(hd)

    # causal mask == nn.Transformer.generate_square_subsequent_mask
    row = lax.broadcasted_iota(jnp.int32, (t, t), 0)
    col = lax.broadcasted_iota(jnp.int32, (t, t), 1)
    neg = jnp.where(col > row, jnp.float32(-1e30), jnp.float32(0.0))

    def layer_body(l, x):
        # fused QKV projection: single (T, D) x (D, 3D) matmul
        qkv = mdot(x, wqkv_ref[l]) + bqkv_ref[l]           # (T, 3D)
        qh = qkv[:, 0 * d:1 * d].reshape(t, nhead, hd).astype(bf16)
        kh = qkv[:, 1 * d:2 * d].reshape(t, nhead, hd).astype(bf16)
        vh = qkv[:, 2 * d:3 * d].reshape(t, nhead, hd).astype(bf16)

        # batched-over-heads attention (no per-head Python loop / concat)
        s = jnp.einsum('qhd,khd->hqk', qh, kh,
                       preferred_element_type=f32) * scale + neg[None]
        s = s - jnp.max(s, axis=-1, keepdims=True)
        p = jnp.exp(s)
        p = p * pl.reciprocal(jnp.sum(p, axis=-1, keepdims=True), approx=True)
        attn = jnp.einsum('hqk,khd->qhd', p.astype(bf16), vh,
                          preferred_element_type=f32).reshape(t, d)
        attn = mdot(attn, wo_ref[l]) + bo_ref[l]

        # residual + LayerNorm 1 (post-LN, matches nn.TransformerEncoderLayer)
        x = layernorm(x + attn, g1_ref[l], be1_ref[l])

        # feed-forward (ReLU) + residual + LayerNorm 2
        h1 = jnp.maximum(mdot(x, w1_ref[l]) + b1_ref[l], 0.0)
        ff = mdot(h1, w2_ref[l]) + b2_ref[l]
        x = layernorm(x + ff, g2_ref[l], be2_ref[l])
        return x

    x = lax.fori_loop(0, nlayers, layer_body, x)
    o_ref[0] = x


def text_feature_kernel(e_ref, w_ref, b_ref, o_ref):
    # TODO(synk): real path is clip.tokenize + frozen CLIP encode_text; the
    # stand-in mean-pools token embeddings, with the pool folded into w_ref.
    o_ref[...] = (jnp.dot(e_ref[...].astype(jnp.bfloat16),
                          w_ref[...].astype(jnp.bfloat16),
                          preferred_element_type=jnp.float32)
                  + b_ref[...])


# ------------------------------ wrappers ------------------------------------
def _rep_spec(shape):
    nd = len(shape)
    return pl.BlockSpec(shape, lambda i, _nd=nd: (0,) * _nd)


def temporal_video_features(frames_flat, w_img, b_img, pos, params):
    """frames_flat: (B, T, C*H*W) -> (B, T, D) through the fused kernel."""
    b, t, chw = frames_flat.shape
    d = w_img.shape[1]

    in_specs = [pl.BlockSpec((1, t, chw), lambda i: (i, 0, 0)),
                _rep_spec(w_img.shape), _rep_spec(b_img.shape),
                _rep_spec(pos.shape)]
    args = [frames_flat, w_img, b_img, pos]
    for name in STACKED:
        p = params[name]
        in_specs.append(_rep_spec(p.shape))
        args.append(p)

    return pl.pallas_call(
        functools.partial(fused_video_kernel, nhead=N_HEADS, nlayers=N_LAYERS),
        out_shape=jax.ShapeDtypeStruct((b, t, d), jnp.float32),
        grid=(b,),
        in_specs=in_specs,
        out_specs=pl.BlockSpec((1, t, d), lambda i: (i, 0, 0)),
        compiler_params=pltpu.CompilerParams(dimension_semantics=("parallel",)),
    )(*args)


def text_features(emb_flat, w_flat, b):
    bn = emb_flat.shape[0]
    d = w_flat.shape[1]
    return pl.pallas_call(
        text_feature_kernel,
        out_shape=jax.ShapeDtypeStruct((bn, d), jnp.float32),
    )(emb_flat, w_flat, b)


def generate_position_embedding(seq_len, d_model):
    pos = np.arange(seq_len, dtype=np.float32)[:, None]
    div = np.exp(np.arange(0, d_model, 2, dtype=np.float32)
                 * (-math.log(10000.0) / d_model))
    pe = np.zeros((seq_len, d_model), dtype=np.float32)
    pe[:, 0::2] = np.sin(pos * div)
    pe[:, 1::2] = np.cos(pos * div)
    return jnp.asarray(pe)


def videovip_forward(videos, caption_tokens, params):
    """videos: (B, T, C, H, W); caption_tokens: (B, N_SENT, L_TOK) int32."""
    b, t, c, h, w = videos.shape
    chw = c * h * w

    # ---- video branch: fused frame projection + temporal transformer --------
    frames_flat = videos.reshape(b, t, chw)
    # fold the global-average-pool into the projection weight:
    #   w'[c*H*W + k, :] = img_w[c, :] / (H*W)
    w_img = jnp.repeat(params['img_w'], h * w, axis=0) / float(h * w)   # (CHW, D)
    pos = generate_position_embedding(t, D_MODEL)
    vfeat = temporal_video_features(frames_flat, w_img, params['img_b'], pos, params)

    # ---- text branch ---------------------------------------------------------
    # TODO(synk): real path is clip.tokenize + frozen CLIP RN50 encode_text.
    emb = jnp.take(params['tok_emb'], caption_tokens, axis=0)           # (B, N, L, De)
    emb_flat = emb.reshape(b * N_SENT, L_TOK * D_EMB)
    # fold the token mean-pool into the projection weight:
    #   w'[l*De + e, :] = txt_w[e, :] / L
    w_txt = jnp.tile(params['txt_w'], (L_TOK, 1)) / float(L_TOK)        # (L*De, D)
    cfeat = text_features(emb_flat, w_txt, params['txt_b'])
    return vfeat, cfeat.reshape(b, N_SENT, D_MODEL)


# ------------------------------ params --------------------------------------
def init_params(key):
    ks = jax.random.split(key, 8)

    def nrm(k, shape, scale=0.02):
        return (scale * jax.random.normal(k, shape)).astype(jnp.float32)

    d, f, L = D_MODEL, D_FF, N_LAYERS
    return {
        'img_w': nrm(ks[0], (C, d), 0.1),
        'img_b': jnp.zeros((1, d), jnp.float32),
        'tok_emb': nrm(ks[1], (VOCAB, D_EMB), 0.1),
        'txt_w': nrm(ks[2], (D_EMB, d), 0.1),
        'txt_b': jnp.zeros((1, d), jnp.float32),
        # transformer layer weights stacked along a leading layer axis
        'wqkv': nrm(ks[3], (L, d, 3 * d)),
        'bqkv': jnp.zeros((L, 1, 3 * d), jnp.float32),
        'wo': nrm(ks[4], (L, d, d)),
        'bo': jnp.zeros((L, 1, d), jnp.float32),
        'g1': jnp.ones((L, 1, d), jnp.float32),
        'be1': jnp.zeros((L, 1, d), jnp.float32),
        'w1': nrm(ks[5], (L, d, f)),
        'b1': jnp.zeros((L, 1, f), jnp.float32),
        'w2': nrm(ks[6], (L, f, d)),
        'b2': jnp.zeros((L, 1, d), jnp.float32),
        'g2': jnp.ones((L, 1, d), jnp.float32),
        'be2': jnp.zeros((L, 1, d), jnp.float32),
    }


# ------------------------------- main ----------------------------------------
if __name__ == "__main__":
    key = jax.random.PRNGKey(0)
    k_param, k_vid, k_cap = jax.random.split(key, 3)

    params = init_params(k_param)
    videos = jax.random.normal(k_vid, (B, T, C, H, W), jnp.float32)
    caption_tokens = jax.random.randint(k_cap, (B, N_SENT, L_TOK), 0, VOCAB, jnp.int32)

    vfeat, cfeat = videovip_forward(videos, caption_tokens, params)
    jax.block_until_ready((vfeat, cfeat))

    assert vfeat.shape == (B, T, D_MODEL), vfeat.shape
    assert cfeat.shape == (B, N_SENT, D_MODEL), cfeat.shape
    assert bool(jnp.all(jnp.isfinite(vfeat))) and bool(jnp.all(jnp.isfinite(cfeat)))

    print("KERNEL_OK")
</pallas_src>

<mosaic_0001>
module attributes {stable_mosaic.version = 11 : i64} {
  func.func @fused_video_kernel(%arg0: i32, %arg1: memref<1x8x768xf32, #tpu.memory_space<vmem>>, %arg2: memref<768x128xf32, #tpu.memory_space<vmem>>, %arg3: memref<1x128xf32, #tpu.memory_space<vmem>>, %arg4: memref<8x128xf32, #tpu.memory_space<vmem>>, %arg5: memref<2x128x384xf32, #tpu.memory_space<vmem>>, %arg6: memref<2x1x384xf32, #tpu.memory_space<vmem>>, %arg7: memref<2x128x128xf32, #tpu.memory_space<vmem>>, %arg8: memref<2x1x128xf32, #tpu.memory_space<vmem>>, %arg9: memref<2x1x128xf32, #tpu.memory_space<vmem>>, %arg10: memref<2x1x128xf32, #tpu.memory_space<vmem>>, %arg11: memref<2x128x256xf32, #tpu.memory_space<vmem>>, %arg12: memref<2x1x256xf32, #tpu.memory_space<vmem>>, %arg13: memref<2x256x128xf32, #tpu.memory_space<vmem>>, %arg14: memref<2x1x128xf32, #tpu.memory_space<vmem>>, %arg15: memref<2x1x128xf32, #tpu.memory_space<vmem>>, %arg16: memref<2x1x128xf32, #tpu.memory_space<vmem>>, %arg17: memref<1x8x128xf32, #tpu.memory_space<vmem>>) attributes {dimension_semantics = [#tpu.dimension_semantics<parallel>], iteration_bounds = array<i64: 2>, scalar_prefetch = 0 : i64, scratch_operands = 0 : i64, tpu.core_type = #tpu.core_type<tc>, window_params = [{transform_indices = @transform_0, window_bounds = array<i64: 1, 8, 768>}, {pipeline_mode = #tpu.pipeline_mode<synchronous>, transform_indices = @transform_1, window_bounds = array<i64: 768, 128>}, {pipeline_mode = #tpu.pipeline_mode<synchronous>, transform_indices = @transform_2, window_bounds = array<i64: 1, 128>}, {pipeline_mode = #tpu.pipeline_mode<synchronous>, transform_indices = @transform_3, window_bounds = array<i64: 8, 128>}, {pipeline_mode = #tpu.pipeline_mode<synchronous>, transform_indices = @transform_4, window_bounds = array<i64: 2, 128, 384>}, {pipeline_mode = #tpu.pipeline_mode<synchronous>, transform_indices = @transform_5, window_bounds = array<i64: 2, 1, 384>}, {pipeline_mode = #tpu.pipeline_mode<synchronous>, transform_indices = @transform_6, window_bounds = array<i64: 2, 128, 128>}, {pipeline_mode = #tpu.pipeline_mode<synchronous>, transform_indices = @transform_7, window_bounds = array<i64: 2, 1, 128>}, {pipeline_mode = #tpu.pipeline_mode<synchronous>, transform_indices = @transform_8, window_bounds = array<i64: 2, 1, 128>}, {pipeline_mode = #tpu.pipeline_mode<synchronous>, transform_indices = @transform_9, window_bounds = array<i64: 2, 1, 128>}, {pipeline_mode = #tpu.pipeline_mode<synchronous>, transform_indices = @transform_10, window_bounds = array<i64: 2, 128, 256>}, {pipeline_mode = #tpu.pipeline_mode<synchronous>, transform_indices = @transform_11, window_bounds = array<i64: 2, 1, 256>}, {pipeline_mode = #tpu.pipeline_mode<synchronous>, transform_indices = @transform_12, window_bounds = array<i64: 2, 256, 128>}, {pipeline_mode = #tpu.pipeline_mode<synchronous>, transform_indices = @transform_13, window_bounds = array<i64: 2, 1, 128>}, {pipeline_mode = #tpu.pipeline_mode<synchronous>, transform_indices = @transform_14, window_bounds = array<i64: 2, 1, 128>}, {pipeline_mode = #tpu.pipeline_mode<synchronous>, transform_indices = @transform_15, window_bounds = array<i64: 2, 1, 128>}, {transform_indices = @transform_16, window_bounds = array<i64: 1, 8, 128>}]} {
    %c0 = arith.constant 0 : index
    %c0_0 = arith.constant 0 : index
    %c0_1 = arith.constant 0 : index
    %0 = vector.load %arg1[%c0, %c0_0, %c0_1] : memref<1x8x768xf32, #tpu.memory_space<vmem>>, vector<1x8x768xf32>
    %1 = vector.shape_cast %0 : vector<1x8x768xf32> to vector<8x768xf32>
    %c0_2 = arith.constant 0 : index
    %c0_3 = arith.constant 0 : index
    %2 = vector.load %arg2[%c0_2, %c0_3] : memref<768x128xf32, #tpu.memory_space<vmem>>, vector<768x128xf32>
    %3 = arith.truncf %1 : vector<8x768xf32> to vector<8x768xbf16>
    %4 = arith.truncf %2 : vector<768x128xf32> to vector<768x128xbf16>
    %cst = arith.constant dense<0.000000e+00> : vector<8x128xf32>
    %5 = tpu.matmul %3, %4, %cst {dimension_numbers = #tpu.dot_dimension_numbers<[1], [0], [0], [1], [0, 0, 1, 1], [], []>} : vector<8x768xbf16>, vector<768x128xbf16>, vector<8x128xf32> -> vector<8x128xf32>
    %c0_4 = arith.constant 0 : index
    %c0_5 = arith.constant 0 : index
    %6 = vector.load %arg3[%c0_4, %c0_5] : memref<1x128xf32, #tpu.memory_space<vmem>>, vector<1x128xf32>
    %7 = vector.broadcast %6 : vector<1x128xf32> to vector<8x128xf32>
    %8 = arith.addf %5, %7 : vector<8x128xf32>
    %c0_6 = arith.constant 0 : index
    %c0_7 = arith.constant 0 : index
    %9 = vector.load %arg4[%c0_6, %c0_7] : memref<8x128xf32, #tpu.memory_space<vmem>>, vector<8x128xf32>
    %10 = arith.addf %8, %9 : vector<8x128xf32>
    %11 = tpu.iota {dimensions = array<i32: 0>} : vector<8x8xi32>
    %12 = tpu.iota {dimensions = array<i32: 1>} : vector<8x8xi32>
    %13 = arith.cmpi sgt, %12, %11 : vector<8x8xi32>
    %cst_8 = arith.constant -1.000000e+30 : f32
    %cst_9 = arith.constant 0.000000e+00 : f32
    %14 = vector.broadcast %cst_8 : f32 to vector<8x8xf32>
    %15 = vector.broadcast %cst_9 : f32 to vector<8x8xf32>
    %16 = arith.select %13, %14, %15 : vector<8x8xi1>, vector<8x8xf32>
    %c0_i32 = arith.constant 0 : i32
    %c2_i32 = arith.constant 2 : i32
    %17 = arith.addi %c0_i32, %c2_i32 : i32
    %c1_i32 = arith.constant 1 : i32
    %18 = scf.for %arg18 = %c0_i32 to %17 step %c1_i32 iter_args(%arg19 = %10) -> (vector<8x128xf32>)  : i32 {
      %22 = arith.index_cast %arg18 : i32 to index
      %c0_14 = arith.constant 0 : index
      %c0_15 = arith.constant 0 : index
      %23 = vector.load %arg5[%22, %c0_14, %c0_15] : memref<2x128x384xf32, #tpu.memory_space<vmem>>, vector<1x128x384xf32>
      %24 = vector.shape_cast %23 : vector<1x128x384xf32> to vector<128x384xf32>
      %25 = arith.truncf %arg19 : vector<8x128xf32> to vector<8x128xbf16>
      %26 = arith.truncf %24 : vector<128x384xf32> to vector<128x384xbf16>
      %cst_16 = arith.constant dense<0.000000e+00> : vector<8x384xf32>
      %27 = tpu.matmul %25, %26, %cst_16 {dimension_numbers = #tpu.dot_dimension_numbers<[1], [0], [0], [1], [0, 0, 1, 1], [], []>} : vector<8x128xbf16>, vector<128x384xbf16>, vector<8x384xf32> -> vector<8x384xf32>
      %28 = arith.index_cast %arg18 : i32 to index
      %c0_17 = arith.constant 0 : index
      %c0_18 = arith.constant 0 : index
      %29 = vector.load %arg6[%28, %c0_17, %c0_18] : memref<2x1x384xf32, #tpu.memory_space<vmem>>, vector<1x1x384xf32>
      %30 = vector.shape_cast %29 : vector<1x1x384xf32> to vector<1x384xf32>
      %31 = vector.broadcast %30 : vector<1x384xf32> to vector<8x384xf32>
      %32 = arith.addf %27, %31 : vector<8x384xf32>
      %33 = vector.extract_strided_slice %32 {offsets = [0, 0], sizes = [8, 128], strides = [1, 1]} : vector<8x384xf32> to vector<8x128xf32>
      %34 = vector.shape_cast %33 : vector<8x128xf32> to vector<8x4x32xf32>
      %35 = arith.truncf %34 : vector<8x4x32xf32> to vector<8x4x32xbf16>
      %36 = vector.extract_strided_slice %32 {offsets = [0, 128], sizes = [8, 128], strides = [1, 1]} : vector<8x384xf32> to vector<8x128xf32>
      %37 = vector.shape_cast %36 : vector<8x128xf32> to vector<8x4x32xf32>
      %38 = arith.truncf %37 : vector<8x4x32xf32> to vector<8x4x32xbf16>
      %39 = vector.extract_strided_slice %32 {offsets = [0, 256], sizes = [8, 128], strides = [1, 1]} : vector<8x384xf32> to vector<8x128xf32>
      %40 = vector.shape_cast %39 : vector<8x128xf32> to vector<8x4x32xf32>
      %41 = arith.truncf %40 : vector<8x4x32xf32> to vector<8x4x32xbf16>
      "tpu.trace_start"() <{level = 10 : i32, message = "qhd,khd->hqk"}> : () -> ()
      %cst_19 = arith.constant dense<0.000000e+00> : vector<4x8x8xf32>
      %42 = tpu.matmul %35, %38, %cst_19 {dimension_numbers = #tpu.dot_dimension_numbers<[2], [2], [0], [0], [0, 1, 0, 0, 1, 0], [1], [1]>} : vector<8x4x32xbf16>, vector<8x4x32xbf16>, vector<4x8x8xf32> -> vector<4x8x8xf32>
      "tpu.trace_stop"() : () -> ()
      %cst_20 = arith.constant 0.176776692 : f32
      %43 = vector.broadcast %cst_20 : f32 to vector<4x8x8xf32>
      %44 = arith.mulf %42, %43 : vector<4x8x8xf32>
      %45 = vector.shape_cast %16 : vector<8x8xf32> to vector<1x8x8xf32>
      %46 = vector.broadcast %45 : vector<1x8x8xf32> to vector<4x8x8xf32>
      %47 = arith.addf %44, %46 : vector<4x8x8xf32>
      %cst_21 = arith.constant dense<0xFF800000> : vector<4x8xf32>
      %48 = vector.multi_reduction <maximumf>, %47, %cst_21 [2] : vector<4x8x8xf32> to vector<4x8xf32>
      %49 = vector.shape_cast %48 : vector<4x8xf32> to vector<4x8x1xf32>
      %50 = vector.broadcast %49 : vector<4x8x1xf32> to vector<4x8x8xf32>
      %51 = arith.subf %47, %50 : vector<4x8x8xf32>
      %52 = math.exp %51 : vector<4x8x8xf32>
      %cst_22 = arith.constant dense<0.000000e+00> : vector<4x8xf32>
      %53 = vector.multi_reduction <add>, %52, %cst_22 [2] : vector<4x8x8xf32> to vector<4x8xf32>
      %54 = vector.shape_cast %53 : vector<4x8xf32> to vector<4x8x1xf32>
      %55 = tpu.reciprocal %54 {approx = true} : vector<4x8x1xf32> -> vector<4x8x1xf32>
      %56 = vector.broadcast %55 : vector<4x8x1xf32> to vector<4x8x8xf32>
      %57 = arith.mulf %52, %56 : vector<4x8x8xf32>
      %58 = arith.truncf %57 : vector<4x8x8xf32> to vector<4x8x8xbf16>
      "tpu.trace_start"() <{level = 10 : i32, message = "hqk,khd->qhd"}> : () -> ()
      %cst_23 = arith.constant dense<0.000000e+00> : vector<4x32x8xf32>
      %59 = tpu.matmul %41, %58, %cst_23 {dimension_numbers = #tpu.dot_dimension_numbers<[0], [2], [2], [1], [0, 1, 0, 2, 1, 1], [1], [0]>} : vector<8x4x32xbf16>, vector<4x8x8xbf16>, vector<4x32x8xf32> -> vector<4x32x8xf32>
      %60 = tpu.transpose %59, [2, 0, 1] : vector<4x32x8xf32> -> vector<8x4x32xf32>
      "tpu.trace_stop"() : () -> ()
      %61 = vector.shape_cast %60 : vector<8x4x32xf32> to vector<8x128xf32>
      %62 = arith.index_cast %arg18 : i32 to index
      %c0_24 = arith.constant 0 : index
      %c0_25 = arith.constant 0 : index
      %63 = vector.load %arg7[%62, %c0_24, %c0_25] : memref<2x128x128xf32, #tpu.memory_space<vmem>>, vector<1x128x128xf32>
      %64 = vector.shape_cast %63 : vector<1x128x128xf32> to vector<128x128xf32>
      %65 = arith.truncf %61 : vector<8x128xf32> to vector<8x128xbf16>
      %66 = arith.truncf %64 : vector<128x128xf32> to vector<128x128xbf16>
      %cst_26 = arith.constant dense<0.000000e+00> : vector<8x128xf32>
      %67 = tpu.matmul %65, %66, %cst_26 {dimension_numbers = #tpu.dot_dimension_numbers<[1], [0], [0], [1], [0, 0, 1, 1], [], []>} : vector<8x128xbf16>, vector<128x128xbf16>, vector<8x128xf32> -> vector<8x128xf32>
      %68 = arith.index_cast %arg18 : i32 to index
      %c0_27 = arith.constant 0 : index
      %c0_28 = arith.constant 0 : index
      %69 = vector.load %arg8[%68, %c0_27, %c0_28] : memref<2x1x128xf32, #tpu.memory_space<vmem>>, vector<1x1x128xf32>
      %70 = vector.shape_cast %69 : vector<1x1x128xf32> to vector<1x128xf32>
      %71 = vector.broadcast %70 : vector<1x128xf32> to vector<8x128xf32>
      %72 = arith.addf %67, %71 : vector<8x128xf32>
      %73 = arith.addf %arg19, %72 : vector<8x128xf32>
      %74 = arith.index_cast %arg18 : i32 to index
      %c0_29 = arith.constant 0 : index
      %c0_30 = arith.constant 0 : index
      %75 = vector.load %arg9[%74, %c0_29, %c0_30] : memref<2x1x128xf32, #tpu.memory_space<vmem>>, vector<1x1x128xf32>
      %76 = vector.shape_cast %75 : vector<1x1x128xf32> to vector<1x128xf32>
      %77 = arith.index_cast %arg18 : i32 to index
      %c0_31 = arith.constant 0 : index
      %c0_32 = arith.constant 0 : index
      %78 = vector.load %arg10[%77, %c0_31, %c0_32] : memref<2x1x128xf32, #tpu.memory_space<vmem>>, vector<1x1x128xf32>
      %79 = vector.shape_cast %78 : vector<1x1x128xf32> to vector<1x128xf32>
      %cst_33 = arith.constant dense<0.000000e+00> : vector<8xf32>
      %80 = vector.multi_reduction <add>, %73, %cst_33 [1] : vector<8x128xf32> to vector<8xf32>
      %81 = vector.shape_cast %80 : vector<8xf32> to vector<8x1xf32>
      %cst_34 = arith.constant 1.280000e+02 : f32
      %82 = vector.broadcast %cst_34 : f32 to vector<8x1xf32>
      %83 = arith.divf %81, %82 : vector<8x1xf32>
      %84 = vector.broadcast %83 : vector<8x1xf32> to vector<8x128xf32>
      %85 = arith.subf %73, %84 : vector<8x128xf32>
      %86 = arith.mulf %85, %85 : vector<8x128xf32>
      %cst_35 = arith.constant dense<0.000000e+00> : vector<8xf32>
      %87 = vector.multi_reduction <add>, %86, %cst_35 [1] : vector<8x128xf32> to vector<8xf32>
      %88 = vector.shape_cast %87 : vector<8xf32> to vector<8x1xf32>
      %cst_36 = arith.constant 1.280000e+02 : f32
      %89 = vector.broadcast %cst_36 : f32 to vector<8x1xf32>
      %90 = arith.divf %88, %89 : vector<8x1xf32>
      %91 = vector.broadcast %83 : vector<8x1xf32> to vector<8x128xf32>
      %92 = arith.subf %73, %91 : vector<8x128xf32>
      %cst_37 = arith.constant 9.99999974E-6 : f32
      %93 = vector.broadcast %cst_37 : f32 to vector<8x1xf32>
      %94 = arith.addf %90, %93 : vector<8x1xf32>
      %95 = math.rsqrt %94 : vector<8x1xf32>
      %96 = vector.broadcast %95 : vector<8x1xf32> to vector<8x128xf32>
      %97 = arith.mulf %92, %96 : vector<8x128xf32>
      %98 = vector.broadcast %76 : vector<1x128xf32> to vector<8x128xf32>
      %99 = arith.mulf %97, %98 : vector<8x128xf32>
      %100 = vector.broadcast %79 : vector<1x128xf32> to vector<8x128xf32>
      %101 = arith.addf %99, %100 : vector<8x128xf32>
      %102 = arith.index_cast %arg18 : i32 to index
      %c0_38 = arith.constant 0 : index
      %c0_39 = arith.constant 0 : index
      %103 = vector.load %arg11[%102, %c0_38, %c0_39] : memref<2x128x256xf32, #tpu.memory_space<vmem>>, vector<1x128x256xf32>
      %104 = vector.shape_cast %103 : vector<1x128x256xf32> to vector<128x256xf32>
      %105 = arith.truncf %101 : vector<8x128xf32> to vector<8x128xbf16>
      %106 = arith.truncf %104 : vector<128x256xf32> to vector<128x256xbf16>
      %cst_40 = arith.constant dense<0.000000e+00> : vector<8x256xf32>
      %107 = tpu.matmul %105, %106, %cst_40 {dimension_numbers = #tpu.dot_dimension_numbers<[1], [0], [0], [1], [0, 0, 1, 1], [], []>} : vector<8x128xbf16>, vector<128x256xbf16>, vector<8x256xf32> -> vector<8x256xf32>
      %108 = arith.index_cast %arg18 : i32 to index
      %c0_41 = arith.constant 0 : index
      %c0_42 = arith.constant 0 : index
      %109 = vector.load %arg12[%108, %c0_41, %c0_42] : memref<2x1x256xf32, #tpu.memory_space<vmem>>, vector<1x1x256xf32>
      %110 = vector.shape_cast %109 : vector<1x1x256xf32> to vector<1x256xf32>
      %111 = vector.broadcast %110 : vector<1x256xf32> to vector<8x256xf32>
      %112 = arith.addf %107, %111 : vector<8x256xf32>
      %cst_43 = arith.constant 0.000000e+00 : f32
      %113 = vector.broadcast %cst_43 : f32 to vector<8x256xf32>
      %114 = arith.maximumf %112, %113 : vector<8x256xf32>
      %115 = arith.index_cast %arg18 : i32 to index
      %c0_44 = arith.constant 0 : index
      %c0_45 = arith.constant 0 : index
      %116 = vector.load %arg13[%115, %c0_44, %c0_45] : memref<2x256x128xf32, #tpu.memory_space<vmem>>, vector<1x256x128xf32>
      %117 = vector.shape_cast %116 : vector<1x256x128xf32> to vector<256x128xf32>
      %118 = arith.truncf %114 : vector<8x256xf32> to vector<8x256xbf16>
      %119 = arith.truncf %117 : vector<256x128xf32> to vector<256x128xbf16>
      %cst_46 = arith.constant dense<0.000000e+00> : vector<8x128xf32>
      %120 = tpu.matmul %118, %119, %cst_46 {dimension_numbers = #tpu.dot_dimension_numbers<[1], [0], [0], [1], [0, 0, 1, 1], [], []>} : vector<8x256xbf16>, vector<256x128xbf16>, vector<8x128xf32> -> vector<8x128xf32>
      %121 = arith.index_cast %arg18 : i32 to index
      %c0_47 = arith.constant 0 : index
      %c0_48 = arith.constant 0 : index
      %122 = vector.load %arg14[%121, %c0_47, %c0_48] : memref<2x1x128xf32, #tpu.memory_space<vmem>>, vector<1x1x128xf32>
      %123 = vector.shape_cast %122 : vector<1x1x128xf32> to vector<1x128xf32>
      %124 = vector.broadcast %123 : vector<1x128xf32> to vector<8x128xf32>
      %125 = arith.addf %120, %124 : vector<8x128xf32>
      %126 = arith.addf %101, %125 : vector<8x128xf32>
      %127 = arith.index_cast %arg18 : i32 to index
      %c0_49 = arith.constant 0 : index
      %c0_50 = arith.constant 0 : index
      %128 = vector.load %arg15[%127, %c0_49, %c0_50] : memref<2x1x128xf32, #tpu.memory_space<vmem>>, vector<1x1x128xf32>
      %129 = vector.shape_cast %128 : vector<1x1x128xf32> to vector<1x128xf32>
      %130 = arith.index_cast %arg18 : i32 to index
      %c0_51 = arith.constant 0 : index
      %c0_52 = arith.constant 0 : index
      %131 = vector.load %arg16[%130, %c0_51, %c0_52] : memref<2x1x128xf32, #tpu.memory_space<vmem>>, vector<1x1x128xf32>
      %132 = vector.shape_cast %131 : vector<1x1x128xf32> to vector<1x128xf32>
      %cst_53 = arith.constant dense<0.000000e+00> : vector<8xf32>
      %133 = vector.multi_reduction <add>, %126, %cst_53 [1] : vector<8x128xf32> to vector<8xf32>
      %134 = vector.shape_cast %133 : vector<8xf32> to vector<8x1xf32>
      %cst_54 = arith.constant 1.280000e+02 : f32
      %135 = vector.broadcast %cst_54 : f32 to vector<8x1xf32>
      %136 = arith.divf %134, %135 : vector<8x1xf32>
      %137 = vector.broadcast %136 : vector<8x1xf32> to vector<8x128xf32>
      %138 = arith.subf %126, %137 : vector<8x128xf32>
      %139 = arith.mulf %138, %138 : vector<8x128xf32>
      %cst_55 = arith.constant dense<0.000000e+00> : vector<8xf32>
      %140 = vector.multi_reduction <add>, %139, %cst_55 [1] : vector<8x128xf32> to vector<8xf32>
      %141 = vector.shape_cast %140 : vector<8xf32> to vector<8x1xf32>
      %cst_56 = arith.constant 1.280000e+02 : f32
      %142 = vector.broadcast %cst_56 : f32 to vector<8x1xf32>
      %143 = arith.divf %141, %142 : vector<8x1xf32>
      %144 = vector.broadcast %136 : vector<8x1xf32> to vector<8x128xf32>
      %145 = arith.subf %126, %144 : vector<8x128xf32>
      %cst_57 = arith.constant 9.99999974E-6 : f32
      %146 = vector.broadcast %cst_57 : f32 to vector<8x1xf32>
      %147 = arith.addf %143, %146 : vector<8x1xf32>
      %148 = math.rsqrt %147 : vector<8x1xf32>
      %149 = vector.broadcast %148 : vector<8x1xf32> to vector<8x128xf32>
      %150 = arith.mulf %145, %149 : vector<8x128xf32>
      %151 = vector.broadcast %129 : vector<1x128xf32> to vector<8x128xf32>
      %152 = arith.mulf %150, %151 : vector<8x128xf32>
      %153 = vector.broadcast %132 : vector<1x128xf32> to vector<8x128xf32>
      %154 = arith.addf %152, %153 : vector<8x128xf32>
      scf.yield %154 : vector<8x128xf32>
    }
    %c2_i32_10 = arith.constant 2 : i32
    %c0_11 = arith.constant 0 : index
    %c0_12 = arith.constant 0 : index
    %c0_13 = arith.constant 0 : index
    %19 = vector.load %arg17[%c0_11, %c0_12, %c0_13] : memref<1x8x128xf32, #tpu.memory_space<vmem>>, vector<1x8x128xf32>
    %20 = vector.shape_cast %19 : vector<1x8x128xf32> to vector<8x128xf32>
    %21 = vector.shape_cast %18 : vector<8x128xf32> to vector<1x8x128xf32>
    tpu.vector_store %arg17[%c0_11, %c0_12, %c0_13], %21 {strides = array<i32>} : memref<1x8x128xf32, #tpu.memory_space<vmem>>, vector<1x8x128xf32>,
    return
  }
  func.func @transform_0(%arg0: i32) -> (i32, i32, i32) {
    %c0_i32 = arith.constant 0 : i32
    %c0_i32_0 = arith.constant 0 : i32
    %c0_i32_1 = arith.constant 0 : i32
    return %arg0, %c0_i32, %c0_i32_0 : i32, i32, i32
  }
  func.func @transform_1(%arg0: i32) -> (i32, i32) {
    %c0_i32 = arith.constant 0 : i32
    %c0_i32_0 = arith.constant 0 : i32
    %c0_i32_1 = arith.constant 0 : i32
    return %c0_i32, %c0_i32_0 : i32, i32
  }
  func.func @transform_2(%arg0: i32) -> (i32, i32) {
    %c0_i32 = arith.constant 0 : i32
    %c0_i32_0 = arith.constant 0 : i32
    %c0_i32_1 = arith.constant 0 : i32
    return %c0_i32, %c0_i32_0 : i32, i32
  }
  func.func @transform_3(%arg0: i32) -> (i32, i32) {
    %c0_i32 = arith.constant 0 : i32
    %c0_i32_0 = arith.constant 0 : i32
    %c0_i32_1 = arith.constant 0 : i32
    return %c0_i32, %c0_i32_0 : i32, i32
  }
  func.func @transform_4(%arg0: i32) -> (i32, i32, i32) {
    %c0_i32 = arith.constant 0 : i32
    %c0_i32_0 = arith.constant 0 : i32
    %c0_i32_1 = arith.constant 0 : i32
    %c0_i32_2 = arith.constant 0 : i32
    return %c0_i32, %c0_i32_0, %c0_i32_1 : i32, i32, i32
  }
  func.func @transform_5(%arg0: i32) -> (i32, i32, i32) {
    %c0_i32 = arith.constant 0 : i32
    %c0_i32_0 = arith.constant 0 : i32
    %c0_i32_1 = arith.constant 0 : i32
    %c0_i32_2 = arith.constant 0 : i32
    return %c0_i32, %c0_i32_0, %c0_i32_1 : i32, i32, i32
  }
  func.func @transform_6(%arg0: i32) -> (i32, i32, i32) {
    %c0_i32 = arith.constant 0 : i32
    %c0_i32_0 = arith.constant 0 : i32
    %c0_i32_1 = arith.constant 0 : i32
    %c0_i32_2 = arith.constant 0 : i32
    return %c0_i32, %c0_i32_0, %c0_i32_1 : i32, i32, i32
  }
  func.func @transform_7(%arg0: i32) -> (i32, i32, i32) {
    %c0_i32 = arith.constant 0 : i32
    %c0_i32_0 = arith.constant 0 : i32
    %c0_i32_1 = arith.constant 0 : i32
    %c0_i32_2 = arith.constant 0 : i32
    return %c0_i32, %c0_i32_0, %c0_i32_1 : i32, i32, i32
  }
  func.func @transform_8(%arg0: i32) -> (i32, i32, i32) {
    %c0_i32 = arith.constant 0 : i32
    %c0_i32_0 = arith.constant 0 : i32
    %c0_i32_1 = arith.constant 0 : i32
    %c0_i32_2 = arith.constant 0 : i32
    return %c0_i32, %c0_i32_0, %c0_i32_1 : i32, i32, i32
  }
  func.func @transform_9(%arg0: i32) -> (i32, i32, i32) {
    %c0_i32 = arith.constant 0 : i32
    %c0_i32_0 = arith.constant 0 : i32
    %c0_i32_1 = arith.constant 0 : i32
    %c0_i32_2 = arith.constant 0 : i32
    return %c0_i32, %c0_i32_0, %c0_i32_1 : i32, i32, i32
  }
  func.func @transform_10(%arg0: i32) -> (i32, i32, i32) {
    %c0_i32 = arith.constant 0 : i32
    %c0_i32_0 = arith.constant 0 : i32
    %c0_i32_1 = arith.constant 0 : i32
    %c0_i32_2 = arith.constant 0 : i32
    return %c0_i32, %c0_i32_0, %c0_i32_1 : i32, i32, i32
  }
  func.func @transform_11(%arg0: i32) -> (i32, i32, i32) {
    %c0_i32 = arith.constant 0 : i32
    %c0_i32_0 = arith.constant 0 : i32
    %c0_i32_1 = arith.constant 0 : i32
    %c0_i32_2 = arith.constant 0 : i32
    return %c0_i32, %c0_i32_0, %c0_i32_1 : i32, i32, i32
  }
  func.func @transform_12(%arg0: i32) -> (i32, i32, i32) {
    %c0_i32 = arith.constant 0 : i32
    %c0_i32_0 = arith.constant 0 : i32
    %c0_i32_1 = arith.constant 0 : i32
    %c0_i32_2 = arith.constant 0 : i32
    return %c0_i32, %c0_i32_0, %c0_i32_1 : i32, i32, i32
  }
  func.func @transform_13(%arg0: i32) -> (i32, i32, i32) {
    %c0_i32 = arith.constant 0 : i32
    %c0_i32_0 = arith.constant 0 : i32
    %c0_i32_1 = arith.constant 0 : i32
    %c0_i32_2 = arith.constant 0 : i32
    return %c0_i32, %c0_i32_0, %c0_i32_1 : i32, i32, i32
  }
  func.func @transform_14(%arg0: i32) -> (i32, i32, i32) {
    %c0_i32 = arith.constant 0 : i32
    %c0_i32_0 = arith.constant 0 : i32
    %c0_i32_1 = arith.constant 0 : i32
    %c0_i32_2 = arith.constant 0 : i32
    return %c0_i32, %c0_i32_0, %c0_i32_1 : i32, i32, i32
  }
  func.func @transform_15(%arg0: i32) -> (i32, i32, i32) {
    %c0_i32 = arith.constant 0 : i32
    %c0_i32_0 = arith.constant 0 : i32
    %c0_i32_1 = arith.constant 0 : i32
    %c0_i32_2 = arith.constant 0 : i32
    return %c0_i32, %c0_i32_0, %c0_i32_1 : i32, i32, i32
  }
  func.func @transform_16(%arg0: i32) -> (i32, i32, i32) {
    %c0_i32 = arith.constant 0 : i32
    %c0_i32_0 = arith.constant 0 : i32
    %c0_i32_1 = arith.constant 0 : i32
    return %arg0, %c0_i32, %c0_i32_0 : i32, i32, i32
  }
}

</mosaic_0001>

<llo_original>
// kernel: tpu_custom_call.1
$region0: #{tpu_custom_call.1}
  #allocation0 [shape = 'u32[]', space=smem, size = 0x4, offset = 0x4, fixed_abs, tag = 'smem constant byte address 0x4 - core index']
  #allocation1 [shape = 'u32[144,128]{1,0:T(1,128)}', space=vmem, size = 0x12000, scoped, tag = 'internal scratch']
  %s0 = inlined_call_operand.hbm [shape: f32[2,8,768], index: 0, kind: input, shape index: {}]
  %s1 = inlined_call_operand.hbm [shape: f32[768,128], index: 1, kind: input, shape index: {}]
  %s2 = inlined_call_operand.hbm [shape: f32[1,128], index: 2, kind: input, shape index: {}]
  %s3 = inlined_call_operand.vmem [shape: f32[8,128], index: 3, kind: input, shape index: {}]
  %s4 = inlined_call_operand.hbm [shape: f32[2,128,384], index: 4, kind: input, shape index: {}]
  %s5 = inlined_call_operand.vmem [shape: f32[2,1,384], index: 5, kind: input, shape index: {}]
  %s6 = inlined_call_operand.hbm [shape: f32[2,128,128], index: 6, kind: input, shape index: {}]
  %s7 = inlined_call_operand.vmem [shape: f32[2,1,128], index: 7, kind: input, shape index: {}]
  %s8 = inlined_call_operand.vmem [shape: f32[2,1,128], index: 8, kind: input, shape index: {}]
  %s9 = inlined_call_operand.vmem [shape: f32[2,1,128], index: 9, kind: input, shape index: {}]
  %s10 = inlined_call_operand.hbm [shape: f32[2,128,256], index: 10, kind: input, shape index: {}]
  %s11 = inlined_call_operand.vmem [shape: f32[2,1,256], index: 11, kind: input, shape index: {}]
  %s12 = inlined_call_operand.hbm [shape: f32[2,256,128], index: 12, kind: input, shape index: {}]
  %s13 = inlined_call_operand.vmem [shape: f32[2,1,128], index: 13, kind: input, shape index: {}]
  %s14 = inlined_call_operand.vmem [shape: f32[2,1,128], index: 14, kind: input, shape index: {}]
  %s15 = inlined_call_operand.vmem [shape: f32[2,1,128], index: 15, kind: input, shape index: {}]
  %s16 = inlined_call_operand.hbm [shape: f32[2,8,128], index: 16, kind: output, shape index: {}]
  %s17 = sld [smem:[#allocation0]]
  $region132: #{tpu_custom_call.1} parent=0
    _
  %s19 = ssub.s32 1, %s17
  %s20 = scalar_select 0, %s19, %s17
  $region1: #{tpu_custom_call.1} parent=0
    #allocation2 [shape = 'u8[49152]{0}', space=vmem, size = 0xc000, scoped, tag = 'input window, operand 0']
    #allocation3 [shape = 's32[2]{0}', space=sflag, size = 0x8, scoped, tag = 'scoped memory for tpu_custom_call.1']
    #allocation4 [shape = 's32[2]{0}', space=sflag, size = 0x8, scoped, tag = 'scoped memory for tpu_custom_call.1']
    #allocation5 [shape = 'u8[393216]{0}', space=vmem, size = 0x60000, scoped, tag = 'input window, operand 1, single buffered']
    #allocation6 [shape = 's32[1]{0}', space=sflag, size = 0x4, scoped, tag = 'scoped memory for tpu_custom_call.1']
    #allocation7 [shape = 'u8[512]{0}', space=vmem, size = 0x400, scoped, tag = 'input window, operand 2, single buffered']
    #allocation8 [shape = 'u8[393216]{0}', space=vmem, size = 0x60000, scoped, tag = 'input window, operand 4, single buffered']
    #allocation9 [shape = 's32[1]{0}', space=sflag, size = 0x4, scoped, tag = 'scoped memory for tpu_custom_call.1']
    #allocation10 [shape = 'u8[131072]{0}', space=vmem, size = 0x20000, scoped, tag = 'input window, operand 6, single buffered']
    #allocation11 [shape = 'u8[262144]{0}', space=vmem, size = 0x40000, scoped, tag = 'input window, operand 10, single buffered']
    #allocation12 [shape = 's32[1]{0}', space=sflag, size = 0x4, scoped, tag = 'scoped memory for tpu_custom_call.1']
    #allocation13 [shape = 'u8[262144]{0}', space=vmem, size = 0x40000, scoped, tag = 'input window, operand 12, single buffered']
    #allocation14 [shape = 'u8[8192]{0}', space=vmem, size = 0x2000, scoped, tag = 'output window, operand 0']
    %21 = vsyncpa [#allocation3], 0
    %s22 = scalar_lea.sflag [#allocation3], 1
    %23 = vsyncpa %s22, 0
    %24 = vsyncpa [#allocation6], 0
    %25 = vsyncpa [#allocation9], 0
    %26 = vsyncpa [#allocation12], 0
    %27 = vsyncpa [#allocation4], 0
    %s28 = scalar_lea.sflag [#allocation4], 1
    %29 = vsyncpa %s28, 0
    loop: start=0, step=1, limit=4
    $region2: #{tpu_custom_call.1} parent=1 // loop_pre_header
      _
    $region3: #{tpu_custom_call.1} parent=1 // loop_header
      %s31 = sphi 0, %s35
      %p32 = scmp.ge.s32.totalorder %s31, 4
      %s41 = sphi 0, %s43
      %s44 = sphi 0, %s41
      %s45 = sphi 0, %s44
      %s61 = sphi 0, %s45
      %s65 = sphi 0, %s65
      %s67 = sphi 0, %s65
      %s68 = sphi 0, %s67
      %s82 = sphi 0, %s68
      %s86 = sphi 0, %s86
      %s88 = sphi 0, %s86
      %s89 = sphi 0, %s88
      %s103 = sphi 0, %s89
      %s107 = sphi 0, %s107
      %s109 = sphi 0, %s107
      %s110 = sphi 0, %s109
      %s124 = sphi 0, %s110
      %s128 = sphi 0, %s128
      %s130 = sphi 0, %s128
      %s131 = sphi 0, %s130
      %s145 = sphi 0, %s131
      %s149 = sphi 0, %s149
      %s151 = sphi 0, %s149
      %s152 = sphi 0, %s151
      %s166 = sphi 0, %s152
      %s170 = sphi 0, %s170
      %s172 = sphi 0, %s170
      %s173 = sphi 0, %s172
      %s187 = sphi 0, %s173
      %s191 = sphi 0, %s191
      %s193 = sphi 0, %s191
      %s194 = sphi 0, %s193
      %s208 = sphi 0, %s194
      %s212 = sphi 0, %s212
      %s214 = sphi 0, %s212
      %s215 = sphi 0, %s214
      %s229 = sphi 0, %s215
      %s233 = sphi 0, %s233
      %s235 = sphi 0, %s233
      %s236 = sphi 0, %s235
      %s250 = sphi 0, %s236
      %s254 = sphi 0, %s254
      %s256 = sphi 0, %s254
      %s257 = sphi 0, %s256
      %s271 = sphi 0, %s257
      %s275 = sphi 0, %s275
      %s277 = sphi 0, %s275
      %s278 = sphi 0, %s277
      %s292 = sphi 0, %s278
      %s296 = sphi 0, %s296
      %s298 = sphi 0, %s296
      %s299 = sphi 0, %s298
      %s313 = sphi 0, %s299
      %s317 = sphi 0, %s317
      %s319 = sphi 0, %s317
      %s320 = sphi 0, %s319
      %s334 = sphi 0, %s320
      %s338 = sphi 0, %s338
      %s340 = sphi 0, %s338
      %s341 = sphi 0, %s340
      %s355 = sphi 0, %s341
      %s359 = sphi 0, %s359
      %s361 = sphi 0, %s359
      %s362 = sphi 0, %s361
      %s376 = sphi 0, %s362
      %s382 = sphi 0, %s384
      %s385 = sphi 0, %s382
      %s386 = sphi 0, %s385
      %s402 = sphi 0, %s386
    $region4: #{tpu_custom_call.1} parent=1 // loop_header_branch
      %34 = sbr.rel (%p32) target = $region8
    $region5: #{tpu_custom_call.1} parent=1 // loop_body
      %s36 = ssub.s32 %s31, 1
      %s37 = ssub.s32 %s31, 2
      %s38 = sadd.s32 %s31, 1
      %s39 = ssub.s32 %s31, %s38
      %p40 = scmp.eq.s32.totalorder %s39, 0
      %s42 = sadd.s32 %s41, 1
      %s43 = scalar_select %p40, %s41, %s42
      %p46 = pneg %p40
      %p47 = scmp.eq.s32.totalorder %s31, 1
      %p48 = por %p46, %p47
      %p49 = scmp.ne.s32.totalorder %s41, %s44
      %p50 = scmp.eq.s32.totalorder %s31, 0
      %p51 = por %p49, %p50
      %p52 = scmp.ne.s32.totalorder %s41, %s44
      %p53 = scmp.eq.s32.totalorder %s36, 1
      %p54 = por %p52, %p53
      %p55 = scmp.ne.s32.totalorder %s44, %s45
      %p56 = scmp.eq.s32.totalorder %s36, 0
      %p57 = por %p55, %p56
      %p58 = scmp.ne.s32.totalorder %s44, %s45
      %p59 = scmp.eq.s32.totalorder %s37, 1
      %p60 = por %p58, %p59
      %p62 = scmp.ne.s32.totalorder %s45, %s61
      %p63 = scmp.eq.s32.totalorder %s37, 0
      %p64 = por %p62, %p63
      %s66 = sadd.s32 %s65, 1
      %p69 = scmp.eq.s32.totalorder %s31, 1
      %p70 = scmp.ne.s32.totalorder %s65, %s67
      %p71 = scmp.eq.s32.totalorder %s31, 0
      %p72 = por %p70, %p71
      %p73 = scmp.ne.s32.totalorder %s65, %s67
      %p74 = scmp.eq.s32.totalorder %s36, 1
      %p75 = por %p73, %p74
      %p76 = scmp.ne.s32.totalorder %s67, %s68
      %p77 = scmp.eq.s32.totalorder %s36, 0
      %p78 = por %p76, %p77
      %p79 = scmp.ne.s32.totalorder %s67, %s68
      %p80 = scmp.eq.s32.totalorder %s37, 1
      %p81 = por %p79, %p80
      %p83 = scmp.ne.s32.totalorder %s68, %s82
      %p84 = scmp.eq.s32.totalorder %s37, 0
      %p85 = por %p83, %p84
      %s87 = sadd.s32 %s86, 1
      %p90 = scmp.eq.s32.totalorder %s31, 1
      %p91 = scmp.ne.s32.totalorder %s86, %s88
      %p92 = scmp.eq.s32.totalorder %s31, 0
      %p93 = por %p91, %p92
      %p94 = scmp.ne.s32.totalorder %s86, %s88
      %p95 = scmp.eq.s32.totalorder %s36, 1
      %p96 = por %p94, %p95
      %p97 = scmp.ne.s32.totalorder %s88, %s89
      %p98 = scmp.eq.s32.totalorder %s36, 0
      %p99 = por %p97, %p98
      %p100 = scmp.ne.s32.totalorder %s88, %s89
      %p101 = scmp.eq.s32.totalorder %s37, 1
      %p102 = por %p100, %p101
      %p104 = scmp.ne.s32.totalorder %s89, %s103
      %p105 = scmp.eq.s32.totalorder %s37, 0
      %p106 = por %p104, %p105
      %s108 = sadd.s32 %s107, 1
      %p111 = scmp.eq.s32.totalorder %s31, 1
      %p112 = scmp.ne.s32.totalorder %s107, %s109
      %p113 = scmp.eq.s32.totalorder %s31, 0
      %p114 = por %p112, %p113
      %p115 = scmp.ne.s32.totalorder %s107, %s109
      %p116 = scmp.eq.s32.totalorder %s36, 1
      %p117 = por %p115, %p116
      %p118 = scmp.ne.s32.totalorder %s109, %s110
      %p119 = scmp.eq.s32.totalorder %s36, 0
      %p120 = por %p118, %p119
      %p121 = scmp.ne.s32.totalorder %s109, %s110
      %p122 = scmp.eq.s32.totalorder %s37, 1
      %p123 = por %p121, %p122
      %p125 = scmp.ne.s32.totalorder %s110, %s124
      %p126 = scmp.eq.s32.totalorder %s37, 0
      %p127 = por %p125, %p126
      %s129 = sadd.s32 %s128, 1
      %p132 = scmp.eq.s32.totalorder %s31, 1
      %p133 = scmp.ne.s32.totalorder %s128, %s130
      %p134 = scmp.eq.s32.totalorder %s31, 0
      %p135 = por %p133, %p134
      %p136 = scmp.ne.s32.totalorder %s128, %s130
      %p137 = scmp.eq.s32.totalorder %s36, 1
      %p138 = por %p136, %p137
      %p139 = scmp.ne.s32.totalorder %s130, %s131
      %p140 = scmp.eq.s32.totalorder %s36, 0
      %p141 = por %p139, %p140
      %p142 = scmp.ne.s32.totalorder %s130, %s131
      %p143 = scmp.eq.s32.totalorder %s37, 1
      %p144 = por %p142, %p143
      %p146 = scmp.ne.s32.totalorder %s131, %s145
      %p147 = scmp.eq.s32.totalorder %s37, 0
      %p148 = por %p146, %p147
      %s150 = sadd.s32 %s149, 1
      %p153 = scmp.eq.s32.totalorder %s31, 1
      %p154 = scmp.ne.s32.totalorder %s149, %s151
      %p155 = scmp.eq.s32.totalorder %s31, 0
      %p156 = por %p154, %p155
      %p157 = scmp.ne.s32.totalorder %s149, %s151
      %p158 = scmp.eq.s32.totalorder %s36, 1
      %p159 = por %p157, %p158
      %p160 = scmp.ne.s32.totalorder %s151, %s152
      %p161 = scmp.eq.s32.totalorder %s36, 0
      %p162 = por %p160, %p161
      %p163 = scmp.ne.s32.totalorder %s151, %s152
      %p164 = scmp.eq.s32.totalorder %s37, 1
      %p165 = por %p163, %p164
      %p167 = scmp.ne.s32.totalorder %s152, %s166
      %p168 = scmp.eq.s32.totalorder %s37, 0
      %p169 = por %p167, %p168
      %s171 = sadd.s32 %s170, 1
      %p174 = scmp.eq.s32.totalorder %s31, 1
      %p175 = scmp.ne.s32.totalorder %s170, %s172
      %p176 = scmp.eq.s32.totalorder %s31, 0
      %p177 = por %p175, %p176
      %p178 = scmp.ne.s32.totalorder %s170, %s172
      %p179 = scmp.eq.s32.totalorder %s36, 1
      %p180 = por %p178, %p179
      %p181 = scmp.ne.s32.totalorder %s172, %s173
      %p182 = scmp.eq.s32.totalorder %s36, 0
      %p183 = por %p181, %p182
      %p184 = scmp.ne.s32.totalorder %s172, %s173
      %p185 = scmp.eq.s32.totalorder %s37, 1
      %p186 = por %p184, %p185
      %p188 = scmp.ne.s32.totalorder %s173, %s187
      %p189 = scmp.eq.s32.totalorder %s37, 0
      %p190 = por %p188, %p189
      %s192 = sadd.s32 %s191, 1
      %p195 = scmp.eq.s32.totalorder %s31, 1
      %p196 = scmp.ne.s32.totalorder %s191, %s193
      %p197 = scmp.eq.s32.totalorder %s31, 0
      %p198 = por %p196, %p197
      %p199 = scmp.ne.s32.totalorder %s191, %s193
      %p200 = scmp.eq.s32.totalorder %s36, 1
      %p201 = por %p199, %p200
      %p202 = scmp.ne.s32.totalorder %s193, %s194
      %p203 = scmp.eq.s32.totalorder %s36, 0
      %p204 = por %p202, %p203
      %p205 = scmp.ne.s32.totalorder %s193, %s194
      %p206 = scmp.eq.s32.totalorder %s37, 1
      %p207 = por %p205, %p206
      %p209 = scmp.ne.s32.totalorder %s194, %s208
      %p210 = scmp.eq.s32.totalorder %s37, 0
      %p211 = por %p209, %p210
      %s213 = sadd.s32 %s212, 1
      %p216 = scmp.eq.s32.totalorder %s31, 1
      %p217 = scmp.ne.s32.totalorder %s212, %s214
      %p218 = scmp.eq.s32.totalorder %s31, 0
      %p219 = por %p217, %p218
      %p220 = scmp.ne.s32.totalorder %s212, %s214
      %p221 = scmp.eq.s32.totalorder %s36, 1
      %p222 = por %p220, %p221
      %p223 = scmp.ne.s32.totalorder %s214, %s215
      %p224 = scmp.eq.s32.totalorder %s36, 0
      %p225 = por %p223, %p224
      %p226 = scmp.ne.s32.totalorder %s214, %s215
      %p227 = scmp.eq.s32.totalorder %s37, 1
      %p228 = por %p226, %p227
      %p230 = scmp.ne.s32.totalorder %s215, %s229
      %p231 = scmp.eq.s32.totalorder %s37, 0
      %p232 = por %p230, %p231
      %s234 = sadd.s32 %s233, 1
      %p237 = scmp.eq.s32.totalorder %s31, 1
      %p238 = scmp.ne.s32.totalorder %s233, %s235
      %p239 = scmp.eq.s32.totalorder %s31, 0
      %p240 = por %p238, %p239
      %p241 = scmp.ne.s32.totalorder %s233, %s235
      %p242 = scmp.eq.s32.totalorder %s36, 1
      %p243 = por %p241, %p242
      %p244 = scmp.ne.s32.totalorder %s235, %s236
      %p245 = scmp.eq.s32.totalorder %s36, 0
      %p246 = por %p244, %p245
      %p247 = scmp.ne.s32.totalorder %s235, %s236
      %p248 = scmp.eq.s32.totalorder %s37, 1
      %p249 = por %p247, %p248
      %p251 = scmp.ne.s32.totalorder %s236, %s250
      %p252 = scmp.eq.s32.totalorder %s37, 0
      %p253 = por %p251, %p252
      %s255 = sadd.s32 %s254, 1
      %p258 = scmp.eq.s32.totalorder %s31, 1
      %p259 = scmp.ne.s32.totalorder %s254, %s256
      %p260 = scmp.eq.s32.totalorder %s31, 0
      %p261 = por %p259, %p260
      %p262 = scmp.ne.s32.totalorder %s254, %s256
      %p263 = scmp.eq.s32.totalorder %s36, 1
      %p264 = por %p262, %p263
      %p265 = scmp.ne.s32.totalorder %s256, %s257
      %p266 = scmp.eq.s32.totalorder %s36, 0
      %p267 = por %p265, %p266
      %p268 = scmp.ne.s32.totalorder %s256, %s257
      %p269 = scmp.eq.s32.totalorder %s37, 1
      %p270 = por %p268, %p269
      %p272 = scmp.ne.s32.totalorder %s257, %s271
      %p273 = scmp.eq.s32.totalorder %s37, 0
      %p274 = por %p272, %p273
      %s276 = sadd.s32 %s275, 1
      %p279 = scmp.eq.s32.totalorder %s31, 1
      %p280 = scmp.ne.s32.totalorder %s275, %s277
      %p281 = scmp.eq.s32.totalorder %s31, 0
      %p282 = por %p280, %p281
      %p283 = scmp.ne.s32.totalorder %s275, %s277
      %p284 = scmp.eq.s32.totalorder %s36, 1
      %p285 = por %p283, %p284
      %p286 = scmp.ne.s32.totalorder %s277, %s278
      %p287 = scmp.eq.s32.totalorder %s36, 0
      %p288 = por %p286, %p287
      %p289 = scmp.ne.s32.totalorder %s277, %s278
      %p290 = scmp.eq.s32.totalorder %s37, 1
      %p291 = por %p289, %p290
      %p293 = scmp.ne.s32.totalorder %s278, %s292
      %p294 = scmp.eq.s32.totalorder %s37, 0
      %p295 = por %p293, %p294
      %s297 = sadd.s32 %s296, 1
      %p300 = scmp.eq.s32.totalorder %s31, 1
      %p301 = scmp.ne.s32.totalorder %s296, %s298
      %p302 = scmp.eq.s32.totalorder %s31, 0
      %p303 = por %p301, %p302
      %p304 = scmp.ne.s32.totalorder %s296, %s298
      %p305 = scmp.eq.s32.totalorder %s36, 1
      %p306 = por %p304, %p305
      %p307 = scmp.ne.s32.totalorder %s298, %s299
      %p308 = scmp.eq.s32.totalorder %s36, 0
      %p309 = por %p307, %p308
      %p310 = scmp.ne.s32.totalorder %s298, %s299
      %p311 = scmp.eq.s32.totalorder %s37, 1
      %p312 = por %p310, %p311
      %p314 = scmp.ne.s32.totalorder %s299, %s313
      %p315 = scmp.eq.s32.totalorder %s37, 0
      %p316 = por %p314, %p315
      %s318 = sadd.s32 %s317, 1
      %p321 = scmp.eq.s32.totalorder %s31, 1
      %p322 = scmp.ne.s32.totalorder %s317, %s319
      %p323 = scmp.eq.s32.totalorder %s31, 0
      %p324 = por %p322, %p323
      %p325 = scmp.ne.s32.totalorder %s317, %s319
      %p326 = scmp.eq.s32.totalorder %s36, 1
      %p327 = por %p325, %p326
      %p328 = scmp.ne.s32.totalorder %s319, %s320
      %p329 = scmp.eq.s32.totalorder %s36, 0
      %p330 = por %p328, %p329
      %p331 = scmp.ne.s32.totalorder %s319, %s320
      %p332 = scmp.eq.s32.totalorder %s37, 1
      %p333 = por %p331, %p332
      %p335 = scmp.ne.s32.totalorder %s320, %s334
      %p336 = scmp.eq.s32.totalorder %s37, 0
      %p337 = por %p335, %p336
      %s339 = sadd.s32 %s338, 1
      %p342 = scmp.eq.s32.totalorder %s31, 1
      %p343 = scmp.ne.s32.totalorder %s338, %s340
      %p344 = scmp.eq.s32.totalorder %s31, 0
      %p345 = por %p343, %p344
      %p346 = scmp.ne.s32.totalorder %s338, %s340
      %p347 = scmp.eq.s32.totalorder %s36, 1
      %p348 = por %p346, %p347
      %p349 = scmp.ne.s32.totalorder %s340, %s341
      %p350 = scmp.eq.s32.totalorder %s36, 0
      %p351 = por %p349, %p350
      %p352 = scmp.ne.s32.totalorder %s340, %s341
      %p353 = scmp.eq.s32.totalorder %s37, 1
      %p354 = por %p352, %p353
      %p356 = scmp.ne.s32.totalorder %s341, %s355
      %p357 = scmp.eq.s32.totalorder %s37, 0
      %p358 = por %p356, %p357
      %s360 = sadd.s32 %s359, 1
      %p363 = scmp.eq.s32.totalorder %s31, 1
      %p364 = scmp.ne.s32.totalorder %s359, %s361
      %p365 = scmp.eq.s32.totalorder %s31, 0
      %p366 = por %p364, %p365
      %p367 = scmp.ne.s32.totalorder %s359, %s361
      %p368 = scmp.eq.s32.totalorder %s36, 1
      %p369 = por %p367, %p368
      %p370 = scmp.ne.s32.totalorder %s361, %s362
      %p371 = scmp.eq.s32.totalorder %s36, 0
      %p372 = por %p370, %p371
      %p373 = scmp.ne.s32.totalorder %s361, %s362
      %p374 = scmp.eq.s32.totalorder %s37, 1
      %p375 = por %p373, %p374
      %p377 = scmp.ne.s32.totalorder %s362, %s376
      %p378 = scmp.eq.s32.totalorder %s37, 0
      %p379 = por %p377, %p378
      %s380 = ssub.s32 %s31, %s38
      %p381 = scmp.eq.s32.totalorder %s380, 0
      %s383 = sadd.s32 %s382, 1
      %s384 = scalar_select %p381, %s382, %s383
      %p387 = pneg %p381
      %p388 = scmp.eq.s32.totalorder %s31, 1
      %p389 = por %p387, %p388
      %p390 = scmp.ne.s32.totalorder %s382, %s385
      %p391 = scmp.eq.s32.totalorder %s31, 0
      %p392 = por %p390, %p391
      %p393 = scmp.ne.s32.totalorder %s382, %s385
      %p394 = scmp.eq.s32.totalorder %s36, 1
      %p395 = por %p393, %p394
      %p396 = scmp.ne.s32.totalorder %s385, %s386
      %p397 = scmp.eq.s32.totalorder %s36, 0
      %p398 = por %p396, %p397
      %p399 = scmp.ne.s32.totalorder %s385, %s386
      %p400 = scmp.eq.s32.totalorder %s37, 1
      %p401 = por %p399, %p400
      %p403 = scmp.ne.s32.totalorder %s386, %s402
      %p404 = scmp.eq.s32.totalorder %s37, 0
      %p405 = por %p403, %p404
      %p406 = scmp.le.s32.totalorder 1, %s31
      %p407 = scmp.lt.s32.totalorder %s31, 3
      %p408 = pnand %p406, %p407
      %p409 = pneg %p408
      // Predicated region
      $region9: #{tpu_custom_call.1} parent=5 // pred_check
        _
      $region10: #{tpu_custom_call.1} parent=5 // pred_check_branch
        %411 = sbr.rel (%p408) target = $region12
      $region11: #{tpu_custom_call.1} parent=5 // pred_region
        %s412 = ssub.s32 %s31, 1
        // Predicated region
        $region13: #{tpu_custom_call.1} parent=11 // pred_check
          %p413 = pneg %p78
        $region14: #{tpu_custom_call.1} parent=11 // pred_check_branch
          %415 = sbr.rel (%p413) target = $region16
        $region15: #{tpu_custom_call.1} parent=11 // pred_region
          %s417 = ssub.s32 12288, 12288
          %418 = vsyncadd [#allocation6], %s417
          %s419 = sshll.u32 [#allocation5], 4
          %s420 = int_to_ptr.vmem [resolvable:$true] %s419
          %425 = dma.hbm_to_vmem [thread:$0]  %s1, 12288, %s420, [#allocation6], 128, 128, 8
        $region16: #{tpu_custom_call.1} parent=11 // pred_fallthru
          _
        // Predicated region
        $region17: #{tpu_custom_call.1} parent=11 // pred_check
          %p426 = pneg %p99
        $region18: #{tpu_custom_call.1} parent=11 // pred_check_branch
          %428 = sbr.rel (%p426) target = $region20
        $region19: #{tpu_custom_call.1} parent=11 // pred_region
          %s430 = ssub.s32 16, 16
          %431 = vsyncadd [#allocation6], %s430
          %s433 = sshll.u32 [#allocation7], 4
          %s434 = int_to_ptr.vmem [resolvable:$true] %s433
          %436 = dma.hbm_to_vmem [thread:$0]  %s2, 16, %s434, [#allocation6]
        $region20: #{tpu_custom_call.1} parent=11 // pred_fallthru
          _
        // Predicated region
        $region21: #{tpu_custom_call.1} parent=11 // pred_check
          %p437 = pneg %p120
        $region22: #{tpu_custom_call.1} parent=11 // pred_check_branch
          %439 = sbr.rel (%p437) target = $region24
        $region23: #{tpu_custom_call.1} parent=11 // pred_region
          _
        $region24: #{tpu_custom_call.1} parent=11 // pred_fallthru
          _
        // Predicated region
        $region25: #{tpu_custom_call.1} parent=11 // pred_check
          %p440 = pneg %p141
        $region26: #{tpu_custom_call.1} parent=11 // pred_check_branch
          %442 = sbr.rel (%p440) target = $region28
        $region27: #{tpu_custom_call.1} parent=11 // pred_region
          %s444 = ssub.s32 12288, 12288
          %445 = vsyncadd [#allocation9], %s444
          %s446 = sshll.u32 [#allocation8], 4
          %s447 = int_to_ptr.vmem [resolvable:$true] %s446
          %452 = dma.hbm_to_vmem [thread:$0]  %s4, 12288, %s447, [#allocation9], 384, 384, 24
        $region28: #{tpu_custom_call.1} parent=11 // pred_fallthru
          _
        // Predicated region
        $region29: #{tpu_custom_call.1} parent=11 // pred_check
          %p453 = pneg %p162
        $region30: #{tpu_custom_call.1} parent=11 // pred_check_branch
          %455 = sbr.rel (%p453) target = $region32
        $region31: #{tpu_custom_call.1} parent=11 // pred_region
          _
        $region32: #{tpu_custom_call.1} parent=11 // pred_fallthru
          _
        // Predicated region
        $region33: #{tpu_custom_call.1} parent=11 // pred_check
          %p456 = pneg %p183
        $region34: #{tpu_custom_call.1} parent=11 // pred_check_branch
          %458 = sbr.rel (%p456) target = $region36
        $region35: #{tpu_custom_call.1} parent=11 // pred_region
          %s460 = ssub.s32 4096, 4096
          %461 = vsyncadd [#allocation9], %s460
          %s462 = sshll.u32 [#allocation10], 4
          %s463 = int_to_ptr.vmem [resolvable:$true] %s462
          %468 = dma.hbm_to_vmem [thread:$0]  %s6, 4096, %s463, [#allocation9], 128, 128, 8
        $region36: #{tpu_custom_call.1} parent=11 // pred_fallthru
          _
        // Predicated region
        $region37: #{tpu_custom_call.1} parent=11 // pred_check
          %p469 = pneg %p204
        $region38: #{tpu_custom_call.1} parent=11 // pred_check_branch
          %471 = sbr.rel (%p469) target = $region40
        $region39: #{tpu_custom_call.1} parent=11 // pred_region
          _
        $region40: #{tpu_custom_call.1} parent=11 // pred_fallthru
          _
        // Predicated region
        $region41: #{tpu_custom_call.1} parent=11 // pred_check
          %p472 = pneg %p225
        $region42: #{tpu_custom_call.1} parent=11 // pred_check_branch
          %474 = sbr.rel (%p472) target = $region44
        $region43: #{tpu_custom_call.1} parent=11 // pred_region
          _
        $region44: #{tpu_custom_call.1} parent=11 // pred_fallthru
          _
        // Predicated region
        $region45: #{tpu_custom_call.1} parent=11 // pred_check
          %p475 = pneg %p246
        $region46: #{tpu_custom_call.1} parent=11 // pred_check_branch
          %477 = sbr.rel (%p475) target = $region48
        $region47: #{tpu_custom_call.1} parent=11 // pred_region
          _
        $region48: #{tpu_custom_call.1} parent=11 // pred_fallthru
          _
        // Predicated region
        $region49: #{tpu_custom_call.1} parent=11 // pred_check
          %p478 = pneg %p267
        $region50: #{tpu_custom_call.1} parent=11 // pred_check_branch
          %480 = sbr.rel (%p478) target = $region52
        $region51: #{tpu_custom_call.1} parent=11 // pred_region
          %s482 = ssub.s32 8192, 8192
          %483 = vsyncadd [#allocation12], %s482
          %s484 = sshll.u32 [#allocation11], 4
          %s485 = int_to_ptr.vmem [resolvable:$true] %s484
          %490 = dma.hbm_to_vmem [thread:$0]  %s10, 8192, %s485, [#allocation12], 256, 256, 16
        $region52: #{tpu_custom_call.1} parent=11 // pred_fallthru
          _
        // Predicated region
        $region53: #{tpu_custom_call.1} parent=11 // pred_check
          %p491 = pneg %p288
        $region54: #{tpu_custom_call.1} parent=11 // pred_check_branch
          %493 = sbr.rel (%p491) target = $region56
        $region55: #{tpu_custom_call.1} parent=11 // pred_region
          _
        $region56: #{tpu_custom_call.1} parent=11 // pred_fallthru
          _
        // Predicated region
        $region57: #{tpu_custom_call.1} parent=11 // pred_check
          %p494 = pneg %p309
        $region58: #{tpu_custom_call.1} parent=11 // pred_check_branch
          %496 = sbr.rel (%p494) target = $region60
        $region59: #{tpu_custom_call.1} parent=11 // pred_region
          %s498 = ssub.s32 8192, 8192
          %499 = vsyncadd [#allocation12], %s498
          %s500 = sshll.u32 [#allocation13], 4
          %s501 = int_to_ptr.vmem [resolvable:$true] %s500
          %506 = dma.hbm_to_vmem [thread:$0]  %s12, 8192, %s501, [#allocation12], 128, 128, 8
        $region60: #{tpu_custom_call.1} parent=11 // pred_fallthru
          _
        // Predicated region
        $region61: #{tpu_custom_call.1} parent=11 // pred_check
          %p507 = pneg %p330
        $region62: #{tpu_custom_call.1} parent=11 // pred_check_branch
          %509 = sbr.rel (%p507) target = $region64
        $region63: #{tpu_custom_call.1} parent=11 // pred_region
          _
        $region64: #{tpu_custom_call.1} parent=11 // pred_fallthru
          _
        // Predicated region
        $region65: #{tpu_custom_call.1} parent=11 // pred_check
          %p510 = pneg %p351
        $region66: #{tpu_custom_call.1} parent=11 // pred_check_branch
          %512 = sbr.rel (%p510) target = $region68
        $region67: #{tpu_custom_call.1} parent=11 // pred_region
          _
        $region68: #{tpu_custom_call.1} parent=11 // pred_fallthru
          _
        // Predicated region
        $region69: #{tpu_custom_call.1} parent=11 // pred_check
          %p513 = pneg %p372
        $region70: #{tpu_custom_call.1} parent=11 // pred_check_branch
          %515 = sbr.rel (%p513) target = $region72
        $region71: #{tpu_custom_call.1} parent=11 // pred_region
          _
        $region72: #{tpu_custom_call.1} parent=11 // pred_fallthru
          _
      $region12: #{tpu_custom_call.1} parent=5 // pred_fallthru
        _
      %p516 = scmp.lt.s32.totalorder %s31, 2
      // Predicated region
      $region73: #{tpu_custom_call.1} parent=5 // pred_check
        %p517 = pneg %p516
      $region74: #{tpu_custom_call.1} parent=5 // pred_check_branch
        %519 = sbr.rel (%p517) target = $region76
      $region75: #{tpu_custom_call.1} parent=5 // pred_region
        // Predicated region
        $region77: #{tpu_custom_call.1} parent=75 // pred_check
          %p520 = pneg %p51
        $region78: #{tpu_custom_call.1} parent=75 // pred_check_branch
          %522 = sbr.rel (%p520) target = $region80
        $region79: #{tpu_custom_call.1} parent=75 // pred_region
          %s523 = sand.u32 %s41, 1
          %s524 = scalar_lea.sflag [#allocation3], %s523
          %s525 = sand.u32 %s41, 1
          %s526 = smul.addr %s525, 48
          %s527 = scalar_lea.vmem [#allocation2], %s526
          %s529 = ssub.s32 768, 768
          %530 = vsyncadd %s524, %s529
          %s531 = smul.addr %s31, 6
          %s532 = smul.addr %s531, 128
          %s533 = scalar_lea.hbm %s0, %s532
          %s535 = sshll.u32 %s527, 4
          %s536 = int_to_ptr.vmem [resolvable:$true] %s535
          %538 = dma.hbm_to_vmem [thread:$0]  %s533, 768, %s536, %s524
        $region80: #{tpu_custom_call.1} parent=75 // pred_fallthru
          _
      $region76: #{tpu_custom_call.1} parent=5 // pred_fallthru
        _
      %p539 = scmp.le.s32.totalorder 1, %s31
      %p540 = scmp.lt.s32.totalorder %s31, 3
      %p541 = pnand %p539, %p540
      %p542 = pneg %p541
      // Predicated region
      $region81: #{tpu_custom_call.1} parent=5 // pred_check
        _
      $region82: #{tpu_custom_call.1} parent=5 // pred_check_branch
        %544 = sbr.rel (%p541) target = $region84
      $region83: #{tpu_custom_call.1} parent=5 // pred_region
        %s545 = ssub.s32 %s31, 1
        %s546 = sand.u32 %s44, 1
        %s547 = scalar_lea.sflag [#allocation3], %s546
        %s548 = sand.u32 %s44, 1
        %s549 = smul.addr %s548, 48
        %s550 = scalar_lea.vmem [#allocation2], %s549
        // Predicated region
        $region85: #{tpu_custom_call.1} parent=83 // pred_check
          %p551 = pneg %p57
        $region86: #{tpu_custom_call.1} parent=83 // pred_check_branch
          %553 = sbr.rel (%p551) target = $region88
        $region87: #{tpu_custom_call.1} parent=83 // pred_region
          %554 = dma.done %s547, 768
        $region88: #{tpu_custom_call.1} parent=83 // pred_fallthru
          _
        // Predicated region
        $region89: #{tpu_custom_call.1} parent=83 // pred_check
          %p555 = pneg %p78
        $region90: #{tpu_custom_call.1} parent=83 // pred_check_branch
          %557 = sbr.rel (%p555) target = $region92
        $region91: #{tpu_custom_call.1} parent=83 // pred_region
          %558 = dma.done [#allocation6], 12288
        $region92: #{tpu_custom_call.1} parent=83 // pred_fallthru
          _
        // Predicated region
        $region93: #{tpu_custom_call.1} parent=83 // pred_check
          %p559 = pneg %p99
        $region94: #{tpu_custom_call.1} parent=83 // pred_check_branch
          %561 = sbr.rel (%p559) target = $region96
        $region95: #{tpu_custom_call.1} parent=83 // pred_region
          %562 = dma.done [#allocation6], 16
        $region96: #{tpu_custom_call.1} parent=83 // pred_fallthru
          _
        // Predicated region
        $region97: #{tpu_custom_call.1} parent=83 // pred_check
          %p563 = pneg %p141
        $region98: #{tpu_custom_call.1} parent=83 // pred_check_branch
          %565 = sbr.rel (%p563) target = $region100
        $region99: #{tpu_custom_call.1} parent=83 // pred_region
          %566 = dma.done [#allocation9], 12288
        $region100: #{tpu_custom_call.1} parent=83 // pred_fallthru
          _
        // Predicated region
        $region101: #{tpu_custom_call.1} parent=83 // pred_check
          %p567 = pneg %p183
        $region102: #{tpu_custom_call.1} parent=83 // pred_check_branch
          %569 = sbr.rel (%p567) target = $region104
        $region103: #{tpu_custom_call.1} parent=83 // pred_region
          %570 = dma.done [#allocation9], 4096
        $region104: #{tpu_custom_call.1} parent=83 // pred_fallthru
          _
        // Predicated region
        $region105: #{tpu_custom_call.1} parent=83 // pred_check
          %p571 = pneg %p267
        $region106: #{tpu_custom_call.1} parent=83 // pred_check_branch
          %573 = sbr.rel (%p571) target = $region108
        $region107: #{tpu_custom_call.1} parent=83 // pred_region
          %574 = dma.done [#allocation12], 8192
        $region108: #{tpu_custom_call.1} parent=83 // pred_fallthru
          _
        // Predicated region
        $region109: #{tpu_custom_call.1} parent=83 // pred_check
          %p575 = pneg %p309
        $region110: #{tpu_custom_call.1} parent=83 // pred_check_branch
          %577 = sbr.rel (%p575) target = $region112
        $region111: #{tpu_custom_call.1} parent=83 // pred_region
          %578 = dma.done [#allocation12], 8192
        $region112: #{tpu_custom_call.1} parent=83 // pred_fallthru
          _
        %s579 = sand.u32 %s44, 1
        %s580 = scalar_lea.sflag [#allocation3], %s579
        %s581 = sand.u32 %s44, 1
        %s582 = smul.addr %s581, 48
        %s583 = scalar_lea.vmem [#allocation2], %s582
        %p584 = pneg %p57
        %p585 = pneg %p54
        %p586 = pneg %p78
        %p587 = pneg %p75
        %p588 = pneg %p99
        %p589 = pneg %p96
        %p590 = pneg %p120
        %p591 = pneg %p117
        %p592 = pneg %p141
        %p593 = pneg %p138
        %p594 = pneg %p162
        %p595 = pneg %p159
        %p596 = pneg %p183
        %p597 = pneg %p180
        %p598 = pneg %p204
        %p599 = pneg %p201
        %p600 = pneg %p225
        %p601 = pneg %p222
        %p602 = pneg %p246
        %p603 = pneg %p243
        %p604 = pneg %p267
        %p605 = pneg %p264
        %p606 = pneg %p288
        %p607 = pneg %p285
        %p608 = pneg %p309
        %p609 = pneg %p306
        %p610 = pneg %p330
        %p611 = pneg %p327
        %p612 = pneg %p351
        %p613 = pneg %p348
        %p614 = pneg %p372
        %p615 = pneg %p369
        %p616 = pneg %p398
        %p617 = pneg %p395
        %s618 = sand.u32 %s385, 1
        %s619 = scalar_lea.sflag [#allocation4], %s618
        %s620 = sand.u32 %s385, 1
        %s621 = smul.addr %s620, 8
        %s622 = scalar_lea.vmem [#allocation14], %s621
        %v624 = vld [vmem:[%s550] sm:$0xff]
        %v625 = vld [vmem:[%s550 + $0x8] sm:$0xff]
        %v626 = vld [vmem:[%s550 + $0x10] sm:$0xff]
        %v627 = vld [vmem:[%s550 + $0x18] sm:$0xff]
        %v628 = vld [vmem:[%s550 + $0x20] sm:$0xff]
        %v629 = vld [vmem:[%s550 + $0x28] sm:$0xff]
        %v630 = vld [vmem:[#allocation5] sm:$0xff]
        %v631 = vld [vmem:[#allocation5 + $0x8] sm:$0xff]
        %v632 = vld [vmem:[#allocation5 + $0x10] sm:$0xff]
        %v633 = vld [vmem:[#allocation5 + $0x18] sm:$0xff]
        %v634 = vld [vmem:[#allocation5 + $0x20] sm:$0xff]
        %v635 = vld [vmem:[#allocation5 + $0x28] sm:$0xff]
        %v636 = vld [vmem:[#allocation5 + $0x30] sm:$0xff]
        %v637 = vld [vmem:[#allocation5 + $0x38] sm:$0xff]
        %v638 = vld [vmem:[#allocation5 + $0x40] sm:$0xff]
        %v639 = vld [vmem:[#allocation5 + $0x48] sm:$0xff]
        %v640 = vld [vmem:[#allocation5 + $0x50] sm:$0xff]
        %v641 = vld [vmem:[#allocation5 + $0x58] sm:$0xff]
        %v642 = vld [vmem:[#allocation5 + $0x60] sm:$0xff]
        %v643 = vld [vmem:[#allocation5 + $0x68] sm:$0xff]
        %v644 = vld [vmem:[#allocation5 + $0x70] sm:$0xff]
        %v645 = vld [vmem:[#allocation5 + $0x78] sm:$0xff]
        %v646 = vld [vmem:[#allocation5 + $0x80] sm:$0xff]
        %v647 = vld [vmem:[#allocation5 + $0x88] sm:$0xff]
        %v648 = vld [vmem:[#allocation5 + $0x90] sm:$0xff]
        %v649 = vld [vmem:[#allocation5 + $0x98] sm:$0xff]
        %v650 = vld [vmem:[#allocation5 + $0xa0] sm:$0xff]
        %v651 = vld [vmem:[#allocation5 + $0xa8] sm:$0xff]
        %v652 = vld [vmem:[#allocation5 + $0xb0] sm:$0xff]
        %v653 = vld [vmem:[#allocation5 + $0xb8] sm:$0xff]
        %v654 = vld [vmem:[#allocation5 + $0xc0] sm:$0xff]
        %v655 = vld [vmem:[#allocation5 + $0xc8] sm:$0xff]
        %v656 = vld [vmem:[#allocation5 + $0xd0] sm:$0xff]
        %v657 = vld [vmem:[#allocation5 + $0xd8] sm:$0xff]
        %v658 = vld [vmem:[#allocation5 + $0xe0] sm:$0xff]
        %v659 = vld [vmem:[#allocation5 + $0xe8] sm:$0xff]
        %v660 = vld [vmem:[#allocation5 + $0xf0] sm:$0xff]
        %v661 = vld [vmem:[#allocation5 + $0xf8] sm:$0xff]
        %v662 = vld [vmem:[#allocation5 + $0x100] sm:$0xff]
        %v663 = vld [vmem:[#allocation5 + $0x108] sm:$0xff]
        %v664 = vld [vmem:[#allocation5 + $0x110] sm:$0xff]
        %v665 = vld [vmem:[#allocation5 + $0x118] sm:$0xff]
        %v666 = vld [vmem:[#allocation5 + $0x120] sm:$0xff]
        %v667 = vld [vmem:[#allocation5 + $0x128] sm:$0xff]
        %v668 = vld [vmem:[#allocation5 + $0x130] sm:$0xff]
        %v669 = vld [vmem:[#allocation5 + $0x138] sm:$0xff]
        %v670 = vld [vmem:[#allocation5 + $0x140] sm:$0xff]
        %v671 = vld [vmem:[#allocation5 + $0x148] sm:$0xff]
        %v672 = vld [vmem:[#allocation5 + $0x150] sm:$0xff]
        %v673 = vld [vmem:[#allocation5 + $0x158] sm:$0xff]
        %v674 = vld [vmem:[#allocation5 + $0x160] sm:$0xff]
        %v675 = vld [vmem:[#allocation5 + $0x168] sm:$0xff]
        %v676 = vld [vmem:[#allocation5 + $0x170] sm:$0xff]
        %v677 = vld [vmem:[#allocation5 + $0x178] sm:$0xff]
        %v678 = vld [vmem:[#allocation5 + $0x180] sm:$0xff]
        %v679 = vld [vmem:[#allocation5 + $0x188] sm:$0xff]
        %v680 = vld [vmem:[#allocation5 + $0x190] sm:$0xff]
        %v681 = vld [vmem:[#allocation5 + $0x198] sm:$0xff]
        %v682 = vld [vmem:[#allocation5 + $0x1a0] sm:$0xff]
        %v683 = vld [vmem:[#allocation5 + $0x1a8] sm:$0xff]
        %v684 = vld [vmem:[#allocation5 + $0x1b0] sm:$0xff]
        %v685 = vld [vmem:[#allocation5 + $0x1b8] sm:$0xff]
        %v686 = vld [vmem:[#allocation5 + $0x1c0] sm:$0xff]
        %v687 = vld [vmem:[#allocation5 + $0x1c8] sm:$0xff]
        %v688 = vld [vmem:[#allocation5 + $0x1d0] sm:$0xff]
        %v689 = vld [vmem:[#allocation5 + $0x1d8] sm:$0xff]
        %v690 = vld [vmem:[#allocation5 + $0x1e0] sm:$0xff]
        %v691 = vld [vmem:[#allocation5 + $0x1e8] sm:$0xff]
        %v692 = vld [vmem:[#allocation5 + $0x1f0] sm:$0xff]
        %v693 = vld [vmem:[#allocation5 + $0x1f8] sm:$0xff]
        %v694 = vld [vmem:[#allocation5 + $0x200] sm:$0xff]
        %v695 = vld [vmem:[#allocation5 + $0x208] sm:$0xff]
        %v696 = vld [vmem:[#allocation5 + $0x210] sm:$0xff]
        %v697 = vld [vmem:[#allocation5 + $0x218] sm:$0xff]
        %v698 = vld [vmem:[#allocation5 + $0x220] sm:$0xff]
        %v699 = vld [vmem:[#allocation5 + $0x228] sm:$0xff]
        %v700 = vld [vmem:[#allocation5 + $0x230] sm:$0xff]
        %v701 = vld [vmem:[#allocation5 + $0x238] sm:$0xff]
        %v702 = vld [vmem:[#allocation5 + $0x240] sm:$0xff]
        %v703 = vld [vmem:[#allocation5 + $0x248] sm:$0xff]
        %v704 = vld [vmem:[#allocation5 + $0x250] sm:$0xff]
        %v705 = vld [vmem:[#allocation5 + $0x258] sm:$0xff]
        %v706 = vld [vmem:[#allocation5 + $0x260] sm:$0xff]
        %v707 = vld [vmem:[#allocation5 + $0x268] sm:$0xff]
        %v708 = vld [vmem:[#allocation5 + $0x270] sm:$0xff]
        %v709 = vld [vmem:[#allocation5 + $0x278] sm:$0xff]
        %v710 = vld [vmem:[#allocation5 + $0x280] sm:$0xff]
        %v711 = vld [vmem:[#allocation5 + $0x288] sm:$0xff]
        %v712 = vld [vmem:[#allocation5 + $0x290] sm:$0xff]
        %v713 = vld [vmem:[#allocation5 + $0x298] sm:$0xff]
        %v714 = vld [vmem:[#allocation5 + $0x2a0] sm:$0xff]
        %v715 = vld [vmem:[#allocation5 + $0x2a8] sm:$0xff]
        %v716 = vld [vmem:[#allocation5 + $0x2b0] sm:$0xff]
        %v717 = vld [vmem:[#allocation5 + $0x2b8] sm:$0xff]
        %v718 = vld [vmem:[#allocation5 + $0x2c0] sm:$0xff]
        %v719 = vld [vmem:[#allocation5 + $0x2c8] sm:$0xff]
        %v720 = vld [vmem:[#allocation5 + $0x2d0] sm:$0xff]
        %v721 = vld [vmem:[#allocation5 + $0x2d8] sm:$0xff]
        %v722 = vld [vmem:[#allocation5 + $0x2e0] sm:$0xff]
        %v723 = vld [vmem:[#allocation5 + $0x2e8] sm:$0xff]
        %v724 = vld [vmem:[#allocation5 + $0x2f0] sm:$0xff]
        %v725 = vld [vmem:[#allocation5 + $0x2f8] sm:$0xff]
        %v726 = vpack.c.bf16 %v624, %v624
        %v727 = vpack.c.bf16 %v625, %v625
        %v728 = vpack.c.bf16 %v626, %v626
        %v729 = vpack.c.bf16 %v627, %v627
        %v730 = vpack.c.bf16 %v628, %v628
        %v731 = vpack.c.bf16 %v629, %v629
        %v732 = vpack.c.bf16 %v631, %v630
        %v733 = vpack.c.bf16 %v633, %v632
        %v734 = vpack.c.bf16 %v635, %v634
        %v735 = vpack.c.bf16 %v637, %v636
        %v736 = vpack.c.bf16 %v639, %v638
        %v737 = vpack.c.bf16 %v641, %v640
        %v738 = vpack.c.bf16 %v643, %v642
        %v739 = vpack.c.bf16 %v645, %v644
        %v740 = vpack.c.bf16 %v647, %v646
        %v741 = vpack.c.bf16 %v649, %v648
        %v742 = vpack.c.bf16 %v651, %v650
        %v743 = vpack.c.bf16 %v653, %v652
        %v744 = vpack.c.bf16 %v655, %v654
        %v745 = vpack.c.bf16 %v657, %v656
        %v746 = vpack.c.bf16 %v659, %v658
        %v747 = vpack.c.bf16 %v661, %v660
        %v748 = vpack.c.bf16 %v663, %v662
        %v749 = vpack.c.bf16 %v665, %v664
        %v750 = vpack.c.bf16 %v667, %v666
        %v751 = vpack.c.bf16 %v669, %v668
        %v752 = vpack.c.bf16 %v671, %v670
        %v753 = vpack.c.bf16 %v673, %v672
        %v754 = vpack.c.bf16 %v675, %v674
        %v755 = vpack.c.bf16 %v677, %v676
        %v756 = vpack.c.bf16 %v679, %v678
        %v757 = vpack.c.bf16 %v681, %v680
        %v758 = vpack.c.bf16 %v683, %v682
        %v759 = vpack.c.bf16 %v685, %v684
        %v760 = vpack.c.bf16 %v687, %v686
        %v761 = vpack.c.bf16 %v689, %v688
        %v762 = vpack.c.bf16 %v691, %v690
        %v763 = vpack.c.bf16 %v693, %v692
        %v764 = vpack.c.bf16 %v695, %v694
        %v765 = vpack.c.bf16 %v697, %v696
        %v766 = vpack.c.bf16 %v699, %v698
        %v767 = vpack.c.bf16 %v701, %v700
        %v768 = vpack.c.bf16 %v703, %v702
        %v769 = vpack.c.bf16 %v705, %v704
        %v770 = vpack.c.bf16 %v707, %v706
        %v771 = vpack.c.bf16 %v709, %v708
        %v772 = vpack.c.bf16 %v711, %v710
        %v773 = vpack.c.bf16 %v713, %v712
        %v774 = vpack.c.bf16 %v715, %v714
        %v775 = vpack.c.bf16 %v717, %v716
        %v776 = vpack.c.bf16 %v719, %v718
        %v777 = vpack.c.bf16 %v721, %v720
        %v778 = vpack.c.bf16 %v723, %v722
        %v779 = vpack.c.bf16 %v725, %v724
        %v780 = vld [vmem:[#allocation7] sm:$0x1]
        %v782 = vlaneseq
        %v783 = vshrl.u32 %v782, 7
        %v784 = vsub.s32 0, %v783
        %v785 = vrot.slane %v780, %v784
        %787 = vmatprep.subr.bf16.mxu0 0
        %788 = vmatpush1.bf16.msra.mxu0 %v732
        %789 = vmatprep.subr.bf16.mxu0 0
        %790 = vmatpush1.bf16.msra.mxu0 %v733
        %791 = vmatprep.subr.bf16.mxu0 0
        %792 = vmatpush1.bf16.msra.mxu0 %v734
        %793 = vmatprep.subr.bf16.mxu0 0
        %794 = vmatpush1.bf16.msra.mxu0 %v735
        %795 = vmatprep.subr.bf16.mxu0 0
        %796 = vmatpush1.bf16.msra.mxu0 %v736
        %797 = vmatprep.subr.bf16.mxu0 0
        %798 = vmatpush1.bf16.msra.mxu0 %v737
        %799 = vmatprep.subr.bf16.mxu0 0
        %800 = vmatpush1.bf16.msra.mxu0 %v738
        %801 = vmatprep.subr.bf16.mxu0 0
        %802 = vmatpush1.bf16.msra.mxu0 %v739
        %803 = vmatprep.subr.bf16.mxu0 0
        %804 = vmatpush1.bf16.msra.mxu0 %v740
        %805 = vmatprep.subr.bf16.mxu0 0
        %806 = vmatpush1.bf16.msra.mxu0 %v741
        %807 = vmatprep.subr.bf16.mxu0 0
        %808 = vmatpush1.bf16.msra.mxu0 %v742
        %809 = vmatprep.subr.bf16.mxu0 0
        %810 = vmatpush1.bf16.msra.mxu0 %v743
        %811 = vmatprep.subr.bf16.mxu0 0
        %812 = vmatpush1.bf16.msra.mxu0 %v744
        %813 = vmatprep.subr.bf16.mxu0 0
        %814 = vmatpush1.bf16.msra.mxu0 %v745
        %815 = vmatprep.subr.bf16.mxu0 0
        %816 = vmatpush1.bf16.msra.mxu0 %v746
        %817 = vmatprep.subr.bf16.mxu0 0
        %818 = vmatpush1.bf16.msra.mxu0 %v747
        %819 = vmatprep.mubr.bf16.mxu0 %v727
        %820 = vmatmul.mubr.bf16.gmra.mrb[0].mxu0 %v726
        %v821 = vpop.f32.mrb[0].mxu0
        %v822 = vadd.f32 %v785, %v821
        %v823 = vpop.f32.mrb[0].mxu0
        %v824 = vpop.f32.mrb[0].mxu0
        %v825 = vpop.f32.mrb[0].mxu0
        %826 = vdwg.mxu0
        %827 = vmatprep.subr.bf16.mxu0 0
        %828 = vmatpush1.bf16.msra.mxu0 %v748
        %829 = vmatprep.subr.bf16.mxu0 0
        %830 = vmatpush1.bf16.msra.mxu0 %v749
        %831 = vmatprep.subr.bf16.mxu0 0
        %832 = vmatpush1.bf16.msra.mxu0 %v750
        %833 = vmatprep.subr.bf16.mxu0 0
        %834 = vmatpush1.bf16.msra.mxu0 %v751
        %835 = vmatprep.subr.bf16.mxu0 0
        %836 = vmatpush1.bf16.msra.mxu0 %v752
        %837 = vmatprep.subr.bf16.mxu0 0
        %838 = vmatpush1.bf16.msra.mxu0 %v753
        %839 = vmatprep.subr.bf16.mxu0 0
        %840 = vmatpush1.bf16.msra.mxu0 %v754
        %841 = vmatprep.subr.bf16.mxu0 0
        %842 = vmatpush1.bf16.msra.mxu0 %v755
        %843 = vmatprep.subr.bf16.mxu0 0
        %844 = vmatpush1.bf16.msra.mxu0 %v756
        %845 = vmatprep.subr.bf16.mxu0 0
        %846 = vmatpush1.bf16.msra.mxu0 %v757
        %847 = vmatprep.subr.bf16.mxu0 0
        %848 = vmatpush1.bf16.msra.mxu0 %v758
        %849 = vmatprep.subr.bf16.mxu0 0
        %850 = vmatpush1.bf16.msra.mxu0 %v759
        %851 = vmatprep.subr.bf16.mxu0 0
        %852 = vmatpush1.bf16.msra.mxu0 %v760
        %853 = vmatprep.subr.bf16.mxu0 0
        %854 = vmatpush1.bf16.msra.mxu0 %v761
        %855 = vmatprep.subr.bf16.mxu0 0
        %856 = vmatpush1.bf16.msra.mxu0 %v762
        %857 = vmatprep.subr.bf16.mxu0 0
        %858 = vmatpush1.bf16.msra.mxu0 %v763
        %859 = vmatprep.mubr.bf16.mxu0 %v729
        %860 = vmatmul.mubr.bf16.gmra.mrb[0].mxu0 %v728
        %v861 = vpop.f32.mrb[0].mxu0
        %v862 = vadd.f32 %v822, %v861
        %v863 = vpop.f32.mrb[0].mxu0
        %v864 = vpop.f32.mrb[0].mxu0
        %v865 = vpop.f32.mrb[0].mxu0
        %866 = vdwg.mxu0
        %867 = vmatprep.subr.bf16.mxu0 0
        %868 = vmatpush1.bf16.msra.mxu0 %v764
        %869 = vmatprep.subr.bf16.mxu0 0
        %870 = vmatpush1.bf16.msra.mxu0 %v765
        %871 = vmatprep.subr.bf16.mxu0 0
        %872 = vmatpush1.bf16.msra.mxu0 %v766
        %873 = vmatprep.subr.bf16.mxu0 0
        %874 = vmatpush1.bf16.msra.mxu0 %v767
        %875 = vmatprep.subr.bf16.mxu0 0
        %876 = vmatpush1.bf16.msra.mxu0 %v768
        %877 = vmatprep.subr.bf16.mxu0 0
        %878 = vmatpush1.bf16.msra.mxu0 %v769
        %879 = vmatprep.subr.bf16.mxu0 0
        %880 = vmatpush1.bf16.msra.mxu0 %v770
        %881 = vmatprep.subr.bf16.mxu0 0
        %882 = vmatpush1.bf16.msra.mxu0 %v771
        %883 = vmatprep.subr.bf16.mxu0 0
        %884 = vmatpush1.bf16.msra.mxu0 %v772
        %885 = vmatprep.subr.bf16.mxu0 0
        %886 = vmatpush1.bf16.msra.mxu0 %v773
        %887 = vmatprep.subr.bf16.mxu0 0
        %888 = vmatpush1.bf16.msra.mxu0 %v774
        %889 = vmatprep.subr.bf16.mxu0 0
        %890 = vmatpush1.bf16.msra.mxu0 %v775
        %891 = vmatprep.subr.bf16.mxu0 0
        %892 = vmatpush1.bf16.msra.mxu0 %v776
        %893 = vmatprep.subr.bf16.mxu0 0
        %894 = vmatpush1.bf16.msra.mxu0 %v777
        %895 = vmatprep.subr.bf16.mxu0 0
        %896 = vmatpush1.bf16.msra.mxu0 %v778
        %897 = vmatprep.subr.bf16.mxu0 0
        %898 = vmatpush1.bf16.msra.mxu0 %v779
        %899 = vmatprep.mubr.bf16.mxu0 %v731
        %900 = vmatmul.mubr.bf16.gmra.mrb[0].mxu0 %v730
        %v901 = vpop.f32.mrb[0].mxu0
        %v902 = vadd.f32 %v862, %v901
        %v903 = vpop.f32.mrb[0].mxu0
        %v904 = vpop.f32.mrb[0].mxu0
        %v905 = vpop.f32.mrb[0].mxu0
        %906 = vdwg.mxu0
        %v907 = vld [vmem:[%s3] sm:$0xff]
        %v908 = vadd.f32 %v902, %v907
        %v909 = vlaneseq
        %v910 = vshrl.u32 %v909, 7
        %v911 = vlaneseq
        %v912 = vand.u32 %v911, 127
        %vm913 = vcmp.gt.s32.totalorder %v912, %v910
        %v914 = vsel %vm913, -1e+30, 0.0
        loop: start=0, step=1, limit=2
        $region113: #{tpu_custom_call.1} parent=83 // loop_pre_header
          _
        $region114: #{tpu_custom_call.1} parent=83 // loop_header
          %s916 = sphi 0, %s920
          %p917 = scmp.ge.s32.totalorder %s916, 2
          %v921 = vphi %v908, %v4913
        $region115: #{tpu_custom_call.1} parent=83 // loop_header_branch
          %919 = sbr.rel (%p917) target = $region119
        $region116: #{tpu_custom_call.1} parent=83 // loop_body
          %s922 = smul.u32 %s916, 48
          %s923 = smul.addr %s922, 8
          %s924 = scalar_lea.vmem [#allocation8], %s923
          %v925 = vld [vmem:[%s924] sm:$0xff]
          %v926 = vld [vmem:[%s924 + $0x8] sm:$0xff]
          %v927 = vld [vmem:[%s924 + $0x10] sm:$0xff]
          %v928 = vld [vmem:[%s924 + $0x18] sm:$0xff]
          %v929 = vld [vmem:[%s924 + $0x20] sm:$0xff]
          %v930 = vld [vmem:[%s924 + $0x28] sm:$0xff]
          %v931 = vld [vmem:[%s924 + $0x30] sm:$0xff]
          %v932 = vld [vmem:[%s924 + $0x38] sm:$0xff]
          %v933 = vld [vmem:[%s924 + $0x40] sm:$0xff]
          %v934 = vld [vmem:[%s924 + $0x48] sm:$0xff]
          %v935 = vld [vmem:[%s924 + $0x50] sm:$0xff]
          %v936 = vld [vmem:[%s924 + $0x58] sm:$0xff]
          %v937 = vld [vmem:[%s924 + $0x60] sm:$0xff]
          %v938 = vld [vmem:[%s924 + $0x68] sm:$0xff]
          %v939 = vld [vmem:[%s924 + $0x70] sm:$0xff]
          %v940 = vld [vmem:[%s924 + $0x78] sm:$0xff]
          %v941 = vld [vmem:[%s924 + $0x80] sm:$0xff]
          %v942 = vld [vmem:[%s924 + $0x88] sm:$0xff]
          %v943 = vld [vmem:[%s924 + $0x90] sm:$0xff]
          %v944 = vld [vmem:[%s924 + $0x98] sm:$0xff]
          %v945 = vld [vmem:[%s924 + $0xa0] sm:$0xff]
          %v946 = vld [vmem:[%s924 + $0xa8] sm:$0xff]
          %v947 = vld [vmem:[%s924 + $0xb0] sm:$0xff]
          %v948 = vld [vmem:[%s924 + $0xb8] sm:$0xff]
          %v949 = vld [vmem:[%s924 + $0xc0] sm:$0xff]
          %v950 = vld [vmem:[%s924 + $0xc8] sm:$0xff]
          %v951 = vld [vmem:[%s924 + $0xd0] sm:$0xff]
          %v952 = vld [vmem:[%s924 + $0xd8] sm:$0xff]
          %v953 = vld [vmem:[%s924 + $0xe0] sm:$0xff]
          %v954 = vld [vmem:[%s924 + $0xe8] sm:$0xff]
          %v955 = vld [vmem:[%s924 + $0xf0] sm:$0xff]
          %v956 = vld [vmem:[%s924 + $0xf8] sm:$0xff]
          %v957 = vld [vmem:[%s924 + $0x100] sm:$0xff]
          %v958 = vld [vmem:[%s924 + $0x108] sm:$0xff]
          %v959 = vld [vmem:[%s924 + $0x110] sm:$0xff]
          %v960 = vld [vmem:[%s924 + $0x118] sm:$0xff]
          %v961 = vld [vmem:[%s924 + $0x120] sm:$0xff]
          %v962 = vld [vmem:[%s924 + $0x128] sm:$0xff]
          %v963 = vld [vmem:[%s924 + $0x130] sm:$0xff]
          %v964 = vld [vmem:[%s924 + $0x138] sm:$0xff]
          %v965 = vld [vmem:[%s924 + $0x140] sm:$0xff]
          %v966 = vld [vmem:[%s924 + $0x148] sm:$0xff]
          %v967 = vld [vmem:[%s924 + $0x150] sm:$0xff]
          %v968 = vld [vmem:[%s924 + $0x158] sm:$0xff]
          %v969 = vld [vmem:[%s924 + $0x160] sm:$0xff]
          %v970 = vld [vmem:[%s924 + $0x168] sm:$0xff]
          %v971 = vld [vmem:[%s924 + $0x170] sm:$0xff]
          %v972 = vld [vmem:[%s924 + $0x178] sm:$0xff]
          %v973 = vpack.c.bf16 %v921, %v921
          %v974 = vpack.c.bf16 %v928, %v925
          %v975 = vpack.c.bf16 %v929, %v926
          %v976 = vpack.c.bf16 %v930, %v927
          %v977 = vpack.c.bf16 %v934, %v931
          %v978 = vpack.c.bf16 %v935, %v932
          %v979 = vpack.c.bf16 %v936, %v933
          %v980 = vpack.c.bf16 %v940, %v937
          %v981 = vpack.c.bf16 %v941, %v938
          %v982 = vpack.c.bf16 %v942, %v939
          %v983 = vpack.c.bf16 %v946, %v943
          %v984 = vpack.c.bf16 %v947, %v944
          %v985 = vpack.c.bf16 %v948, %v945
          %v986 = vpack.c.bf16 %v952, %v949
          %v987 = vpack.c.bf16 %v953, %v950
          %v988 = vpack.c.bf16 %v954, %v951
          %v989 = vpack.c.bf16 %v958, %v955
          %v990 = vpack.c.bf16 %v959, %v956
          %v991 = vpack.c.bf16 %v960, %v957
          %v992 = vpack.c.bf16 %v964, %v961
          %v993 = vpack.c.bf16 %v965, %v962
          %v994 = vpack.c.bf16 %v966, %v963
          %v995 = vpack.c.bf16 %v970, %v967
          %v996 = vpack.c.bf16 %v971, %v968
          %v997 = vpack.c.bf16 %v972, %v969
          %s998 = smul.u32 %s916, 3
          %s999 = scalar_lea.vmem %s5, %s998
          %v1000 = vld [vmem:[%s999] sm:$0x7]
          %v1002 = vlaneseq
          %v1003 = vshrl.u32 %v1002, 7
          %v1004 = vsub.s32 0, %v1003
          %v1005 = vrot.slane %v1000, %v1004
          %v1006 = vlaneseq
          %v1007 = vshrl.u32 %v1006, 7
          %v1008 = vsub.s32 1, %v1007
          %v1009 = vrot.slane %v1000, %v1008
          %v1010 = vlaneseq
          %v1011 = vshrl.u32 %v1010, 7
          %v1012 = vsub.s32 2, %v1011
          %v1013 = vrot.slane %v1000, %v1012
          %1017 = vmatprep.subr.bf16.mxu0 %v975
          %1018 = vmatpush1.bf16.msra.mxu0 %v974
          %1019 = vmatprep.subr.bf16.mxu0 %v978
          %1020 = vmatpush1.bf16.msra.mxu0 %v977
          %1021 = vmatprep.subr.bf16.mxu0 %v981
          %1022 = vmatpush1.bf16.msra.mxu0 %v980
          %1023 = vmatprep.subr.bf16.mxu0 %v984
          %1024 = vmatpush1.bf16.msra.mxu0 %v983
          %1025 = vmatprep.subr.bf16.mxu0 %v987
          %1026 = vmatpush1.bf16.msra.mxu0 %v986
          %1027 = vmatprep.subr.bf16.mxu0 %v990
          %1028 = vmatpush1.bf16.msra.mxu0 %v989
          %1029 = vmatprep.subr.bf16.mxu0 %v993
          %1030 = vmatpush1.bf16.msra.mxu0 %v992
          %1031 = vmatprep.subr.bf16.mxu0 %v996
          %1032 = vmatpush1.bf16.msra.mxu0 %v995
          %1033 = vmatprep.subr.bf16.mxu0 0
          %1034 = vmatpush1.bf16.msra.mxu0 0
          %1035 = vmatprep.subr.bf16.mxu0 0
          %1036 = vmatpush1.bf16.msra.mxu0 0
          %1037 = vmatprep.subr.bf16.mxu0 0
          %1038 = vmatpush1.bf16.msra.mxu0 0
          %1039 = vmatprep.subr.bf16.mxu0 0
          %1040 = vmatpush1.bf16.msra.mxu0 0
          %1041 = vmatprep.subr.bf16.mxu0 0
          %1042 = vmatpush1.bf16.msra.mxu0 0
          %1043 = vmatprep.subr.bf16.mxu0 0
          %1044 = vmatpush1.bf16.msra.mxu0 0
          %1045 = vmatprep.subr.bf16.mxu0 0
          %1046 = vmatpush1.bf16.msra.mxu0 0
          %1047 = vmatprep.subr.bf16.mxu0 0
          %1048 = vmatpush1.bf16.msra.mxu0 0
          %1049 = vmatprep.mubr.bf16.mxu0 0
          %1050 = vmatmul.mubr.bf16.gmra.mrb[0].mxu0 %v973
          %v1051 = vpop.f32.mrb[0].mxu0
          %v1052 = vadd.f32 %v1005, %v1051
          %v1053 = vpop.f32.mrb[0].mxu0
          %v1054 = vadd.f32 %v1009, %v1053
          %v1055 = vpop.f32.mrb[0].mxu0
          %v1056 = vpop.f32.mrb[0].mxu0
          %1057 = vdwg.mxu0
          %1058 = vmatprep.subr.bf16.mxu0 0
          %1059 = vmatpush1.bf16.msra.mxu0 %v976
          %1060 = vmatprep.subr.bf16.mxu0 0
          %1061 = vmatpush1.bf16.msra.mxu0 %v979
          %1062 = vmatprep.subr.bf16.mxu0 0
          %1063 = vmatpush1.bf16.msra.mxu0 %v982
          %1064 = vmatprep.subr.bf16.mxu0 0
          %1065 = vmatpush1.bf16.msra.mxu0 %v985
          %1066 = vmatprep.subr.bf16.mxu0 0
          %1067 = vmatpush1.bf16.msra.mxu0 %v988
          %1068 = vmatprep.subr.bf16.mxu0 0
          %1069 = vmatpush1.bf16.msra.mxu0 %v991
          %1070 = vmatprep.subr.bf16.mxu0 0
          %1071 = vmatpush1.bf16.msra.mxu0 %v994
          %1072 = vmatprep.subr.bf16.mxu0 0
          %1073 = vmatpush1.bf16.msra.mxu0 %v997
          %1074 = vmatprep.subr.bf16.mxu0 0
          %1075 = vmatpush1.bf16.msra.mxu0 0
          %1076 = vmatprep.subr.bf16.mxu0 0
          %1077 = vmatpush1.bf16.msra.mxu0 0
          %1078 = vmatprep.subr.bf16.mxu0 0
          %1079 = vmatpush1.bf16.msra.mxu0 0
          %1080 = vmatprep.subr.bf16.mxu0 0
          %1081 = vmatpush1.bf16.msra.mxu0 0
          %1082 = vmatprep.subr.bf16.mxu0 0
          %1083 = vmatpush1.bf16.msra.mxu0 0
          %1084 = vmatprep.subr.bf16.mxu0 0
          %1085 = vmatpush1.bf16.msra.mxu0 0
          %1086 = vmatprep.subr.bf16.mxu0 0
          %1087 = vmatpush1.bf16.msra.mxu0 0
          %1088 = vmatprep.subr.bf16.mxu0 0
          %1089 = vmatpush1.bf16.msra.mxu0 0
          %1090 = vmatprep.mubr.bf16.mxu0 0
          %1091 = vmatmul.mubr.bf16.gmra.mrb[0].mxu0 %v973
          %v1092 = vpop.f32.mrb[0].mxu0
          %v1093 = vadd.f32 %v1013, %v1092
          %v1094 = vpop.f32.mrb[0].mxu0
          %v1095 = vpop.f32.mrb[0].mxu0
          %v1096 = vpop.f32.mrb[0].mxu0
          %1097 = vdwg.mxu0
          %1099 = vrot.lane.b32.xlu0 %v1052, 96
          %v1100 = vpop.permute.xlu0 %1099
          %1102 = vrot.lane.b32.xlu0 %v1052, 64
          %v1103 = vpop.permute.xlu0 %1102
          %1105 = vrot.lane.b32.xlu0 %v1052, 32
          %v1106 = vpop.permute.xlu0 %1105
          %v1108 = vcombine.low %v1052, %v1103
          %v1109 = vcombine.high %v1052, %v1103
          %v1111 = vunpack.c.l.s4 1983009808
          %v1112 = vunpack.c.0.s8 %v1111
          %v1113 = vlaneseq
          %v1114 = vshrl.u32 %v1113, 7
          %v1115 = vsub.s32 %v1112, %v1114
          %v1116 = vrot.slane %v1108, %v1115
          %v1118 = vunpack.c.l.s4 1983009808
          %v1119 = vunpack.c.0.s8 %v1118
          %v1120 = vlaneseq
          %v1121 = vshrl.u32 %v1120, 7
          %v1122 = vsub.s32 %v1119, %v1121
          %v1123 = vrot.slane %v1109, %v1122
          %v1124 = vcombine.low %v1100, %v1106
          %v1125 = vcombine.high %v1100, %v1106
          %v1127 = vunpack.c.l.s4 1983009808
          %v1128 = vunpack.c.0.s8 %v1127
          %v1129 = vlaneseq
          %v1130 = vshrl.u32 %v1129, 7
          %v1131 = vsub.s32 %v1128, %v1130
          %v1132 = vrot.slane %v1124, %v1131
          %v1134 = vunpack.c.l.s4 1983009808
          %v1135 = vunpack.c.0.s8 %v1134
          %v1136 = vlaneseq
          %v1137 = vshrl.u32 %v1136, 7
          %v1138 = vsub.s32 %v1135, %v1137
          %v1139 = vrot.slane %v1125, %v1138
          %v1140 = vcombine.low %v1116, %v1132
          %v1141 = vcombine.high %v1116, %v1132
          %v1143 = vunpack.c.l.s4 1934713408
          %v1144 = vunpack.c.0.s8 %v1143
          %v1145 = vlaneseq
          %v1146 = vshrl.u32 %v1145, 7
          %v1147 = vsub.s32 %v1144, %v1146
          %v1148 = vrot.slane %v1140, %v1147
          %v1150 = vunpack.c.l.s4 1934713408
          %v1151 = vunpack.c.0.s8 %v1150
          %v1152 = vlaneseq
          %v1153 = vshrl.u32 %v1152, 7
          %v1154 = vsub.s32 %v1151, %v1153
          %v1155 = vrot.slane %v1141, %v1154
          %v1156 = vcombine.low %v1123, %v1139
          %v1157 = vcombine.high %v1123, %v1139
          %v1159 = vunpack.c.l.s4 1934713408
          %v1160 = vunpack.c.0.s8 %v1159
          %v1161 = vlaneseq
          %v1162 = vshrl.u32 %v1161, 7
          %v1163 = vsub.s32 %v1160, %v1162
          %v1164 = vrot.slane %v1156, %v1163
          %v1166 = vunpack.c.l.s4 1934713408
          %v1167 = vunpack.c.0.s8 %v1166
          %v1168 = vlaneseq
          %v1169 = vshrl.u32 %v1168, 7
          %v1170 = vsub.s32 %v1167, %v1169
          %v1171 = vrot.slane %v1157, %v1170
          %v1172 = vcombine.high %v1148, 0.0
          %v1173 = vcombine.high %v1155, 0.0
          %v1174 = vcombine.high %v1164, 0.0
          %v1175 = vcombine.high %v1171, 0.0
          %v1176 = vpack.c.bf16 %v1148, %v1148
          %v1177 = vpack.c.bf16 %v1172, %v1172
          %v1178 = vpack.c.bf16 %v1155, %v1155
          %v1179 = vpack.c.bf16 %v1173, %v1173
          %v1180 = vpack.c.bf16 %v1164, %v1164
          %v1181 = vpack.c.bf16 %v1174, %v1174
          %v1182 = vpack.c.bf16 %v1171, %v1171
          %v1183 = vpack.c.bf16 %v1175, %v1175
          %1185 = vrot.lane.b32.xlu0 %v1054, 96
          %v1186 = vpop.permute.xlu0 %1185
          %1188 = vrot.lane.b32.xlu0 %v1054, 64
          %v1189 = vpop.permute.xlu0 %1188
          %1191 = vrot.lane.b32.xlu0 %v1054, 32
          %v1192 = vpop.permute.xlu0 %1191
          %v1194 = vcombine.low %v1054, %v1189
          %v1195 = vcombine.high %v1054, %v1189
          %v1197 = vunpack.c.l.s4 1983009808
          %v1198 = vunpack.c.0.s8 %v1197
          %v1199 = vlaneseq
          %v1200 = vshrl.u32 %v1199, 7
          %v1201 = vsub.s32 %v1198, %v1200
          %v1202 = vrot.slane %v1194, %v1201
          %v1204 = vunpack.c.l.s4 1983009808
          %v1205 = vunpack.c.0.s8 %v1204
          %v1206 = vlaneseq
          %v1207 = vshrl.u32 %v1206, 7
          %v1208 = vsub.s32 %v1205, %v1207
          %v1209 = vrot.slane %v1195, %v1208
          %v1210 = vcombine.low %v1186, %v1192
          %v1211 = vcombine.high %v1186, %v1192
          %v1213 = vunpack.c.l.s4 1983009808
          %v1214 = vunpack.c.0.s8 %v1213
          %v1215 = vlaneseq
          %v1216 = vshrl.u32 %v1215, 7
          %v1217 = vsub.s32 %v1214, %v1216
          %v1218 = vrot.slane %v1210, %v1217
          %v1220 = vunpack.c.l.s4 1983009808
          %v1221 = vunpack.c.0.s8 %v1220
          %v1222 = vlaneseq
          %v1223 = vshrl.u32 %v1222, 7
          %v1224 = vsub.s32 %v1221, %v1223
          %v1225 = vrot.slane %v1211, %v1224
          %v1226 = vcombine.low %v1202, %v1218
          %v1227 = vcombine.high %v1202, %v1218
          %v1229 = vunpack.c.l.s4 1934713408
          %v1230 = vunpack.c.0.s8 %v1229
          %v1231 = vlaneseq
          %v1232 = vshrl.u32 %v1231, 7
          %v1233 = vsub.s32 %v1230, %v1232
          %v1234 = vrot.slane %v1226, %v1233
          %v1236 = vunpack.c.l.s4 1934713408
          %v1237 = vunpack.c.0.s8 %v1236
          %v1238 = vlaneseq
          %v1239 = vshrl.u32 %v1238, 7
          %v1240 = vsub.s32 %v1237, %v1239
          %v1241 = vrot.slane %v1227, %v1240
          %v1242 = vcombine.low %v1209, %v1225
          %v1243 = vcombine.high %v1209, %v1225
          %v1245 = vunpack.c.l.s4 1934713408
          %v1246 = vunpack.c.0.s8 %v1245
          %v1247 = vlaneseq
          %v1248 = vshrl.u32 %v1247, 7
          %v1249 = vsub.s32 %v1246, %v1248
          %v1250 = vrot.slane %v1242, %v1249
          %v1252 = vunpack.c.l.s4 1934713408
          %v1253 = vunpack.c.0.s8 %v1252
          %v1254 = vlaneseq
          %v1255 = vshrl.u32 %v1254, 7
          %v1256 = vsub.s32 %v1253, %v1255
          %v1257 = vrot.slane %v1243, %v1256
          %v1258 = vcombine.high %v1234, 0.0
          %v1259 = vcombine.high %v1241, 0.0
          %v1260 = vcombine.high %v1250, 0.0
          %v1261 = vcombine.high %v1257, 0.0
          %v1262 = vpack.c.bf16 %v1234, %v1234
          %v1263 = vpack.c.bf16 %v1258, %v1258
          %v1264 = vpack.c.bf16 %v1241, %v1241
          %v1265 = vpack.c.bf16 %v1259, %v1259
          %v1266 = vpack.c.bf16 %v1250, %v1250
          %v1267 = vpack.c.bf16 %v1260, %v1260
          %v1268 = vpack.c.bf16 %v1257, %v1257
          %v1269 = vpack.c.bf16 %v1261, %v1261
          %1271 = vrot.lane.b32.xlu0 %v1093, 96
          %v1272 = vpop.permute.xlu0 %1271
          %1274 = vrot.lane.b32.xlu0 %v1093, 64
          %v1275 = vpop.permute.xlu0 %1274
          %1277 = vrot.lane.b32.xlu0 %v1093, 32
          %v1278 = vpop.permute.xlu0 %1277
          %v1280 = vcombine.low %v1093, %v1275
          %v1281 = vcombine.high %v1093, %v1275
          %v1283 = vunpack.c.l.s4 1983009808
          %v1284 = vunpack.c.0.s8 %v1283
          %v1285 = vlaneseq
          %v1286 = vshrl.u32 %v1285, 7
          %v1287 = vsub.s32 %v1284, %v1286
          %v1288 = vrot.slane %v1280, %v1287
          %v1290 = vunpack.c.l.s4 1983009808
          %v1291 = vunpack.c.0.s8 %v1290
          %v1292 = vlaneseq
          %v1293 = vshrl.u32 %v1292, 7
          %v1294 = vsub.s32 %v1291, %v1293
          %v1295 = vrot.slane %v1281, %v1294
          %v1296 = vcombine.low %v1272, %v1278
          %v1297 = vcombine.high %v1272, %v1278
          %v1299 = vunpack.c.l.s4 1983009808
          %v1300 = vunpack.c.0.s8 %v1299
          %v1301 = vlaneseq
          %v1302 = vshrl.u32 %v1301, 7
          %v1303 = vsub.s32 %v1300, %v1302
          %v1304 = vrot.slane %v1296, %v1303
          %v1306 = vunpack.c.l.s4 1983009808
          %v1307 = vunpack.c.0.s8 %v1306
          %v1308 = vlaneseq
          %v1309 = vshrl.u32 %v1308, 7
          %v1310 = vsub.s32 %v1307, %v1309
          %v1311 = vrot.slane %v1297, %v1310
          %v1312 = vcombine.low %v1288, %v1304
          %v1313 = vcombine.high %v1288, %v1304
          %v1315 = vunpack.c.l.s4 1934713408
          %v1316 = vunpack.c.0.s8 %v1315
          %v1317 = vlaneseq
          %v1318 = vshrl.u32 %v1317, 7
          %v1319 = vsub.s32 %v1316, %v1318
          %v1320 = vrot.slane %v1312, %v1319
          %v1322 = vunpack.c.l.s4 1934713408
          %v1323 = vunpack.c.0.s8 %v1322
          %v1324 = vlaneseq
          %v1325 = vshrl.u32 %v1324, 7
          %v1326 = vsub.s32 %v1323, %v1325
          %v1327 = vrot.slane %v1313, %v1326
          %v1328 = vcombine.low %v1295, %v1311
          %v1329 = vcombine.high %v1295, %v1311
          %v1331 = vunpack.c.l.s4 1934713408
          %v1332 = vunpack.c.0.s8 %v1331
          %v1333 = vlaneseq
          %v1334 = vshrl.u32 %v1333, 7
          %v1335 = vsub.s32 %v1332, %v1334
          %v1336 = vrot.slane %v1328, %v1335
          %v1338 = vunpack.c.l.s4 1934713408
          %v1339 = vunpack.c.0.s8 %v1338
          %v1340 = vlaneseq
          %v1341 = vshrl.u32 %v1340, 7
          %v1342 = vsub.s32 %v1339, %v1341
          %v1343 = vrot.slane %v1329, %v1342
          %v1344 = vcombine.high %v1320, 0.0
          %v1345 = vcombine.high %v1327, 0.0
          %v1346 = vcombine.high %v1336, 0.0
          %v1347 = vcombine.high %v1343, 0.0
          %v1348 = vpack.c.bf16 %v1320, %v1320
          %v1349 = vpack.c.bf16 %v1344, %v1344
          %v1350 = vpack.c.bf16 %v1327, %v1327
          %v1351 = vpack.c.bf16 %v1345, %v1345
          %v1352 = vpack.c.bf16 %v1336, %v1336
          %v1353 = vpack.c.bf16 %v1346, %v1346
          %v1354 = vpack.c.bf16 %v1343, %v1343
          %v1355 = vpack.c.bf16 %v1347, %v1347
          %v1356 = vcombine.low %v1176, %v1180
          %v1358 = vunpack.c.l.s4 1983009808
          %v1359 = vunpack.c.0.s8 %v1358
          %v1360 = vlaneseq
          %v1361 = vshrl.u32 %v1360, 7
          %v1362 = vsub.s32 %v1359, %v1361
          %v1363 = vrot.slane %v1356, %v1362
          %v1364 = vcombine.low %v1178, %v1182
          %v1366 = vunpack.c.l.s4 1983009808
          %v1367 = vunpack.c.0.s8 %v1366
          %v1368 = vlaneseq
          %v1369 = vshrl.u32 %v1368, 7
          %v1370 = vsub.s32 %v1367, %v1369
          %v1371 = vrot.slane %v1364, %v1370
          %v1372 = vcombine.low %v1363, %v1371
          %v1374 = vunpack.c.l.s4 1934713408
          %v1375 = vunpack.c.0.s8 %v1374
          %v1376 = vlaneseq
          %v1377 = vshrl.u32 %v1376, 7
          %v1378 = vsub.s32 %v1375, %v1377
          %v1379 = vrot.slane %v1372, %v1378
          %v1380 = vcombine.high %v1379, 0
          %v1381 = vcombine.low %v1177, %v1181
          %v1383 = vunpack.c.l.s4 1983009808
          %v1384 = vunpack.c.0.s8 %v1383
          %v1385 = vlaneseq
          %v1386 = vshrl.u32 %v1385, 7
          %v1387 = vsub.s32 %v1384, %v1386
          %v1388 = vrot.slane %v1381, %v1387
          %v1389 = vcombine.low %v1179, %v1183
          %v1391 = vunpack.c.l.s4 1983009808
          %v1392 = vunpack.c.0.s8 %v1391
          %v1393 = vlaneseq
          %v1394 = vshrl.u32 %v1393, 7
          %v1395 = vsub.s32 %v1392, %v1394
          %v1396 = vrot.slane %v1389, %v1395
          %v1397 = vcombine.low %v1388, %v1396
          %v1399 = vunpack.c.l.s4 1934713408
          %v1400 = vunpack.c.0.s8 %v1399
          %v1401 = vlaneseq
          %v1402 = vshrl.u32 %v1401, 7
          %v1403 = vsub.s32 %v1400, %v1402
          %v1404 = vrot.slane %v1397, %v1403
          %v1405 = vcombine.high %v1404, 0
          %v1408 = vpack.i.b16 %v1404, %v1379
          %v1409 = vshrl.u32 %v1379, 16
          %v1410 = vshrl.u32 %v1404, 16
          %v1411 = vpack.i.b16 %v1410, %v1409
          %v1414 = vpack.i.b16 %v1405, %v1380
          %v1415 = vshrl.u32 %v1380, 16
          %v1416 = vshrl.u32 %v1405, 16
          %v1417 = vpack.i.b16 %v1416, %v1415
          %1418 = vxpose.xlu0.c.b16.start [1/8] %v1262, 128
          %1419 = vxpose.xlu0.c.b16.cont [2/8] 0, 128
          %1420 = vxpose.xlu0.c.b16.cont [3/8] 0, 128
          %1421 = vxpose.xlu0.c.b16.cont [4/8] 0, 128
          %1422 = vxpose.xlu0.c.b16.cont [5/8] 0, 128
          %1423 = vxpose.xlu0.c.b16.cont [6/8] 0, 128
          %1424 = vxpose.xlu0.c.b16.cont [7/8] 0, 128
          %1425 = vxpose.xlu0.c.b16.end [8/8] 0, 128
          %v1426 = vpop.trf.xlu0
          %v1427 = vpop.trf.xlu0
          %v1428 = vpop.trf.xlu0
          %v1429 = vpop.trf.xlu0
          %v1430 = vpop.trf.xlu0
          %v1431 = vpop.trf.xlu0
          %v1432 = vpop.trf.xlu0
          %v1433 = vpop.trf.xlu0
          %1434 = vxpose.xlu0.c.b16.start [1/8] %v1263, 128
          %1435 = vxpose.xlu0.c.b16.cont [2/8] 0, 128
          %1436 = vxpose.xlu0.c.b16.cont [3/8] 0, 128
          %1437 = vxpose.xlu0.c.b16.cont [4/8] 0, 128
          %1438 = vxpose.xlu0.c.b16.cont [5/8] 0, 128
          %1439 = vxpose.xlu0.c.b16.cont [6/8] 0, 128
          %1440 = vxpose.xlu0.c.b16.cont [7/8] 0, 128
          %1441 = vxpose.xlu0.c.b16.end [8/8] 0, 128
          %v1442 = vpop.trf.xlu0
          %v1443 = vpop.trf.xlu0
          %v1444 = vpop.trf.xlu0
          %v1445 = vpop.trf.xlu0
          %v1446 = vpop.trf.xlu0
          %v1447 = vpop.trf.xlu0
          %v1448 = vpop.trf.xlu0
          %v1449 = vpop.trf.xlu0
          %1450 = vxpose.xlu0.c.b16.start [1/8] %v1264, 128
          %1451 = vxpose.xlu0.c.b16.cont [2/8] 0, 128
          %1452 = vxpose.xlu0.c.b16.cont [3/8] 0, 128
          %1453 = vxpose.xlu0.c.b16.cont [4/8] 0, 128
          %1454 = vxpose.xlu0.c.b16.cont [5/8] 0, 128
          %1455 = vxpose.xlu0.c.b16.cont [6/8] 0, 128
          %1456 = vxpose.xlu0.c.b16.cont [7/8] 0, 128
          %1457 = vxpose.xlu0.c.b16.end [8/8] 0, 128
          %v1458 = vpop.trf.xlu0
          %v1459 = vpop.trf.xlu0
          %v1460 = vpop.trf.xlu0
          %v1461 = vpop.trf.xlu0
          %v1462 = vpop.trf.xlu0
          %v1463 = vpop.trf.xlu0
          %v1464 = vpop.trf.xlu0
          %v1465 = vpop.trf.xlu0
          %1466 = vxpose.xlu0.c.b16.start [1/8] %v1265, 128
          %1467 = vxpose.xlu0.c.b16.cont [2/8] 0, 128
          %1468 = vxpose.xlu0.c.b16.cont [3/8] 0, 128
          %1469 = vxpose.xlu0.c.b16.cont [4/8] 0, 128
          %1470 = vxpose.xlu0.c.b16.cont [5/8] 0, 128
          %1471 = vxpose.xlu0.c.b16.cont [6/8] 0, 128
          %1472 = vxpose.xlu0.c.b16.cont [7/8] 0, 128
          %1473 = vxpose.xlu0.c.b16.end [8/8] 0, 128
          %v1474 = vpop.trf.xlu0
          %v1475 = vpop.trf.xlu0
          %v1476 = vpop.trf.xlu0
          %v1477 = vpop.trf.xlu0
          %v1478 = vpop.trf.xlu0
          %v1479 = vpop.trf.xlu0
          %v1480 = vpop.trf.xlu0
          %v1481 = vpop.trf.xlu0
          %1482 = vxpose.xlu0.c.b16.start [1/8] %v1266, 128
          %1483 = vxpose.xlu0.c.b16.cont [2/8] 0, 128
          %1484 = vxpose.xlu0.c.b16.cont [3/8] 0, 128
          %1485 = vxpose.xlu0.c.b16.cont [4/8] 0, 128
          %1486 = vxpose.xlu0.c.b16.cont [5/8] 0, 128
          %1487 = vxpose.xlu0.c.b16.cont [6/8] 0, 128
          %1488 = vxpose.xlu0.c.b16.cont [7/8] 0, 128
          %1489 = vxpose.xlu0.c.b16.end [8/8] 0, 128
          %v1490 = vpop.trf.xlu0
          %v1491 = vpop.trf.xlu0
          %v1492 = vpop.trf.xlu0
          %v1493 = vpop.trf.xlu0
          %v1494 = vpop.trf.xlu0
          %v1495 = vpop.trf.xlu0
          %v1496 = vpop.trf.xlu0
          %v1497 = vpop.trf.xlu0
          %1498 = vxpose.xlu0.c.b16.start [1/8] %v1267, 128
          %1499 = vxpose.xlu0.c.b16.cont [2/8] 0, 128
          %1500 = vxpose.xlu0.c.b16.cont [3/8] 0, 128
          %1501 = vxpose.xlu0.c.b16.cont [4/8] 0, 128
          %1502 = vxpose.xlu0.c.b16.cont [5/8] 0, 128
          %1503 = vxpose.xlu0.c.b16.cont [6/8] 0, 128
          %1504 = vxpose.xlu0.c.b16.cont [7/8] 0, 128
          %1505 = vxpose.xlu0.c.b16.end [8/8] 0, 128
          %v1506 = vpop.trf.xlu0
          %v1507 = vpop.trf.xlu0
          %v1508 = vpop.trf.xlu0
          %v1509 = vpop.trf.xlu0
          %v1510 = vpop.trf.xlu0
          %v1511 = vpop.trf.xlu0
          %v1512 = vpop.trf.xlu0
          %v1513 = vpop.trf.xlu0
          %1514 = vxpose.xlu0.c.b16.start [1/8] %v1268, 128
          %1515 = vxpose.xlu0.c.b16.cont [2/8] 0, 128
          %1516 = vxpose.xlu0.c.b16.cont [3/8] 0, 128
          %1517 = vxpose.xlu0.c.b16.cont [4/8] 0, 128
          %1518 = vxpose.xlu0.c.b16.cont [5/8] 0, 128
          %1519 = vxpose.xlu0.c.b16.cont [6/8] 0, 128
          %1520 = vxpose.xlu0.c.b16.cont [7/8] 0, 128
          %1521 = vxpose.xlu0.c.b16.end [8/8] 0, 128
          %v1522 = vpop.trf.xlu0
          %v1523 = vpop.trf.xlu0
          %v1524 = vpop.trf.xlu0
          %v1525 = vpop.trf.xlu0
          %v1526 = vpop.trf.xlu0
          %v1527 = vpop.trf.xlu0
          %v1528 = vpop.trf.xlu0
          %v1529 = vpop.trf.xlu0
          %1530 = vxpose.xlu0.c.b16.start [1/8] %v1269, 128
          %1531 = vxpose.xlu0.c.b16.cont [2/8] 0, 128
          %1532 = vxpose.xlu0.c.b16.cont [3/8] 0, 128
          %1533 = vxpose.xlu0.c.b16.cont [4/8] 0, 128
          %1534 = vxpose.xlu0.c.b16.cont [5/8] 0, 128
          %1535 = vxpose.xlu0.c.b16.cont [6/8] 0, 128
          %1536 = vxpose.xlu0.c.b16.cont [7/8] 0, 128
          %1537 = vxpose.xlu0.c.b16.end [8/8] 0, 128
          %v1538 = vpop.trf.xlu0
          %v1539 = vpop.trf.xlu0
          %v1540 = vpop.trf.xlu0
          %v1541 = vpop.trf.xlu0
          %v1542 = vpop.trf.xlu0
          %v1543 = vpop.trf.xlu0
          %v1544 = vpop.trf.xlu0
          %v1545 = vpop.trf.xlu0
          %v1548 = vpack.i.b16 %v1442, %v1426
          %v1550 = vshrl.u32 %v1426, 16
          %v1551 = vshrl.u32 %v1442, 16
          %v1552 = vpack.i.b16 %v1551, %v1550
          %v1556 = vpack.i.b16 %v1474, %v1458
          %v1558 = vshrl.u32 %v1458, 16
          %v1559 = vshrl.u32 %v1474, 16
          %v1560 = vpack.i.b16 %v1559, %v1558
          %v1564 = vpack.i.b16 %v1506, %v1490
          %v1566 = vshrl.u32 %v1490, 16
          %v1567 = vshrl.u32 %v1506, 16
          %v1568 = vpack.i.b16 %v1567, %v1566
          %v1572 = vpack.i.b16 %v1538, %v1522
          %v1574 = vshrl.u32 %v1522, 16
          %v1575 = vshrl.u32 %v1538, 16
          %v1576 = vpack.i.b16 %v1575, %v1574
          %v1580 = vpack.i.b16 %v1443, %v1427
          %v1582 = vshrl.u32 %v1427, 16
          %v1583 = vshrl.u32 %v1443, 16
          %v1584 = vpack.i.b16 %v1583, %v1582
          %v1588 = vpack.i.b16 %v1475, %v1459
          %v1590 = vshrl.u32 %v1459, 16
          %v1591 = vshrl.u32 %v1475, 16
          %v1592 = vpack.i.b16 %v1591, %v1590
          %v1596 = vpack.i.b16 %v1507, %v1491
          %v1598 = vshrl.u32 %v1491, 16
          %v1599 = vshrl.u32 %v1507, 16
          %v1600 = vpack.i.b16 %v1599, %v1598
          %v1604 = vpack.i.b16 %v1539, %v1523
          %v1606 = vshrl.u32 %v1523, 16
          %v1607 = vshrl.u32 %v1539, 16
          %v1608 = vpack.i.b16 %v1607, %v1606
          %v1610 = vcombine.low %v1548, %v1564
          %v1611 = vcombine.high %v1548, %v1564
          %v1613 = vunpack.c.l.s4 1983009808
          %v1614 = vunpack.c.0.s8 %v1613
          %v1615 = vlaneseq
          %v1616 = vshrl.u32 %v1615, 7
          %v1617 = vsub.s32 %v1614, %v1616
          %v1618 = vrot.slane %v1610, %v1617
          %v1620 = vunpack.c.l.s4 1983009808
          %v1621 = vunpack.c.0.s8 %v1620
          %v1622 = vlaneseq
          %v1623 = vshrl.u32 %v1622, 7
          %v1624 = vsub.s32 %v1621, %v1623
          %v1625 = vrot.slane %v1611, %v1624
          %v1626 = vcombine.low %v1556, %v1572
          %v1627 = vcombine.high %v1556, %v1572
          %v1629 = vunpack.c.l.s4 1983009808
          %v1630 = vunpack.c.0.s8 %v1629
          %v1631 = vlaneseq
          %v1632 = vshrl.u32 %v1631, 7
          %v1633 = vsub.s32 %v1630, %v1632
          %v1634 = vrot.slane %v1626, %v1633
          %v1636 = vunpack.c.l.s4 1983009808
          %v1637 = vunpack.c.0.s8 %v1636
          %v1638 = vlaneseq
          %v1639 = vshrl.u32 %v1638, 7
          %v1640 = vsub.s32 %v1637, %v1639
          %v1641 = vrot.slane %v1627, %v1640
          %v1642 = vcombine.low %v1618, %v1634
          %v1643 = vcombine.high %v1618, %v1634
          %v1645 = vunpack.c.l.s4 1934713408
          %v1646 = vunpack.c.0.s8 %v1645
          %v1647 = vlaneseq
          %v1648 = vshrl.u32 %v1647, 7
          %v1649 = vsub.s32 %v1646, %v1648
          %v1650 = vrot.slane %v1642, %v1649
          %v1652 = vunpack.c.l.s4 1934713408
          %v1653 = vunpack.c.0.s8 %v1652
          %v1654 = vlaneseq
          %v1655 = vshrl.u32 %v1654, 7
          %v1656 = vsub.s32 %v1653, %v1655
          %v1657 = vrot.slane %v1643, %v1656
          %v1658 = vcombine.low %v1625, %v1641
          %v1659 = vcombine.high %v1625, %v1641
          %v1661 = vunpack.c.l.s4 1934713408
          %v1662 = vunpack.c.0.s8 %v1661
          %v1663 = vlaneseq
          %v1664 = vshrl.u32 %v1663, 7
          %v1665 = vsub.s32 %v1662, %v1664
          %v1666 = vrot.slane %v1658, %v1665
          %v1668 = vunpack.c.l.s4 1934713408
          %v1669 = vunpack.c.0.s8 %v1668
          %v1670 = vlaneseq
          %v1671 = vshrl.u32 %v1670, 7
          %v1672 = vsub.s32 %v1669, %v1671
          %v1673 = vrot.slane %v1659, %v1672
          %v1674 = vcombine.high %v1650, 0
          %v1675 = vcombine.high %v1657, 0
          %v1676 = vcombine.high %v1666, 0
          %v1677 = vcombine.high %v1673, 0
          %v1678 = vcombine.low %v1552, %v1568
          %v1679 = vcombine.high %v1552, %v1568
          %v1681 = vunpack.c.l.s4 1983009808
          %v1682 = vunpack.c.0.s8 %v1681
          %v1683 = vlaneseq
          %v1684 = vshrl.u32 %v1683, 7
          %v1685 = vsub.s32 %v1682, %v1684
          %v1686 = vrot.slane %v1678, %v1685
          %v1688 = vunpack.c.l.s4 1983009808
          %v1689 = vunpack.c.0.s8 %v1688
          %v1690 = vlaneseq
          %v1691 = vshrl.u32 %v1690, 7
          %v1692 = vsub.s32 %v1689, %v1691
          %v1693 = vrot.slane %v1679, %v1692
          %v1694 = vcombine.low %v1560, %v1576
          %v1695 = vcombine.high %v1560, %v1576
          %v1697 = vunpack.c.l.s4 1983009808
          %v1698 = vunpack.c.0.s8 %v1697
          %v1699 = vlaneseq
          %v1700 = vshrl.u32 %v1699, 7
          %v1701 = vsub.s32 %v1698, %v1700
          %v1702 = vrot.slane %v1694, %v1701
          %v1704 = vunpack.c.l.s4 1983009808
          %v1705 = vunpack.c.0.s8 %v1704
          %v1706 = vlaneseq
          %v1707 = vshrl.u32 %v1706, 7
          %v1708 = vsub.s32 %v1705, %v1707
          %v1709 = vrot.slane %v1695, %v1708
          %v1710 = vcombine.low %v1686, %v1702
          %v1711 = vcombine.high %v1686, %v1702
          %v1713 = vunpack.c.l.s4 1934713408
          %v1714 = vunpack.c.0.s8 %v1713
          %v1715 = vlaneseq
          %v1716 = vshrl.u32 %v1715, 7
          %v1717 = vsub.s32 %v1714, %v1716
          %v1718 = vrot.slane %v1710, %v1717
          %v1720 = vunpack.c.l.s4 1934713408
          %v1721 = vunpack.c.0.s8 %v1720
          %v1722 = vlaneseq
          %v1723 = vshrl.u32 %v1722, 7
          %v1724 = vsub.s32 %v1721, %v1723
          %v1725 = vrot.slane %v1711, %v1724
          %v1726 = vcombine.low %v1693, %v1709
          %v1727 = vcombine.high %v1693, %v1709
          %v1729 = vunpack.c.l.s4 1934713408
          %v1730 = vunpack.c.0.s8 %v1729
          %v1731 = vlaneseq
          %v1732 = vshrl.u32 %v1731, 7
          %v1733 = vsub.s32 %v1730, %v1732
          %v1734 = vrot.slane %v1726, %v1733
          %v1736 = vunpack.c.l.s4 1934713408
          %v1737 = vunpack.c.0.s8 %v1736
          %v1738 = vlaneseq
          %v1739 = vshrl.u32 %v1738, 7
          %v1740 = vsub.s32 %v1737, %v1739
          %v1741 = vrot.slane %v1727, %v1740
          %v1742 = vcombine.high %v1718, 0
          %v1743 = vcombine.high %v1725, 0
          %v1744 = vcombine.high %v1734, 0
          %v1745 = vcombine.high %v1741, 0
          %v1746 = vcombine.low %v1580, %v1596
          %v1747 = vcombine.high %v1580, %v1596
          %v1749 = vunpack.c.l.s4 1983009808
          %v1750 = vunpack.c.0.s8 %v1749
          %v1751 = vlaneseq
          %v1752 = vshrl.u32 %v1751, 7
          %v1753 = vsub.s32 %v1750, %v1752
          %v1754 = vrot.slane %v1746, %v1753
          %v1756 = vunpack.c.l.s4 1983009808
          %v1757 = vunpack.c.0.s8 %v1756
          %v1758 = vlaneseq
          %v1759 = vshrl.u32 %v1758, 7
          %v1760 = vsub.s32 %v1757, %v1759
          %v1761 = vrot.slane %v1747, %v1760
          %v1762 = vcombine.low %v1588, %v1604
          %v1763 = vcombine.high %v1588, %v1604
          %v1765 = vunpack.c.l.s4 1983009808
          %v1766 = vunpack.c.0.s8 %v1765
          %v1767 = vlaneseq
          %v1768 = vshrl.u32 %v1767, 7
          %v1769 = vsub.s32 %v1766, %v1768
          %v1770 = vrot.slane %v1762, %v1769
          %v1772 = vunpack.c.l.s4 1983009808
          %v1773 = vunpack.c.0.s8 %v1772
          %v1774 = vlaneseq
          %v1775 = vshrl.u32 %v1774, 7
          %v1776 = vsub.s32 %v1773, %v1775
          %v1777 = vrot.slane %v1763, %v1776
          %v1778 = vcombine.low %v1754, %v1770
          %v1779 = vcombine.high %v1754, %v1770
          %v1781 = vunpack.c.l.s4 1934713408
          %v1782 = vunpack.c.0.s8 %v1781
          %v1783 = vlaneseq
          %v1784 = vshrl.u32 %v1783, 7
          %v1785 = vsub.s32 %v1782, %v1784
          %v1786 = vrot.slane %v1778, %v1785
          %v1788 = vunpack.c.l.s4 1934713408
          %v1789 = vunpack.c.0.s8 %v1788
          %v1790 = vlaneseq
          %v1791 = vshrl.u32 %v1790, 7
          %v1792 = vsub.s32 %v1789, %v1791
          %v1793 = vrot.slane %v1779, %v1792
          %v1794 = vcombine.low %v1761, %v1777
          %v1795 = vcombine.high %v1761, %v1777
          %v1797 = vunpack.c.l.s4 1934713408
          %v1798 = vunpack.c.0.s8 %v1797
          %v1799 = vlaneseq
          %v1800 = vshrl.u32 %v1799, 7
          %v1801 = vsub.s32 %v1798, %v1800
          %v1802 = vrot.slane %v1794, %v1801
          %v1804 = vunpack.c.l.s4 1934713408
          %v1805 = vunpack.c.0.s8 %v1804
          %v1806 = vlaneseq
          %v1807 = vshrl.u32 %v1806, 7
          %v1808 = vsub.s32 %v1805, %v1807
          %v1809 = vrot.slane %v1795, %v1808
          %v1810 = vcombine.high %v1786, 0
          %v1811 = vcombine.high %v1793, 0
          %v1812 = vcombine.high %v1802, 0
          %v1813 = vcombine.high %v1809, 0
          %v1814 = vcombine.low %v1584, %v1600
          %v1815 = vcombine.high %v1584, %v1600
          %v1817 = vunpack.c.l.s4 1983009808
          %v1818 = vunpack.c.0.s8 %v1817
          %v1819 = vlaneseq
          %v1820 = vshrl.u32 %v1819, 7
          %v1821 = vsub.s32 %v1818, %v1820
          %v1822 = vrot.slane %v1814, %v1821
          %v1824 = vunpack.c.l.s4 1983009808
          %v1825 = vunpack.c.0.s8 %v1824
          %v1826 = vlaneseq
          %v1827 = vshrl.u32 %v1826, 7
          %v1828 = vsub.s32 %v1825, %v1827
          %v1829 = vrot.slane %v1815, %v1828
          %v1830 = vcombine.low %v1592, %v1608
          %v1831 = vcombine.high %v1592, %v1608
          %v1833 = vunpack.c.l.s4 1983009808
          %v1834 = vunpack.c.0.s8 %v1833
          %v1835 = vlaneseq
          %v1836 = vshrl.u32 %v1835, 7
          %v1837 = vsub.s32 %v1834, %v1836
          %v1838 = vrot.slane %v1830, %v1837
          %v1840 = vunpack.c.l.s4 1983009808
          %v1841 = vunpack.c.0.s8 %v1840
          %v1842 = vlaneseq
          %v1843 = vshrl.u32 %v1842, 7
          %v1844 = vsub.s32 %v1841, %v1843
          %v1845 = vrot.slane %v1831, %v1844
          %v1846 = vcombine.low %v1822, %v1838
          %v1847 = vcombine.high %v1822, %v1838
          %v1849 = vunpack.c.l.s4 1934713408
          %v1850 = vunpack.c.0.s8 %v1849
          %v1851 = vlaneseq
          %v1852 = vshrl.u32 %v1851, 7
          %v1853 = vsub.s32 %v1850, %v1852
          %v1854 = vrot.slane %v1846, %v1853
          %v1856 = vunpack.c.l.s4 1934713408
          %v1857 = vunpack.c.0.s8 %v1856
          %v1858 = vlaneseq
          %v1859 = vshrl.u32 %v1858, 7
          %v1860 = vsub.s32 %v1857, %v1859
          %v1861 = vrot.slane %v1847, %v1860
          %v1862 = vcombine.low %v1829, %v1845
          %v1863 = vcombine.high %v1829, %v1845
          %v1865 = vunpack.c.l.s4 1934713408
          %v1866 = vunpack.c.0.s8 %v1865
          %v1867 = vlaneseq
          %v1868 = vshrl.u32 %v1867, 7
          %v1869 = vsub.s32 %v1866, %v1868
          %v1870 = vrot.slane %v1862, %v1869
          %v1872 = vunpack.c.l.s4 1934713408
          %v1873 = vunpack.c.0.s8 %v1872
          %v1874 = vlaneseq
          %v1875 = vshrl.u32 %v1874, 7
          %v1876 = vsub.s32 %v1873, %v1875
          %v1877 = vrot.slane %v1863, %v1876
          %v1878 = vcombine.high %v1854, 0
          %v1879 = vcombine.high %v1861, 0
          %v1880 = vcombine.high %v1870, 0
          %v1881 = vcombine.high %v1877, 0
          %1882 = vxpose.xlu0.c.b16.start [1/8] %v1650, 128
          %1883 = vxpose.xlu0.c.b16.cont [2/8] 0, 128
          %1884 = vxpose.xlu0.c.b16.cont [3/8] 0, 128
          %1885 = vxpose.xlu0.c.b16.cont [4/8] 0, 128
          %1886 = vxpose.xlu0.c.b16.cont [5/8] 0, 128
          %1887 = vxpose.xlu0.c.b16.cont [6/8] 0, 128
          %1888 = vxpose.xlu0.c.b16.cont [7/8] 0, 128
          %1889 = vxpose.xlu0.c.b16.end [8/8] 0, 128
          %v1890 = vpop.trf.xlu0
          %v1891 = vpop.trf.xlu0
          %v1892 = vpop.trf.xlu0
          %v1893 = vpop.trf.xlu0
          %v1894 = vpop.trf.xlu0
          %v1895 = vpop.trf.xlu0
          %v1896 = vpop.trf.xlu0
          %v1897 = vpop.trf.xlu0
          %1898 = vxpose.xlu0.c.b16.start [1/8] %v1718, 128
          %1899 = vxpose.xlu0.c.b16.cont [2/8] 0, 128
          %1900 = vxpose.xlu0.c.b16.cont [3/8] 0, 128
          %1901 = vxpose.xlu0.c.b16.cont [4/8] 0, 128
          %1902 = vxpose.xlu0.c.b16.cont [5/8] 0, 128
          %1903 = vxpose.xlu0.c.b16.cont [6/8] 0, 128
          %1904 = vxpose.xlu0.c.b16.cont [7/8] 0, 128
          %1905 = vxpose.xlu0.c.b16.end [8/8] 0, 128
          %v1906 = vpop.trf.xlu0
          %v1907 = vpop.trf.xlu0
          %v1908 = vpop.trf.xlu0
          %v1909 = vpop.trf.xlu0
          %v1910 = vpop.trf.xlu0
          %v1911 = vpop.trf.xlu0
          %v1912 = vpop.trf.xlu0
          %v1913 = vpop.trf.xlu0
          %1914 = vxpose.xlu0.c.b16.start [1/8] %v1674, 128
          %1915 = vxpose.xlu0.c.b16.cont [2/8] 0, 128
          %1916 = vxpose.xlu0.c.b16.cont [3/8] 0, 128
          %1917 = vxpose.xlu0.c.b16.cont [4/8] 0, 128
          %1918 = vxpose.xlu0.c.b16.cont [5/8] 0, 128
          %1919 = vxpose.xlu0.c.b16.cont [6/8] 0, 128
          %1920 = vxpose.xlu0.c.b16.cont [7/8] 0, 128
          %1921 = vxpose.xlu0.c.b16.end [8/8] 0, 128
          %v1922 = vpop.trf.xlu0
          %v1923 = vpop.trf.xlu0
          %v1924 = vpop.trf.xlu0
          %v1925 = vpop.trf.xlu0
          %v1926 = vpop.trf.xlu0
          %v1927 = vpop.trf.xlu0
          %v1928 = vpop.trf.xlu0
          %v1929 = vpop.trf.xlu0
          %1930 = vxpose.xlu0.c.b16.start [1/8] %v1742, 128
          %1931 = vxpose.xlu0.c.b16.cont [2/8] 0, 128
          %1932 = vxpose.xlu0.c.b16.cont [3/8] 0, 128
          %1933 = vxpose.xlu0.c.b16.cont [4/8] 0, 128
          %1934 = vxpose.xlu0.c.b16.cont [5/8] 0, 128
          %1935 = vxpose.xlu0.c.b16.cont [6/8] 0, 128
          %1936 = vxpose.xlu0.c.b16.cont [7/8] 0, 128
          %1937 = vxpose.xlu0.c.b16.end [8/8] 0, 128
          %v1938 = vpop.trf.xlu0
          %v1939 = vpop.trf.xlu0
          %v1940 = vpop.trf.xlu0
          %v1941 = vpop.trf.xlu0
          %v1942 = vpop.trf.xlu0
          %v1943 = vpop.trf.xlu0
          %v1944 = vpop.trf.xlu0
          %v1945 = vpop.trf.xlu0
          %1946 = vxpose.xlu0.c.b16.start [1/8] %v1657, 128
          %1947 = vxpose.xlu0.c.b16.cont [2/8] 0, 128
          %1948 = vxpose.xlu0.c.b16.cont [3/8] 0, 128
          %1949 = vxpose.xlu0.c.b16.cont [4/8] 0, 128
          %1950 = vxpose.xlu0.c.b16.cont [5/8] 0, 128
          %1951 = vxpose.xlu0.c.b16.cont [6/8] 0, 128
          %1952 = vxpose.xlu0.c.b16.cont [7/8] 0, 128
          %1953 = vxpose.xlu0.c.b16.end [8/8] 0, 128
          %v1954 = vpop.trf.xlu0
          %v1955 = vpop.trf.xlu0
          %v1956 = vpop.trf.xlu0
          %v1957 = vpop.trf.xlu0
          %v1958 = vpop.trf.xlu0
          %v1959 = vpop.trf.xlu0
          %v1960 = vpop.trf.xlu0
          %v1961 = vpop.trf.xlu0
          %1962 = vxpose.xlu0.c.b16.start [1/8] %v1725, 128
          %1963 = vxpose.xlu0.c.b16.cont [2/8] 0, 128
          %1964 = vxpose.xlu0.c.b16.cont [3/8] 0, 128
          %1965 = vxpose.xlu0.c.b16.cont [4/8] 0, 128
          %1966 = vxpose.xlu0.c.b16.cont [5/8] 0, 128
          %1967 = vxpose.xlu0.c.b16.cont [6/8] 0, 128
          %1968 = vxpose.xlu0.c.b16.cont [7/8] 0, 128
          %1969 = vxpose.xlu0.c.b16.end [8/8] 0, 128
          %v1970 = vpop.trf.xlu0
          %v1971 = vpop.trf.xlu0
          %v1972 = vpop.trf.xlu0
          %v1973 = vpop.trf.xlu0
          %v1974 = vpop.trf.xlu0
          %v1975 = vpop.trf.xlu0
          %v1976 = vpop.trf.xlu0
          %v1977 = vpop.trf.xlu0
          %1978 = vxpose.xlu0.c.b16.start [1/8] %v1675, 128
          %1979 = vxpose.xlu0.c.b16.cont [2/8] 0, 128
          %1980 = vxpose.xlu0.c.b16.cont [3/8] 0, 128
          %1981 = vxpose.xlu0.c.b16.cont [4/8] 0, 128
          %1982 = vxpose.xlu0.c.b16.cont [5/8] 0, 128
          %1983 = vxpose.xlu0.c.b16.cont [6/8] 0, 128
          %1984 = vxpose.xlu0.c.b16.cont [7/8] 0, 128
          %1985 = vxpose.xlu0.c.b16.end [8/8] 0, 128
          %v1986 = vpop.trf.xlu0
          %v1987 = vpop.trf.xlu0
          %v1988 = vpop.trf.xlu0
          %v1989 = vpop.trf.xlu0
          %v1990 = vpop.trf.xlu0
          %v1991 = vpop.trf.xlu0
          %v1992 = vpop.trf.xlu0
          %v1993 = vpop.trf.xlu0
          %1994 = vxpose.xlu0.c.b16.start [1/8] %v1743, 128
          %1995 = vxpose.xlu0.c.b16.cont [2/8] 0, 128
          %1996 = vxpose.xlu0.c.b16.cont [3/8] 0, 128
          %1997 = vxpose.xlu0.c.b16.cont [4/8] 0, 128
          %1998 = vxpose.xlu0.c.b16.cont [5/8] 0, 128
          %1999 = vxpose.xlu0.c.b16.cont [6/8] 0, 128
          %2000 = vxpose.xlu0.c.b16.cont [7/8] 0, 128
          %2001 = vxpose.xlu0.c.b16.end [8/8] 0, 128
          %v2002 = vpop.trf.xlu0
          %v2003 = vpop.trf.xlu0
          %v2004 = vpop.trf.xlu0
          %v2005 = vpop.trf.xlu0
          %v2006 = vpop.trf.xlu0
          %v2007 = vpop.trf.xlu0
          %v2008 = vpop.trf.xlu0
          %v2009 = vpop.trf.xlu0
          %2010 = vxpose.xlu0.c.b16.start [1/8] %v1666, 128
          %2011 = vxpose.xlu0.c.b16.cont [2/8] 0, 128
          %2012 = vxpose.xlu0.c.b16.cont [3/8] 0, 128
          %2013 = vxpose.xlu0.c.b16.cont [4/8] 0, 128
          %2014 = vxpose.xlu0.c.b16.cont [5/8] 0, 128
          %2015 = vxpose.xlu0.c.b16.cont [6/8] 0, 128
          %2016 = vxpose.xlu0.c.b16.cont [7/8] 0, 128
          %2017 = vxpose.xlu0.c.b16.end [8/8] 0, 128
          %v2018 = vpop.trf.xlu0
          %v2019 = vpop.trf.xlu0
          %v2020 = vpop.trf.xlu0
          %v2021 = vpop.trf.xlu0
          %v2022 = vpop.trf.xlu0
          %v2023 = vpop.trf.xlu0
          %v2024 = vpop.trf.xlu0
          %v2025 = vpop.trf.xlu0
          %2026 = vxpose.xlu0.c.b16.start [1/8] %v1734, 128
          %2027 = vxpose.xlu0.c.b16.cont [2/8] 0, 128
          %2028 = vxpose.xlu0.c.b16.cont [3/8] 0, 128
          %2029 = vxpose.xlu0.c.b16.cont [4/8] 0, 128
          %2030 = vxpose.xlu0.c.b16.cont [5/8] 0, 128
          %2031 = vxpose.xlu0.c.b16.cont [6/8] 0, 128
          %2032 = vxpose.xlu0.c.b16.cont [7/8] 0, 128
          %2033 = vxpose.xlu0.c.b16.end [8/8] 0, 128
          %v2034 = vpop.trf.xlu0
          %v2035 = vpop.trf.xlu0
          %v2036 = vpop.trf.xlu0
          %v2037 = vpop.trf.xlu0
          %v2038 = vpop.trf.xlu0
          %v2039 = vpop.trf.xlu0
          %v2040 = vpop.trf.xlu0
          %v2041 = vpop.trf.xlu0
          %2042 = vxpose.xlu0.c.b16.start [1/8] %v1676, 128
          %2043 = vxpose.xlu0.c.b16.cont [2/8] 0, 128
          %2044 = vxpose.xlu0.c.b16.cont [3/8] 0, 128
          %2045 = vxpose.xlu0.c.b16.cont [4/8] 0, 128
          %2046 = vxpose.xlu0.c.b16.cont [5/8] 0, 128
          %2047 = vxpose.xlu0.c.b16.cont [6/8] 0, 128
          %2048 = vxpose.xlu0.c.b16.cont [7/8] 0, 128
          %2049 = vxpose.xlu0.c.b16.end [8/8] 0, 128
          %v2050 = vpop.trf.xlu0
          %v2051 = vpop.trf.xlu0
          %v2052 = vpop.trf.xlu0
          %v2053 = vpop.trf.xlu0
          %v2054 = vpop.trf.xlu0
          %v2055 = vpop.trf.xlu0
          %v2056 = vpop.trf.xlu0
          %v2057 = vpop.trf.xlu0
          %2058 = vxpose.xlu0.c.b16.start [1/8] %v1744, 128
          %2059 = vxpose.xlu0.c.b16.cont [2/8] 0, 128
          %2060 = vxpose.xlu0.c.b16.cont [3/8] 0, 128
          %2061 = vxpose.xlu0.c.b16.cont [4/8] 0, 128
          %2062 = vxpose.xlu0.c.b16.cont [5/8] 0, 128
          %2063 = vxpose.xlu0.c.b16.cont [6/8] 0, 128
          %2064 = vxpose.xlu0.c.b16.cont [7/8] 0, 128
          %2065 = vxpose.xlu0.c.b16.end [8/8] 0, 128
          %v2066 = vpop.trf.xlu0
          %v2067 = vpop.trf.xlu0
          %v2068 = vpop.trf.xlu0
          %v2069 = vpop.trf.xlu0
          %v2070 = vpop.trf.xlu0
          %v2071 = vpop.trf.xlu0
          %v2072 = vpop.trf.xlu0
          %v2073 = vpop.trf.xlu0
          %2074 = vxpose.xlu0.c.b16.start [1/8] %v1673, 128
          %2075 = vxpose.xlu0.c.b16.cont [2/8] 0, 128
          %2076 = vxpose.xlu0.c.b16.cont [3/8] 0, 128
          %2077 = vxpose.xlu0.c.b16.cont [4/8] 0, 128
          %2078 = vxpose.xlu0.c.b16.cont [5/8] 0, 128
          %2079 = vxpose.xlu0.c.b16.cont [6/8] 0, 128
          %2080 = vxpose.xlu0.c.b16.cont [7/8] 0, 128
          %2081 = vxpose.xlu0.c.b16.end [8/8] 0, 128
          %v2082 = vpop.trf.xlu0
          %v2083 = vpop.trf.xlu0
          %v2084 = vpop.trf.xlu0
          %v2085 = vpop.trf.xlu0
          %v2086 = vpop.trf.xlu0
          %v2087 = vpop.trf.xlu0
          %v2088 = vpop.trf.xlu0
          %v2089 = vpop.trf.xlu0
          %2090 = vxpose.xlu0.c.b16.start [1/8] %v1741, 128
          %2091 = vxpose.xlu0.c.b16.cont [2/8] 0, 128
          %2092 = vxpose.xlu0.c.b16.cont [3/8] 0, 128
          %2093 = vxpose.xlu0.c.b16.cont [4/8] 0, 128
          %2094 = vxpose.xlu0.c.b16.cont [5/8] 0, 128
          %2095 = vxpose.xlu0.c.b16.cont [6/8] 0, 128
          %2096 = vxpose.xlu0.c.b16.cont [7/8] 0, 128
          %2097 = vxpose.xlu0.c.b16.end [8/8] 0, 128
          %v2098 = vpop.trf.xlu0
          %v2099 = vpop.trf.xlu0
          %v2100 = vpop.trf.xlu0
          %v2101 = vpop.trf.xlu0
          %v2102 = vpop.trf.xlu0
          %v2103 = vpop.trf.xlu0
          %v2104 = vpop.trf.xlu0
          %v2105 = vpop.trf.xlu0
          %2106 = vxpose.xlu0.c.b16.start [1/8] %v1677, 128
          %2107 = vxpose.xlu0.c.b16.cont [2/8] 0, 128
          %2108 = vxpose.xlu0.c.b16.cont [3/8] 0, 128
          %2109 = vxpose.xlu0.c.b16.cont [4/8] 0, 128
          %2110 = vxpose.xlu0.c.b16.cont [5/8] 0, 128
          %2111 = vxpose.xlu0.c.b16.cont [6/8] 0, 128
          %2112 = vxpose.xlu0.c.b16.cont [7/8] 0, 128
          %2113 = vxpose.xlu0.c.b16.end [8/8] 0, 128
          %v2114 = vpop.trf.xlu0
          %v2115 = vpop.trf.xlu0
          %v2116 = vpop.trf.xlu0
          %v2117 = vpop.trf.xlu0
          %v2118 = vpop.trf.xlu0
          %v2119 = vpop.trf.xlu0
          %v2120 = vpop.trf.xlu0
          %v2121 = vpop.trf.xlu0
          %2122 = vxpose.xlu0.c.b16.start [1/8] %v1745, 128
          %2123 = vxpose.xlu0.c.b16.cont [2/8] 0, 128
          %2124 = vxpose.xlu0.c.b16.cont [3/8] 0, 128
          %2125 = vxpose.xlu0.c.b16.cont [4/8] 0, 128
          %2126 = vxpose.xlu0.c.b16.cont [5/8] 0, 128
          %2127 = vxpose.xlu0.c.b16.cont [6/8] 0, 128
          %2128 = vxpose.xlu0.c.b16.cont [7/8] 0, 128
          %2129 = vxpose.xlu0.c.b16.end [8/8] 0, 128
          %v2130 = vpop.trf.xlu0
          %v2131 = vpop.trf.xlu0
          %v2132 = vpop.trf.xlu0
          %v2133 = vpop.trf.xlu0
          %v2134 = vpop.trf.xlu0
          %v2135 = vpop.trf.xlu0
          %v2136 = vpop.trf.xlu0
          %v2137 = vpop.trf.xlu0
          %2138 = vxpose.xlu0.c.b16.start [1/8] %v1786, 128
          %2139 = vxpose.xlu0.c.b16.cont [2/8] 0, 128
          %2140 = vxpose.xlu0.c.b16.cont [3/8] 0, 128
          %2141 = vxpose.xlu0.c.b16.cont [4/8] 0, 128
          %2142 = vxpose.xlu0.c.b16.cont [5/8] 0, 128
          %2143 = vxpose.xlu0.c.b16.cont [6/8] 0, 128
          %2144 = vxpose.xlu0.c.b16.cont [7/8] 0, 128
          %2145 = vxpose.xlu0.c.b16.end [8/8] 0, 128
          %v2146 = vpop.trf.xlu0
          %v2147 = vpop.trf.xlu0
          %v2148 = vpop.trf.xlu0
          %v2149 = vpop.trf.xlu0
          %v2150 = vpop.trf.xlu0
          %v2151 = vpop.trf.xlu0
          %v2152 = vpop.trf.xlu0
          %v2153 = vpop.trf.xlu0
          %2154 = vxpose.xlu0.c.b16.start [1/8] %v1854, 128
          %2155 = vxpose.xlu0.c.b16.cont [2/8] 0, 128
          %2156 = vxpose.xlu0.c.b16.cont [3/8] 0, 128
          %2157 = vxpose.xlu0.c.b16.cont [4/8] 0, 128
          %2158 = vxpose.xlu0.c.b16.cont [5/8] 0, 128
          %2159 = vxpose.xlu0.c.b16.cont [6/8] 0, 128
          %2160 = vxpose.xlu0.c.b16.cont [7/8] 0, 128
          %2161 = vxpose.xlu0.c.b16.end [8/8] 0, 128
          %v2162 = vpop.trf.xlu0
          %v2163 = vpop.trf.xlu0
          %v2164 = vpop.trf.xlu0
          %v2165 = vpop.trf.xlu0
          %v2166 = vpop.trf.xlu0
          %v2167 = vpop.trf.xlu0
          %v2168 = vpop.trf.xlu0
          %v2169 = vpop.trf.xlu0
          %2170 = vxpose.xlu0.c.b16.start [1/8] %v1810, 128
          %2171 = vxpose.xlu0.c.b16.cont [2/8] 0, 128
          %2172 = vxpose.xlu0.c.b16.cont [3/8] 0, 128
          %2173 = vxpose.xlu0.c.b16.cont [4/8] 0, 128
          %2174 = vxpose.xlu0.c.b16.cont [5/8] 0, 128
          %2175 = vxpose.xlu0.c.b16.cont [6/8] 0, 128
          %2176 = vxpose.xlu0.c.b16.cont [7/8] 0, 128
          %2177 = vxpose.xlu0.c.b16.end [8/8] 0, 128
          %v2178 = vpop.trf.xlu0
          %v2179 = vpop.trf.xlu0
          %v2180 = vpop.trf.xlu0
          %v2181 = vpop.trf.xlu0
          %v2182 = vpop.trf.xlu0
          %v2183 = vpop.trf.xlu0
          %v2184 = vpop.trf.xlu0
          %v2185 = vpop.trf.xlu0
          %2186 = vxpose.xlu0.c.b16.start [1/8] %v1878, 128
          %2187 = vxpose.xlu0.c.b16.cont [2/8] 0, 128
          %2188 = vxpose.xlu0.c.b16.cont [3/8] 0, 128
          %2189 = vxpose.xlu0.c.b16.cont [4/8] 0, 128
          %2190 = vxpose.xlu0.c.b16.cont [5/8] 0, 128
          %2191 = vxpose.xlu0.c.b16.cont [6/8] 0, 128
          %2192 = vxpose.xlu0.c.b16.cont [7/8] 0, 128
          %2193 = vxpose.xlu0.c.b16.end [8/8] 0, 128
          %v2194 = vpop.trf.xlu0
          %v2195 = vpop.trf.xlu0
          %v2196 = vpop.trf.xlu0
          %v2197 = vpop.trf.xlu0
          %v2198 = vpop.trf.xlu0
          %v2199 = vpop.trf.xlu0
          %v2200 = vpop.trf.xlu0
          %v2201 = vpop.trf.xlu0
          %2202 = vxpose.xlu0.c.b16.start [1/8] %v1793, 128
          %2203 = vxpose.xlu0.c.b16.cont [2/8] 0, 128
          %2204 = vxpose.xlu0.c.b16.cont [3/8] 0, 128
          %2205 = vxpose.xlu0.c.b16.cont [4/8] 0, 128
          %2206 = vxpose.xlu0.c.b16.cont [5/8] 0, 128
          %2207 = vxpose.xlu0.c.b16.cont [6/8] 0, 128
          %2208 = vxpose.xlu0.c.b16.cont [7/8] 0, 128
          %2209 = vxpose.xlu0.c.b16.end [8/8] 0, 128
          %v2210 = vpop.trf.xlu0
          %v2211 = vpop.trf.xlu0
          %v2212 = vpop.trf.xlu0
          %v2213 = vpop.trf.xlu0
          %v2214 = vpop.trf.xlu0
          %v2215 = vpop.trf.xlu0
          %v2216 = vpop.trf.xlu0
          %v2217 = vpop.trf.xlu0
          %2218 = vxpose.xlu0.c.b16.start [1/8] %v1861, 128
          %2219 = vxpose.xlu0.c.b16.cont [2/8] 0, 128
          %2220 = vxpose.xlu0.c.b16.cont [3/8] 0, 128
          %2221 = vxpose.xlu0.c.b16.cont [4/8] 0, 128
          %2222 = vxpose.xlu0.c.b16.cont [5/8] 0, 128
          %2223 = vxpose.xlu0.c.b16.cont [6/8] 0, 128
          %2224 = vxpose.xlu0.c.b16.cont [7/8] 0, 128
          %2225 = vxpose.xlu0.c.b16.end [8/8] 0, 128
          %v2226 = vpop.trf.xlu0
          %v2227 = vpop.trf.xlu0
          %v2228 = vpop.trf.xlu0
          %v2229 = vpop.trf.xlu0
          %v2230 = vpop.trf.xlu0
          %v2231 = vpop.trf.xlu0
          %v2232 = vpop.trf.xlu0
          %v2233 = vpop.trf.xlu0
          %2234 = vxpose.xlu0.c.b16.start [1/8] %v1811, 128
          %2235 = vxpose.xlu0.c.b16.cont [2/8] 0, 128
          %2236 = vxpose.xlu0.c.b16.cont [3/8] 0, 128
          %2237 = vxpose.xlu0.c.b16.cont [4/8] 0, 128
          %2238 = vxpose.xlu0.c.b16.cont [5/8] 0, 128
          %2239 = vxpose.xlu0.c.b16.cont [6/8] 0, 128
          %2240 = vxpose.xlu0.c.b16.cont [7/8] 0, 128
          %2241 = vxpose.xlu0.c.b16.end [8/8] 0, 128
          %v2242 = vpop.trf.xlu0
          %v2243 = vpop.trf.xlu0
          %v2244 = vpop.trf.xlu0
          %v2245 = vpop.trf.xlu0
          %v2246 = vpop.trf.xlu0
          %v2247 = vpop.trf.xlu0
          %v2248 = vpop.trf.xlu0
          %v2249 = vpop.trf.xlu0
          %2250 = vxpose.xlu0.c.b16.start [1/8] %v1879, 128
          %2251 = vxpose.xlu0.c.b16.cont [2/8] 0, 128
          %2252 = vxpose.xlu0.c.b16.cont [3/8] 0, 128
          %2253 = vxpose.xlu0.c.b16.cont [4/8] 0, 128
          %2254 = vxpose.xlu0.c.b16.cont [5/8] 0, 128
          %2255 = vxpose.xlu0.c.b16.cont [6/8] 0, 128
          %2256 = vxpose.xlu0.c.b16.cont [7/8] 0, 128
          %2257 = vxpose.xlu0.c.b16.end [8/8] 0, 128
          %v2258 = vpop.trf.xlu0
          %v2259 = vpop.trf.xlu0
          %v2260 = vpop.trf.xlu0
          %v2261 = vpop.trf.xlu0
          %v2262 = vpop.trf.xlu0
          %v2263 = vpop.trf.xlu0
          %v2264 = vpop.trf.xlu0
          %v2265 = vpop.trf.xlu0
          %2266 = vxpose.xlu0.c.b16.start [1/8] %v1802, 128
          %2267 = vxpose.xlu0.c.b16.cont [2/8] 0, 128
          %2268 = vxpose.xlu0.c.b16.cont [3/8] 0, 128
          %2269 = vxpose.xlu0.c.b16.cont [4/8] 0, 128
          %2270 = vxpose.xlu0.c.b16.cont [5/8] 0, 128
          %2271 = vxpose.xlu0.c.b16.cont [6/8] 0, 128
          %2272 = vxpose.xlu0.c.b16.cont [7/8] 0, 128
          %2273 = vxpose.xlu0.c.b16.end [8/8] 0, 128
          %v2274 = vpop.trf.xlu0
          %v2275 = vpop.trf.xlu0
          %v2276 = vpop.trf.xlu0
          %v2277 = vpop.trf.xlu0
          %v2278 = vpop.trf.xlu0
          %v2279 = vpop.trf.xlu0
          %v2280 = vpop.trf.xlu0
          %v2281 = vpop.trf.xlu0
          %2282 = vxpose.xlu0.c.b16.start [1/8] %v1870, 128
          %2283 = vxpose.xlu0.c.b16.cont [2/8] 0, 128
          %2284 = vxpose.xlu0.c.b16.cont [3/8] 0, 128
          %2285 = vxpose.xlu0.c.b16.cont [4/8] 0, 128
          %2286 = vxpose.xlu0.c.b16.cont [5/8] 0, 128
          %2287 = vxpose.xlu0.c.b16.cont [6/8] 0, 128
          %2288 = vxpose.xlu0.c.b16.cont [7/8] 0, 128
          %2289 = vxpose.xlu0.c.b16.end [8/8] 0, 128
          %v2290 = vpop.trf.xlu0
          %v2291 = vpop.trf.xlu0
          %v2292 = vpop.trf.xlu0
          %v2293 = vpop.trf.xlu0
          %v2294 = vpop.trf.xlu0
          %v2295 = vpop.trf.xlu0
          %v2296 = vpop.trf.xlu0
          %v2297 = vpop.trf.xlu0
          %2298 = vxpose.xlu0.c.b16.start [1/8] %v1812, 128
          %2299 = vxpose.xlu0.c.b16.cont [2/8] 0, 128
          %2300 = vxpose.xlu0.c.b16.cont [3/8] 0, 128
          %2301 = vxpose.xlu0.c.b16.cont [4/8] 0, 128
          %2302 = vxpose.xlu0.c.b16.cont [5/8] 0, 128
          %2303 = vxpose.xlu0.c.b16.cont [6/8] 0, 128
          %2304 = vxpose.xlu0.c.b16.cont [7/8] 0, 128
          %2305 = vxpose.xlu0.c.b16.end [8/8] 0, 128
          %v2306 = vpop.trf.xlu0
          %v2307 = vpop.trf.xlu0
          %v2308 = vpop.trf.xlu0
          %v2309 = vpop.trf.xlu0
          %v2310 = vpop.trf.xlu0
          %v2311 = vpop.trf.xlu0
          %v2312 = vpop.trf.xlu0
          %v2313 = vpop.trf.xlu0
          %2314 = vxpose.xlu0.c.b16.start [1/8] %v1880, 128
          %2315 = vxpose.xlu0.c.b16.cont [2/8] 0, 128
          %2316 = vxpose.xlu0.c.b16.cont [3/8] 0, 128
          %2317 = vxpose.xlu0.c.b16.cont [4/8] 0, 128
          %2318 = vxpose.xlu0.c.b16.cont [5/8] 0, 128
          %2319 = vxpose.xlu0.c.b16.cont [6/8] 0, 128
          %2320 = vxpose.xlu0.c.b16.cont [7/8] 0, 128
          %2321 = vxpose.xlu0.c.b16.end [8/8] 0, 128
          %v2322 = vpop.trf.xlu0
          %v2323 = vpop.trf.xlu0
          %v2324 = vpop.trf.xlu0
          %v2325 = vpop.trf.xlu0
          %v2326 = vpop.trf.xlu0
          %v2327 = vpop.trf.xlu0
          %v2328 = vpop.trf.xlu0
          %v2329 = vpop.trf.xlu0
          %2330 = vxpose.xlu0.c.b16.start [1/8] %v1809, 128
          %2331 = vxpose.xlu0.c.b16.cont [2/8] 0, 128
          %2332 = vxpose.xlu0.c.b16.cont [3/8] 0, 128
          %2333 = vxpose.xlu0.c.b16.cont [4/8] 0, 128
          %2334 = vxpose.xlu0.c.b16.cont [5/8] 0, 128
          %2335 = vxpose.xlu0.c.b16.cont [6/8] 0, 128
          %2336 = vxpose.xlu0.c.b16.cont [7/8] 0, 128
          %2337 = vxpose.xlu0.c.b16.end [8/8] 0, 128
          %v2338 = vpop.trf.xlu0
          %v2339 = vpop.trf.xlu0
          %v2340 = vpop.trf.xlu0
          %v2341 = vpop.trf.xlu0
          %v2342 = vpop.trf.xlu0
          %v2343 = vpop.trf.xlu0
          %v2344 = vpop.trf.xlu0
          %v2345 = vpop.trf.xlu0
          %2346 = vxpose.xlu0.c.b16.start [1/8] %v1877, 128
          %2347 = vxpose.xlu0.c.b16.cont [2/8] 0, 128
          %2348 = vxpose.xlu0.c.b16.cont [3/8] 0, 128
          %2349 = vxpose.xlu0.c.b16.cont [4/8] 0, 128
          %2350 = vxpose.xlu0.c.b16.cont [5/8] 0, 128
          %2351 = vxpose.xlu0.c.b16.cont [6/8] 0, 128
          %2352 = vxpose.xlu0.c.b16.cont [7/8] 0, 128
          %2353 = vxpose.xlu0.c.b16.end [8/8] 0, 128
          %v2354 = vpop.trf.xlu0
          %v2355 = vpop.trf.xlu0
          %v2356 = vpop.trf.xlu0
          %v2357 = vpop.trf.xlu0
          %v2358 = vpop.trf.xlu0
          %v2359 = vpop.trf.xlu0
          %v2360 = vpop.trf.xlu0
          %v2361 = vpop.trf.xlu0
          %2362 = vxpose.xlu0.c.b16.start [1/8] %v1813, 128
          %2363 = vxpose.xlu0.c.b16.cont [2/8] 0, 128
          %2364 = vxpose.xlu0.c.b16.cont [3/8] 0, 128
          %2365 = vxpose.xlu0.c.b16.cont [4/8] 0, 128
          %2366 = vxpose.xlu0.c.b16.cont [5/8] 0, 128
          %2367 = vxpose.xlu0.c.b16.cont [6/8] 0, 128
          %2368 = vxpose.xlu0.c.b16.cont [7/8] 0, 128
          %2369 = vxpose.xlu0.c.b16.end [8/8] 0, 128
          %v2370 = vpop.trf.xlu0
          %v2371 = vpop.trf.xlu0
          %v2372 = vpop.trf.xlu0
          %v2373 = vpop.trf.xlu0
          %v2374 = vpop.trf.xlu0
          %v2375 = vpop.trf.xlu0
          %v2376 = vpop.trf.xlu0
          %v2377 = vpop.trf.xlu0
          %2378 = vxpose.xlu0.c.b16.start [1/8] %v1881, 128
          %2379 = vxpose.xlu0.c.b16.cont [2/8] 0, 128
          %2380 = vxpose.xlu0.c.b16.cont [3/8] 0, 128
          %2381 = vxpose.xlu0.c.b16.cont [4/8] 0, 128
          %2382 = vxpose.xlu0.c.b16.cont [5/8] 0, 128
          %2383 = vxpose.xlu0.c.b16.cont [6/8] 0, 128
          %2384 = vxpose.xlu0.c.b16.cont [7/8] 0, 128
          %2385 = vxpose.xlu0.c.b16.end [8/8] 0, 128
          %v2386 = vpop.trf.xlu0
          %v2387 = vpop.trf.xlu0
          %v2388 = vpop.trf.xlu0
          %v2389 = vpop.trf.xlu0
          %v2390 = vpop.trf.xlu0
          %v2391 = vpop.trf.xlu0
          %v2392 = vpop.trf.xlu0
          %v2393 = vpop.trf.xlu0
          %v2394 = vcombine.low %v1890, %v1954
          %v2396 = vunpack.c.l.s4 1983009808
          %v2397 = vunpack.c.0.s8 %v2396
          %v2398 = vlaneseq
          %v2399 = vshrl.u32 %v2398, 7
          %v2400 = vsub.s32 %v2397, %v2399
          %v2401 = vrot.slane %v2394, %v2400
          %v2402 = vcombine.low %v1922, %v1986
          %v2404 = vunpack.c.l.s4 1983009808
          %v2405 = vunpack.c.0.s8 %v2404
          %v2406 = vlaneseq
          %v2407 = vshrl.u32 %v2406, 7
          %v2408 = vsub.s32 %v2405, %v2407
          %v2409 = vrot.slane %v2402, %v2408
          %v2410 = vcombine.low %v2018, %v2082
          %v2412 = vunpack.c.l.s4 1983009808
          %v2413 = vunpack.c.0.s8 %v2412
          %v2414 = vlaneseq
          %v2415 = vshrl.u32 %v2414, 7
          %v2416 = vsub.s32 %v2413, %v2415
          %v2417 = vrot.slane %v2410, %v2416
          %v2418 = vcombine.low %v2050, %v2114
          %v2420 = vunpack.c.l.s4 1983009808
          %v2421 = vunpack.c.0.s8 %v2420
          %v2422 = vlaneseq
          %v2423 = vshrl.u32 %v2422, 7
          %v2424 = vsub.s32 %v2421, %v2423
          %v2425 = vrot.slane %v2418, %v2424
          %v2426 = vcombine.low %v2401, %v2409
          %v2428 = vunpack.c.l.s4 1934713408
          %v2429 = vunpack.c.0.s8 %v2428
          %v2430 = vlaneseq
          %v2431 = vshrl.u32 %v2430, 7
          %v2432 = vsub.s32 %v2429, %v2431
          %v2433 = vrot.slane %v2426, %v2432
          %v2434 = vcombine.low %v2417, %v2425
          %v2436 = vunpack.c.l.s4 1934713408
          %v2437 = vunpack.c.0.s8 %v2436
          %v2438 = vlaneseq
          %v2439 = vshrl.u32 %v2438, 7
          %v2440 = vsub.s32 %v2437, %v2439
          %v2441 = vrot.slane %v2434, %v2440
          %v2442 = vcombine.low %v2433, %v2441
          %v2443 = vcombine.high %v2433, %v2441
          %v2444 = vcombine.low %v1906, %v1970
          %v2446 = vunpack.c.l.s4 1983009808
          %v2447 = vunpack.c.0.s8 %v2446
          %v2448 = vlaneseq
          %v2449 = vshrl.u32 %v2448, 7
          %v2450 = vsub.s32 %v2447, %v2449
          %v2451 = vrot.slane %v2444, %v2450
          %v2452 = vcombine.low %v1938, %v2002
          %v2454 = vunpack.c.l.s4 1983009808
          %v2455 = vunpack.c.0.s8 %v2454
          %v2456 = vlaneseq
          %v2457 = vshrl.u32 %v2456, 7
          %v2458 = vsub.s32 %v2455, %v2457
          %v2459 = vrot.slane %v2452, %v2458
          %v2460 = vcombine.low %v2034, %v2098
          %v2462 = vunpack.c.l.s4 1983009808
          %v2463 = vunpack.c.0.s8 %v2462
          %v2464 = vlaneseq
          %v2465 = vshrl.u32 %v2464, 7
          %v2466 = vsub.s32 %v2463, %v2465
          %v2467 = vrot.slane %v2460, %v2466
          %v2468 = vcombine.low %v2066, %v2130
          %v2470 = vunpack.c.l.s4 1983009808
          %v2471 = vunpack.c.0.s8 %v2470
          %v2472 = vlaneseq
          %v2473 = vshrl.u32 %v2472, 7
          %v2474 = vsub.s32 %v2471, %v2473
          %v2475 = vrot.slane %v2468, %v2474
          %v2476 = vcombine.low %v2451, %v2459
          %v2478 = vunpack.c.l.s4 1934713408
          %v2479 = vunpack.c.0.s8 %v2478
          %v2480 = vlaneseq
          %v2481 = vshrl.u32 %v2480, 7
          %v2482 = vsub.s32 %v2479, %v2481
          %v2483 = vrot.slane %v2476, %v2482
          %v2484 = vcombine.low %v2467, %v2475
          %v2486 = vunpack.c.l.s4 1934713408
          %v2487 = vunpack.c.0.s8 %v2486
          %v2488 = vlaneseq
          %v2489 = vshrl.u32 %v2488, 7
          %v2490 = vsub.s32 %v2487, %v2489
          %v2491 = vrot.slane %v2484, %v2490
          %v2492 = vcombine.low %v2483, %v2491
          %v2493 = vcombine.high %v2483, %v2491
          %v2494 = vcombine.low %v2146, %v2210
          %v2496 = vunpack.c.l.s4 1983009808
          %v2497 = vunpack.c.0.s8 %v2496
          %v2498 = vlaneseq
          %v2499 = vshrl.u32 %v2498, 7
          %v2500 = vsub.s32 %v2497, %v2499
          %v2501 = vrot.slane %v2494, %v2500
          %v2502 = vcombine.low %v2178, %v2242
          %v2504 = vunpack.c.l.s4 1983009808
          %v2505 = vunpack.c.0.s8 %v2504
          %v2506 = vlaneseq
          %v2507 = vshrl.u32 %v2506, 7
          %v2508 = vsub.s32 %v2505, %v2507
          %v2509 = vrot.slane %v2502, %v2508
          %v2510 = vcombine.low %v2274, %v2338
          %v2512 = vunpack.c.l.s4 1983009808
          %v2513 = vunpack.c.0.s8 %v2512
          %v2514 = vlaneseq
          %v2515 = vshrl.u32 %v2514, 7
          %v2516 = vsub.s32 %v2513, %v2515
          %v2517 = vrot.slane %v2510, %v2516
          %v2518 = vcombine.low %v2306, %v2370
          %v2520 = vunpack.c.l.s4 1983009808
          %v2521 = vunpack.c.0.s8 %v2520
          %v2522 = vlaneseq
          %v2523 = vshrl.u32 %v2522, 7
          %v2524 = vsub.s32 %v2521, %v2523
          %v2525 = vrot.slane %v2518, %v2524
          %v2526 = vcombine.low %v2501, %v2509
          %v2528 = vunpack.c.l.s4 1934713408
          %v2529 = vunpack.c.0.s8 %v2528
          %v2530 = vlaneseq
          %v2531 = vshrl.u32 %v2530, 7
          %v2532 = vsub.s32 %v2529, %v2531
          %v2533 = vrot.slane %v2526, %v2532
          %v2534 = vcombine.low %v2517, %v2525
          %v2536 = vunpack.c.l.s4 1934713408
          %v2537 = vunpack.c.0.s8 %v2536
          %v2538 = vlaneseq
          %v2539 = vshrl.u32 %v2538, 7
          %v2540 = vsub.s32 %v2537, %v2539
          %v2541 = vrot.slane %v2534, %v2540
          %v2542 = vcombine.low %v2533, %v2541
          %v2543 = vcombine.high %v2533, %v2541
          %v2544 = vcombine.low %v2162, %v2226
          %v2546 = vunpack.c.l.s4 1983009808
          %v2547 = vunpack.c.0.s8 %v2546
          %v2548 = vlaneseq
          %v2549 = vshrl.u32 %v2548, 7
          %v2550 = vsub.s32 %v2547, %v2549
          %v2551 = vrot.slane %v2544, %v2550
          %v2552 = vcombine.low %v2194, %v2258
          %v2554 = vunpack.c.l.s4 1983009808
          %v2555 = vunpack.c.0.s8 %v2554
          %v2556 = vlaneseq
          %v2557 = vshrl.u32 %v2556, 7
          %v2558 = vsub.s32 %v2555, %v2557
          %v2559 = vrot.slane %v2552, %v2558
          %v2560 = vcombine.low %v2290, %v2354
          %v2562 = vunpack.c.l.s4 1983009808
          %v2563 = vunpack.c.0.s8 %v2562
          %v2564 = vlaneseq
          %v2565 = vshrl.u32 %v2564, 7
          %v2566 = vsub.s32 %v2563, %v2565
          %v2567 = vrot.slane %v2560, %v2566
          %v2568 = vcombine.low %v2322, %v2386
          %v2570 = vunpack.c.l.s4 1983009808
          %v2571 = vunpack.c.0.s8 %v2570
          %v2572 = vlaneseq
          %v2573 = vshrl.u32 %v2572, 7
          %v2574 = vsub.s32 %v2571, %v2573
          %v2575 = vrot.slane %v2568, %v2574
          %v2576 = vcombine.low %v2551, %v2559
          %v2578 = vunpack.c.l.s4 1934713408
          %v2579 = vunpack.c.0.s8 %v2578
          %v2580 = vlaneseq
          %v2581 = vshrl.u32 %v2580, 7
          %v2582 = vsub.s32 %v2579, %v2581
          %v2583 = vrot.slane %v2576, %v2582
          %v2584 = vcombine.low %v2567, %v2575
          %v2586 = vunpack.c.l.s4 1934713408
          %v2587 = vunpack.c.0.s8 %v2586
          %v2588 = vlaneseq
          %v2589 = vshrl.u32 %v2588, 7
          %v2590 = vsub.s32 %v2587, %v2589
          %v2591 = vrot.slane %v2584, %v2590
          %v2592 = vcombine.low %v2583, %v2591
          %v2593 = vcombine.high %v2583, %v2591
          %v2596 = vpack.i.b16 %v2492, %v2442
          %v2598 = vshrl.u32 %v2442, 16
          %v2599 = vshrl.u32 %v2492, 16
          %v2600 = vpack.i.b16 %v2599, %v2598
          %v2604 = vpack.i.b16 %v2493, %v2443
          %v2606 = vshrl.u32 %v2443, 16
          %v2607 = vshrl.u32 %v2493, 16
          %v2608 = vpack.i.b16 %v2607, %v2606
          %v2612 = vpack.i.b16 %v2592, %v2542
          %v2614 = vshrl.u32 %v2542, 16
          %v2615 = vshrl.u32 %v2592, 16
          %v2616 = vpack.i.b16 %v2615, %v2614
          %v2620 = vpack.i.b16 %v2593, %v2543
          %v2622 = vshrl.u32 %v2543, 16
          %v2623 = vshrl.u32 %v2593, 16
          %v2624 = vpack.i.b16 %v2623, %v2622
          %vm2626 = vcmask 261120
          %v2628 = vsel %vm2626, %v1408, 0
          %2630 = vmatprep.subr.bf16.mxu0 0
          %2631 = vmatpush1.bf16.msra.mxu0 %v2596
          %2632 = vmatprep.subr.bf16.mxu0 0
          %2633 = vmatpush1.bf16.msra.mxu0 %v2612
          %2634 = vmatprep.subr.bf16.mxu0 0
          %2635 = vmatpush1.bf16.msra.mxu0 0
          %2636 = vmatprep.subr.bf16.mxu0 0
          %2637 = vmatpush1.bf16.msra.mxu0 0
          %2638 = vmatprep.subr.bf16.mxu0 0
          %2639 = vmatpush1.bf16.msra.mxu0 0
          %2640 = vmatprep.subr.bf16.mxu0 0
          %2641 = vmatpush1.bf16.msra.mxu0 0
          %2642 = vmatprep.subr.bf16.mxu0 0
          %2643 = vmatpush1.bf16.msra.mxu0 0
          %2644 = vmatprep.subr.bf16.mxu0 0
          %2645 = vmatpush1.bf16.msra.mxu0 0
          %2646 = vmatprep.subr.bf16.mxu0 0
          %2647 = vmatpush1.bf16.msra.mxu0 0
          %2648 = vmatprep.subr.bf16.mxu0 0
          %2649 = vmatpush1.bf16.msra.mxu0 0
          %2650 = vmatprep.subr.bf16.mxu0 0
          %2651 = vmatpush1.bf16.msra.mxu0 0
          %2652 = vmatprep.subr.bf16.mxu0 0
          %2653 = vmatpush1.bf16.msra.mxu0 0
          %2654 = vmatprep.subr.bf16.mxu0 0
          %2655 = vmatpush1.bf16.msra.mxu0 0
          %2656 = vmatprep.subr.bf16.mxu0 0
          %2657 = vmatpush1.bf16.msra.mxu0 0
          %2658 = vmatprep.subr.bf16.mxu0 0
          %2659 = vmatpush1.bf16.msra.mxu0 0
          %2660 = vmatprep.subr.bf16.mxu0 0
          %2661 = vmatpush1.bf16.msra.mxu0 0
          %2662 = vmatprep.mubr.bf16.mxu0 0
          %2663 = vmatmul.mubr.bf16.gmra.mrb[0].mxu0 %v2628
          %v2664 = vpop.f32.mrb[0].mxu0
          %v2665 = vadd.f32 0.0, %v2664
          %v2666 = vpop.f32.mrb[0].mxu0
          %v2667 = vpop.f32.mrb[0].mxu0
          %v2668 = vpop.f32.mrb[0].mxu0
          %2669 = vdwg.mxu0
          %v2671 = vsel %vm2626, %v1411, 0
          %2673 = vmatprep.subr.bf16.mxu0 0
          %2674 = vmatpush1.bf16.msra.mxu0 %v2600
          %2675 = vmatprep.subr.bf16.mxu0 0
          %2676 = vmatpush1.bf16.msra.mxu0 %v2616
          %2677 = vmatprep.subr.bf16.mxu0 0
          %2678 = vmatpush1.bf16.msra.mxu0 0
          %2679 = vmatprep.subr.bf16.mxu0 0
          %2680 = vmatpush1.bf16.msra.mxu0 0
          %2681 = vmatprep.subr.bf16.mxu0 0
          %2682 = vmatpush1.bf16.msra.mxu0 0
          %2683 = vmatprep.subr.bf16.mxu0 0
          %2684 = vmatpush1.bf16.msra.mxu0 0
          %2685 = vmatprep.subr.bf16.mxu0 0
          %2686 = vmatpush1.bf16.msra.mxu0 0
          %2687 = vmatprep.subr.bf16.mxu0 0
          %2688 = vmatpush1.bf16.msra.mxu0 0
          %2689 = vmatprep.subr.bf16.mxu0 0
          %2690 = vmatpush1.bf16.msra.mxu0 0
          %2691 = vmatprep.subr.bf16.mxu0 0
          %2692 = vmatpush1.bf16.msra.mxu0 0
          %2693 = vmatprep.subr.bf16.mxu0 0
          %2694 = vmatpush1.bf16.msra.mxu0 0
          %2695 = vmatprep.subr.bf16.mxu0 0
          %2696 = vmatpush1.bf16.msra.mxu0 0
          %2697 = vmatprep.subr.bf16.mxu0 0
          %2698 = vmatpush1.bf16.msra.mxu0 0
          %2699 = vmatprep.subr.bf16.mxu0 0
          %2700 = vmatpush1.bf16.msra.mxu0 0
          %2701 = vmatprep.subr.bf16.mxu0 0
          %2702 = vmatpush1.bf16.msra.mxu0 0
          %2703 = vmatprep.subr.bf16.mxu0 0
          %2704 = vmatpush1.bf16.msra.mxu0 0
          %2705 = vmatprep.mubr.bf16.mxu0 0
          %2706 = vmatmul.mubr.bf16.gmra.mrb[0].mxu0 %v2671
          %v2707 = vpop.f32.mrb[0].mxu0
          %v2708 = vadd.f32 0.0, %v2707
          %v2709 = vpop.f32.mrb[0].mxu0
          %v2710 = vpop.f32.mrb[0].mxu0
          %v2711 = vpop.f32.mrb[0].mxu0
          %2712 = vdwg.mxu0
          %v2714 = vsel %vm2626, %v1414, 0
          %2716 = vmatprep.subr.bf16.mxu0 0
          %2717 = vmatpush1.bf16.msra.mxu0 %v2604
          %2718 = vmatprep.subr.bf16.mxu0 0
          %2719 = vmatpush1.bf16.msra.mxu0 %v2620
          %2720 = vmatprep.subr.bf16.mxu0 0
          %2721 = vmatpush1.bf16.msra.mxu0 0
          %2722 = vmatprep.subr.bf16.mxu0 0
          %2723 = vmatpush1.bf16.msra.mxu0 0
          %2724 = vmatprep.subr.bf16.mxu0 0
          %2725 = vmatpush1.bf16.msra.mxu0 0
          %2726 = vmatprep.subr.bf16.mxu0 0
          %2727 = vmatpush1.bf16.msra.mxu0 0
          %2728 = vmatprep.subr.bf16.mxu0 0
          %2729 = vmatpush1.bf16.msra.mxu0 0
          %2730 = vmatprep.subr.bf16.mxu0 0
          %2731 = vmatpush1.bf16.msra.mxu0 0
          %2732 = vmatprep.subr.bf16.mxu0 0
          %2733 = vmatpush1.bf16.msra.mxu0 0
          %2734 = vmatprep.subr.bf16.mxu0 0
          %2735 = vmatpush1.bf16.msra.mxu0 0
          %2736 = vmatprep.subr.bf16.mxu0 0
          %2737 = vmatpush1.bf16.msra.mxu0 0
          %2738 = vmatprep.subr.bf16.mxu0 0
          %2739 = vmatpush1.bf16.msra.mxu0 0
          %2740 = vmatprep.subr.bf16.mxu0 0
          %2741 = vmatpush1.bf16.msra.mxu0 0
          %2742 = vmatprep.subr.bf16.mxu0 0
          %2743 = vmatpush1.bf16.msra.mxu0 0
          %2744 = vmatprep.subr.bf16.mxu0 0
          %2745 = vmatpush1.bf16.msra.mxu0 0
          %2746 = vmatprep.subr.bf16.mxu0 0
          %2747 = vmatpush1.bf16.msra.mxu0 0
          %2748 = vmatprep.mubr.bf16.mxu0 0
          %2749 = vmatmul.mubr.bf16.gmra.mrb[0].mxu0 %v2714
          %v2750 = vpop.f32.mrb[0].mxu0
          %v2751 = vadd.f32 0.0, %v2750
          %v2752 = vpop.f32.mrb[0].mxu0
          %v2753 = vpop.f32.mrb[0].mxu0
          %v2754 = vpop.f32.mrb[0].mxu0
          %2755 = vdwg.mxu0
          %v2757 = vsel %vm2626, %v1417, 0
          %2759 = vmatprep.subr.bf16.mxu0 0
          %2760 = vmatpush1.bf16.msra.mxu0 %v2608
          %2761 = vmatprep.subr.bf16.mxu0 0
          %2762 = vmatpush1.bf16.msra.mxu0 %v2624
          %2763 = vmatprep.subr.bf16.mxu0 0
          %2764 = vmatpush1.bf16.msra.mxu0 0
          %2765 = vmatprep.subr.bf16.mxu0 0
          %2766 = vmatpush1.bf16.msra.mxu0 0
          %2767 = vmatprep.subr.bf16.mxu0 0
          %2768 = vmatpush1.bf16.msra.mxu0 0
          %2769 = vmatprep.subr.bf16.mxu0 0
          %2770 = vmatpush1.bf16.msra.mxu0 0
          %2771 = vmatprep.subr.bf16.mxu0 0
          %2772 = vmatpush1.bf16.msra.mxu0 0
          %2773 = vmatprep.subr.bf16.mxu0 0
          %2774 = vmatpush1.bf16.msra.mxu0 0
          %2775 = vmatprep.subr.bf16.mxu0 0
          %2776 = vmatpush1.bf16.msra.mxu0 0
          %2777 = vmatprep.subr.bf16.mxu0 0
          %2778 = vmatpush1.bf16.msra.mxu0 0
          %2779 = vmatprep.subr.bf16.mxu0 0
          %2780 = vmatpush1.bf16.msra.mxu0 0
          %2781 = vmatprep.subr.bf16.mxu0 0
          %2782 = vmatpush1.bf16.msra.mxu0 0
          %2783 = vmatprep.subr.bf16.mxu0 0
          %2784 = vmatpush1.bf16.msra.mxu0 0
          %2785 = vmatprep.subr.bf16.mxu0 0
          %2786 = vmatpush1.bf16.msra.mxu0 0
          %2787 = vmatprep.subr.bf16.mxu0 0
          %2788 = vmatpush1.bf16.msra.mxu0 0
          %2789 = vmatprep.subr.bf16.mxu0 0
          %2790 = vmatpush1.bf16.msra.mxu0 0
          %2791 = vmatprep.mubr.bf16.mxu0 0
          %2792 = vmatmul.mubr.bf16.gmra.mrb[0].mxu0 %v2757
          %v2793 = vpop.f32.mrb[0].mxu0
          %v2794 = vadd.f32 0.0, %v2793
          %v2795 = vpop.f32.mrb[0].mxu0
          %v2796 = vpop.f32.mrb[0].mxu0
          %v2797 = vpop.f32.mrb[0].mxu0
          %2798 = vdwg.mxu0
          %v2799 = vmul.f32 %v2665, 0.17677669
          %v2800 = vmul.f32 %v2708, 0.17677669
          %v2801 = vmul.f32 %v2751, 0.17677669
          %v2802 = vmul.f32 %v2794, 0.17677669
          %v2803 = vadd.f32 %v2799, %v914
          %v2804 = vadd.f32 %v2800, %v914
          %v2805 = vadd.f32 %v2801, %v914
          %v2806 = vadd.f32 %v2802, %v914
          %vm2807 = vcmask 64512
          %v2808 = vsel %vm2807, %v2803, -inf
          %2809 = vmax.xlane.f32.xlu0 %v2808
          %v2810 = vpop.xlane.xlu0 %2809
          %v2811 = vsel %vm2807, %v2804, -inf
          %2812 = vmax.xlane.f32.xlu0 %v2811
          %v2813 = vpop.xlane.xlu0 %2812
          %v2814 = vsel %vm2807, %v2805, -inf
          %2815 = vmax.xlane.f32.xlu0 %v2814
          %v2816 = vpop.xlane.xlu0 %2815
          %v2817 = vsel %vm2807, %v2806, -inf
          %2818 = vmax.xlane.f32.xlu0 %v2817
          %v2819 = vpop.xlane.xlu0 %2818
          %v2820 = vsub.f32 %v2803, %v2810
          %v2821 = vsub.f32 %v2804, %v2813
          %v2822 = vsub.f32 %v2805, %v2816
          %v2823 = vsub.f32 %v2806, %v2819
          %v2824 = vmul.f32 %v2820, 1.442695
          %v2825 = vpow.pop %v2824
          %v2826 = vmul.f32 %v2821, 1.442695
          %v2827 = vpow.pop %v2826
          %v2828 = vmul.f32 %v2822, 1.442695
          %v2829 = vpow.pop %v2828
          %v2830 = vmul.f32 %v2823, 1.442695
          %v2831 = vpow.pop %v2830
          %v2832 = vsel %vm2807, %v2825, 0.0
          %2833 = vadd.xlane.f32.xlu0 %v2832
          %v2834 = vpop.xlane.xlu0 %2833
          %v2835 = vsel %vm2807, %v2827, 0.0
          %2836 = vadd.xlane.f32.xlu0 %v2835
          %v2837 = vpop.xlane.xlu0 %2836
          %v2838 = vsel %vm2807, %v2829, 0.0
          %2839 = vadd.xlane.f32.xlu0 %v2838
          %v2840 = vpop.xlane.xlu0 %2839
          %v2841 = vsel %vm2807, %v2831, 0.0
          %2842 = vadd.xlane.f32.xlu0 %v2841
          %v2843 = vpop.xlane.xlu0 %2842
          %v2844 = vrcp.pop %v2834
          %v2845 = vrcp.pop %v2837
          %v2846 = vrcp.pop %v2840
          %v2847 = vrcp.pop %v2843
          %v2848 = vmul.f32 %v2825, %v2844
          %v2849 = vmul.f32 %v2827, %v2845
          %v2850 = vmul.f32 %v2829, %v2846
          %v2851 = vmul.f32 %v2831, %v2847
          %v2852 = vpack.c.bf16 %v2848, %v2848
          %v2853 = vpack.c.bf16 %v2849, %v2849
          %v2854 = vpack.c.bf16 %v2850, %v2850
          %v2855 = vpack.c.bf16 %v2851, %v2851
          %2856 = vxpose.xlu0.c.b16.start [1/8] %v1348, 128
          %2857 = vxpose.xlu0.c.b16.cont [2/8] 0, 128
          %2858 = vxpose.xlu0.c.b16.cont [3/8] 0, 128
          %2859 = vxpose.xlu0.c.b16.cont [4/8] 0, 128
          %2860 = vxpose.xlu0.c.b16.cont [5/8] 0, 128
          %2861 = vxpose.xlu0.c.b16.cont [6/8] 0, 128
          %2862 = vxpose.xlu0.c.b16.cont [7/8] 0, 128
          %2863 = vxpose.xlu0.c.b16.end [8/8] 0, 128
          %v2864 = vpop.trf.xlu0
          %v2865 = vpop.trf.xlu0
          %v2866 = vpop.trf.xlu0
          %v2867 = vpop.trf.xlu0
          %v2868 = vpop.trf.xlu0
          %v2869 = vpop.trf.xlu0
          %v2870 = vpop.trf.xlu0
          %v2871 = vpop.trf.xlu0
          %2872 = vxpose.xlu0.c.b16.start [1/8] %v1349, 128
          %2873 = vxpose.xlu0.c.b16.cont [2/8] 0, 128
          %2874 = vxpose.xlu0.c.b16.cont [3/8] 0, 128
          %2875 = vxpose.xlu0.c.b16.cont [4/8] 0, 128
          %2876 = vxpose.xlu0.c.b16.cont [5/8] 0, 128
          %2877 = vxpose.xlu0.c.b16.cont [6/8] 0, 128
          %2878 = vxpose.xlu0.c.b16.cont [7/8] 0, 128
          %2879 = vxpose.xlu0.c.b16.end [8/8] 0, 128
          %v2880 = vpop.trf.xlu0
          %v2881 = vpop.trf.xlu0
          %v2882 = vpop.trf.xlu0
          %v2883 = vpop.trf.xlu0
          %v2884 = vpop.trf.xlu0
          %v2885 = vpop.trf.xlu0
          %v2886 = vpop.trf.xlu0
          %v2887 = vpop.trf.xlu0
          %2888 = vxpose.xlu0.c.b16.start [1/8] %v1350, 128
          %2889 = vxpose.xlu0.c.b16.cont [2/8] 0, 128
          %2890 = vxpose.xlu0.c.b16.cont [3/8] 0, 128
          %2891 = vxpose.xlu0.c.b16.cont [4/8] 0, 128
          %2892 = vxpose.xlu0.c.b16.cont [5/8] 0, 128
          %2893 = vxpose.xlu0.c.b16.cont [6/8] 0, 128
          %2894 = vxpose.xlu0.c.b16.cont [7/8] 0, 128
          %2895 = vxpose.xlu0.c.b16.end [8/8] 0, 128
          %v2896 = vpop.trf.xlu0
          %v2897 = vpop.trf.xlu0
          %v2898 = vpop.trf.xlu0
          %v2899 = vpop.trf.xlu0
          %v2900 = vpop.trf.xlu0
          %v2901 = vpop.trf.xlu0
          %v2902 = vpop.trf.xlu0
          %v2903 = vpop.trf.xlu0
          %2904 = vxpose.xlu0.c.b16.start [1/8] %v1351, 128
          %2905 = vxpose.xlu0.c.b16.cont [2/8] 0, 128
          %2906 = vxpose.xlu0.c.b16.cont [3/8] 0, 128
          %2907 = vxpose.xlu0.c.b16.cont [4/8] 0, 128
          %2908 = vxpose.xlu0.c.b16.cont [5/8] 0, 128
          %2909 = vxpose.xlu0.c.b16.cont [6/8] 0, 128
          %2910 = vxpose.xlu0.c.b16.cont [7/8] 0, 128
          %2911 = vxpose.xlu0.c.b16.end [8/8] 0, 128
          %v2912 = vpop.trf.xlu0
          %v2913 = vpop.trf.xlu0
          %v2914 = vpop.trf.xlu0
          %v2915 = vpop.trf.xlu0
          %v2916 = vpop.trf.xlu0
          %v2917 = vpop.trf.xlu0
          %v2918 = vpop.trf.xlu0
          %v2919 = vpop.trf.xlu0
          %2920 = vxpose.xlu0.c.b16.start [1/8] %v1352, 128
          %2921 = vxpose.xlu0.c.b16.cont [2/8] 0, 128
          %2922 = vxpose.xlu0.c.b16.cont [3/8] 0, 128
          %2923 = vxpose.xlu0.c.b16.cont [4/8] 0, 128
          %2924 = vxpose.xlu0.c.b16.cont [5/8] 0, 128
          %2925 = vxpose.xlu0.c.b16.cont [6/8] 0, 128
          %2926 = vxpose.xlu0.c.b16.cont [7/8] 0, 128
          %2927 = vxpose.xlu0.c.b16.end [8/8] 0, 128
          %v2928 = vpop.trf.xlu0
          %v2929 = vpop.trf.xlu0
          %v2930 = vpop.trf.xlu0
          %v2931 = vpop.trf.xlu0
          %v2932 = vpop.trf.xlu0
          %v2933 = vpop.trf.xlu0
          %v2934 = vpop.trf.xlu0
          %v2935 = vpop.trf.xlu0
          %2936 = vxpose.xlu0.c.b16.start [1/8] %v1353, 128
          %2937 = vxpose.xlu0.c.b16.cont [2/8] 0, 128
          %2938 = vxpose.xlu0.c.b16.cont [3/8] 0, 128
          %2939 = vxpose.xlu0.c.b16.cont [4/8] 0, 128
          %2940 = vxpose.xlu0.c.b16.cont [5/8] 0, 128
          %2941 = vxpose.xlu0.c.b16.cont [6/8] 0, 128
          %2942 = vxpose.xlu0.c.b16.cont [7/8] 0, 128
          %2943 = vxpose.xlu0.c.b16.end [8/8] 0, 128
          %v2944 = vpop.trf.xlu0
          %v2945 = vpop.trf.xlu0
          %v2946 = vpop.trf.xlu0
          %v2947 = vpop.trf.xlu0
          %v2948 = vpop.trf.xlu0
          %v2949 = vpop.trf.xlu0
          %v2950 = vpop.trf.xlu0
          %v2951 = vpop.trf.xlu0
          %2952 = vxpose.xlu0.c.b16.start [1/8] %v1354, 128
          %2953 = vxpose.xlu0.c.b16.cont [2/8] 0, 128
          %2954 = vxpose.xlu0.c.b16.cont [3/8] 0, 128
          %2955 = vxpose.xlu0.c.b16.cont [4/8] 0, 128
          %2956 = vxpose.xlu0.c.b16.cont [5/8] 0, 128
          %2957 = vxpose.xlu0.c.b16.cont [6/8] 0, 128
          %2958 = vxpose.xlu0.c.b16.cont [7/8] 0, 128
          %2959 = vxpose.xlu0.c.b16.end [8/8] 0, 128
          %v2960 = vpop.trf.xlu0
          %v2961 = vpop.trf.xlu0
          %v2962 = vpop.trf.xlu0
          %v2963 = vpop.trf.xlu0
          %v2964 = vpop.trf.xlu0
          %v2965 = vpop.trf.xlu0
          %v2966 = vpop.trf.xlu0
          %v2967 = vpop.trf.xlu0
          %2968 = vxpose.xlu0.c.b16.start [1/8] %v1355, 128
          %2969 = vxpose.xlu0.c.b16.cont [2/8] 0, 128
          %2970 = vxpose.xlu0.c.b16.cont [3/8] 0, 128
          %2971 = vxpose.xlu0.c.b16.cont [4/8] 0, 128
          %2972 = vxpose.xlu0.c.b16.cont [5/8] 0, 128
          %2973 = vxpose.xlu0.c.b16.cont [6/8] 0, 128
          %2974 = vxpose.xlu0.c.b16.cont [7/8] 0, 128
          %2975 = vxpose.xlu0.c.b16.end [8/8] 0, 128
          %v2976 = vpop.trf.xlu0
          %v2977 = vpop.trf.xlu0
          %v2978 = vpop.trf.xlu0
          %v2979 = vpop.trf.xlu0
          %v2980 = vpop.trf.xlu0
          %v2981 = vpop.trf.xlu0
          %v2982 = vpop.trf.xlu0
          %v2983 = vpop.trf.xlu0
          %v2986 = vpack.i.b16 %v2880, %v2864
          %v2988 = vshrl.u32 %v2864, 16
          %v2989 = vshrl.u32 %v2880, 16
          %v2990 = vpack.i.b16 %v2989, %v2988
          %v2994 = vpack.i.b16 %v2912, %v2896
          %v2996 = vshrl.u32 %v2896, 16
          %v2997 = vshrl.u32 %v2912, 16
          %v2998 = vpack.i.b16 %v2997, %v2996
          %v3002 = vpack.i.b16 %v2944, %v2928
          %v3004 = vshrl.u32 %v2928, 16
          %v3005 = vshrl.u32 %v2944, 16
          %v3006 = vpack.i.b16 %v3005, %v3004
          %v3010 = vpack.i.b16 %v2976, %v2960
          %v3012 = vshrl.u32 %v2960, 16
          %v3013 = vshrl.u32 %v2976, 16
          %v3014 = vpack.i.b16 %v3013, %v3012
          %v3018 = vpack.i.b16 %v2881, %v2865
          %v3020 = vshrl.u32 %v2865, 16
          %v3021 = vshrl.u32 %v2881, 16
          %v3022 = vpack.i.b16 %v3021, %v3020
          %v3026 = vpack.i.b16 %v2913, %v2897
          %v3028 = vshrl.u32 %v2897, 16
          %v3029 = vshrl.u32 %v2913, 16
          %v3030 = vpack.i.b16 %v3029, %v3028
          %v3034 = vpack.i.b16 %v2945, %v2929
          %v3036 = vshrl.u32 %v2929, 16
          %v3037 = vshrl.u32 %v2945, 16
          %v3038 = vpack.i.b16 %v3037, %v3036
          %v3042 = vpack.i.b16 %v2977, %v2961
          %v3044 = vshrl.u32 %v2961, 16
          %v3045 = vshrl.u32 %v2977, 16
          %v3046 = vpack.i.b16 %v3045, %v3044
          %v3048 = vcombine.low %v2986, %v3002
          %v3049 = vcombine.high %v2986, %v3002
          %v3051 = vunpack.c.l.s4 1983009808
          %v3052 = vunpack.c.0.s8 %v3051
          %v3053 = vlaneseq
          %v3054 = vshrl.u32 %v3053, 7
          %v3055 = vsub.s32 %v3052, %v3054
          %v3056 = vrot.slane %v3048, %v3055
          %v3058 = vunpack.c.l.s4 1983009808
          %v3059 = vunpack.c.0.s8 %v3058
          %v3060 = vlaneseq
          %v3061 = vshrl.u32 %v3060, 7
          %v3062 = vsub.s32 %v3059, %v3061
          %v3063 = vrot.slane %v3049, %v3062
          %v3064 = vcombine.low %v2994, %v3010
          %v3065 = vcombine.high %v2994, %v3010
          %v3067 = vunpack.c.l.s4 1983009808
          %v3068 = vunpack.c.0.s8 %v3067
          %v3069 = vlaneseq
          %v3070 = vshrl.u32 %v3069, 7
          %v3071 = vsub.s32 %v3068, %v3070
          %v3072 = vrot.slane %v3064, %v3071
          %v3074 = vunpack.c.l.s4 1983009808
          %v3075 = vunpack.c.0.s8 %v3074
          %v3076 = vlaneseq
          %v3077 = vshrl.u32 %v3076, 7
          %v3078 = vsub.s32 %v3075, %v3077
          %v3079 = vrot.slane %v3065, %v3078
          %v3080 = vcombine.low %v3056, %v3072
          %v3081 = vcombine.high %v3056, %v3072
          %v3083 = vunpack.c.l.s4 1934713408
          %v3084 = vunpack.c.0.s8 %v3083
          %v3085 = vlaneseq
          %v3086 = vshrl.u32 %v3085, 7
          %v3087 = vsub.s32 %v3084, %v3086
          %v3088 = vrot.slane %v3080, %v3087
          %v3090 = vunpack.c.l.s4 1934713408
          %v3091 = vunpack.c.0.s8 %v3090
          %v3092 = vlaneseq
          %v3093 = vshrl.u32 %v3092, 7
          %v3094 = vsub.s32 %v3091, %v3093
          %v3095 = vrot.slane %v3081, %v3094
          %v3096 = vcombine.low %v3063, %v3079
          %v3097 = vcombine.high %v3063, %v3079
          %v3099 = vunpack.c.l.s4 1934713408
          %v3100 = vunpack.c.0.s8 %v3099
          %v3101 = vlaneseq
          %v3102 = vshrl.u32 %v3101, 7
          %v3103 = vsub.s32 %v3100, %v3102
          %v3104 = vrot.slane %v3096, %v3103
          %v3106 = vunpack.c.l.s4 1934713408
          %v3107 = vunpack.c.0.s8 %v3106
          %v3108 = vlaneseq
          %v3109 = vshrl.u32 %v3108, 7
          %v3110 = vsub.s32 %v3107, %v3109
          %v3111 = vrot.slane %v3097, %v3110
          %v3112 = vcombine.high %v3088, 0
          %v3113 = vcombine.high %v3095, 0
          %v3114 = vcombine.high %v3104, 0
          %v3115 = vcombine.high %v3111, 0
          %v3116 = vcombine.low %v2990, %v3006
          %v3117 = vcombine.high %v2990, %v3006
          %v3119 = vunpack.c.l.s4 1983009808
          %v3120 = vunpack.c.0.s8 %v3119
          %v3121 = vlaneseq
          %v3122 = vshrl.u32 %v3121, 7
          %v3123 = vsub.s32 %v3120, %v3122
          %v3124 = vrot.slane %v3116, %v3123
          %v3126 = vunpack.c.l.s4 1983009808
          %v3127 = vunpack.c.0.s8 %v3126
          %v3128 = vlaneseq
          %v3129 = vshrl.u32 %v3128, 7
          %v3130 = vsub.s32 %v3127, %v3129
          %v3131 = vrot.slane %v3117, %v3130
          %v3132 = vcombine.low %v2998, %v3014
          %v3133 = vcombine.high %v2998, %v3014
          %v3135 = vunpack.c.l.s4 1983009808
          %v3136 = vunpack.c.0.s8 %v3135
          %v3137 = vlaneseq
          %v3138 = vshrl.u32 %v3137, 7
          %v3139 = vsub.s32 %v3136, %v3138
          %v3140 = vrot.slane %v3132, %v3139
          %v3142 = vunpack.c.l.s4 1983009808
          %v3143 = vunpack.c.0.s8 %v3142
          %v3144 = vlaneseq
          %v3145 = vshrl.u32 %v3144, 7
          %v3146 = vsub.s32 %v3143, %v3145
          %v3147 = vrot.slane %v3133, %v3146
          %v3148 = vcombine.low %v3124, %v3140
          %v3149 = vcombine.high %v3124, %v3140
          %v3151 = vunpack.c.l.s4 1934713408
          %v3152 = vunpack.c.0.s8 %v3151
          %v3153 = vlaneseq
          %v3154 = vshrl.u32 %v3153, 7
          %v3155 = vsub.s32 %v3152, %v3154
          %v3156 = vrot.slane %v3148, %v3155
          %v3158 = vunpack.c.l.s4 1934713408
          %v3159 = vunpack.c.0.s8 %v3158
          %v3160 = vlaneseq
          %v3161 = vshrl.u32 %v3160, 7
          %v3162 = vsub.s32 %v3159, %v3161
          %v3163 = vrot.slane %v3149, %v3162
          %v3164 = vcombine.low %v3131, %v3147
          %v3165 = vcombine.high %v3131, %v3147
          %v3167 = vunpack.c.l.s4 1934713408
          %v3168 = vunpack.c.0.s8 %v3167
          %v3169 = vlaneseq
          %v3170 = vshrl.u32 %v3169, 7
          %v3171 = vsub.s32 %v3168, %v3170
          %v3172 = vrot.slane %v3164, %v3171
          %v3174 = vunpack.c.l.s4 1934713408
          %v3175 = vunpack.c.0.s8 %v3174
          %v3176 = vlaneseq
          %v3177 = vshrl.u32 %v3176, 7
          %v3178 = vsub.s32 %v3175, %v3177
          %v3179 = vrot.slane %v3165, %v3178
          %v3180 = vcombine.high %v3156, 0
          %v3181 = vcombine.high %v3163, 0
          %v3182 = vcombine.high %v3172, 0
          %v3183 = vcombine.high %v3179, 0
          %v3184 = vcombine.low %v3018, %v3034
          %v3185 = vcombine.high %v3018, %v3034
          %v3187 = vunpack.c.l.s4 1983009808
          %v3188 = vunpack.c.0.s8 %v3187
          %v3189 = vlaneseq
          %v3190 = vshrl.u32 %v3189, 7
          %v3191 = vsub.s32 %v3188, %v3190
          %v3192 = vrot.slane %v3184, %v3191
          %v3194 = vunpack.c.l.s4 1983009808
          %v3195 = vunpack.c.0.s8 %v3194
          %v3196 = vlaneseq
          %v3197 = vshrl.u32 %v3196, 7
          %v3198 = vsub.s32 %v3195, %v3197
          %v3199 = vrot.slane %v3185, %v3198
          %v3200 = vcombine.low %v3026, %v3042
          %v3201 = vcombine.high %v3026, %v3042
          %v3203 = vunpack.c.l.s4 1983009808
          %v3204 = vunpack.c.0.s8 %v3203
          %v3205 = vlaneseq
          %v3206 = vshrl.u32 %v3205, 7
          %v3207 = vsub.s32 %v3204, %v3206
          %v3208 = vrot.slane %v3200, %v3207
          %v3210 = vunpack.c.l.s4 1983009808
          %v3211 = vunpack.c.0.s8 %v3210
          %v3212 = vlaneseq
          %v3213 = vshrl.u32 %v3212, 7
          %v3214 = vsub.s32 %v3211, %v3213
          %v3215 = vrot.slane %v3201, %v3214
          %v3216 = vcombine.low %v3192, %v3208
          %v3217 = vcombine.high %v3192, %v3208
          %v3219 = vunpack.c.l.s4 1934713408
          %v3220 = vunpack.c.0.s8 %v3219
          %v3221 = vlaneseq
          %v3222 = vshrl.u32 %v3221, 7
          %v3223 = vsub.s32 %v3220, %v3222
          %v3224 = vrot.slane %v3216, %v3223
          %v3226 = vunpack.c.l.s4 1934713408
          %v3227 = vunpack.c.0.s8 %v3226
          %v3228 = vlaneseq
          %v3229 = vshrl.u32 %v3228, 7
          %v3230 = vsub.s32 %v3227, %v3229
          %v3231 = vrot.slane %v3217, %v3230
          %v3232 = vcombine.low %v3199, %v3215
          %v3233 = vcombine.high %v3199, %v3215
          %v3235 = vunpack.c.l.s4 1934713408
          %v3236 = vunpack.c.0.s8 %v3235
          %v3237 = vlaneseq
          %v3238 = vshrl.u32 %v3237, 7
          %v3239 = vsub.s32 %v3236, %v3238
          %v3240 = vrot.slane %v3232, %v3239
          %v3242 = vunpack.c.l.s4 1934713408
          %v3243 = vunpack.c.0.s8 %v3242
          %v3244 = vlaneseq
          %v3245 = vshrl.u32 %v3244, 7
          %v3246 = vsub.s32 %v3243, %v3245
          %v3247 = vrot.slane %v3233, %v3246
          %v3248 = vcombine.high %v3224, 0
          %v3249 = vcombine.high %v3231, 0
          %v3250 = vcombine.high %v3240, 0
          %v3251 = vcombine.high %v3247, 0
          %v3252 = vcombine.low %v3022, %v3038
          %v3253 = vcombine.high %v3022, %v3038
          %v3255 = vunpack.c.l.s4 1983009808
          %v3256 = vunpack.c.0.s8 %v3255
          %v3257 = vlaneseq
          %v3258 = vshrl.u32 %v3257, 7
          %v3259 = vsub.s32 %v3256, %v3258
          %v3260 = vrot.slane %v3252, %v3259
          %v3262 = vunpack.c.l.s4 1983009808
          %v3263 = vunpack.c.0.s8 %v3262
          %v3264 = vlaneseq
          %v3265 = vshrl.u32 %v3264, 7
          %v3266 = vsub.s32 %v3263, %v3265
          %v3267 = vrot.slane %v3253, %v3266
          %v3268 = vcombine.low %v3030, %v3046
          %v3269 = vcombine.high %v3030, %v3046
          %v3271 = vunpack.c.l.s4 1983009808
          %v3272 = vunpack.c.0.s8 %v3271
          %v3273 = vlaneseq
          %v3274 = vshrl.u32 %v3273, 7
          %v3275 = vsub.s32 %v3272, %v3274
          %v3276 = vrot.slane %v3268, %v3275
          %v3278 = vunpack.c.l.s4 1983009808
          %v3279 = vunpack.c.0.s8 %v3278
          %v3280 = vlaneseq
          %v3281 = vshrl.u32 %v3280, 7
          %v3282 = vsub.s32 %v3279, %v3281
          %v3283 = vrot.slane %v3269, %v3282
          %v3284 = vcombine.low %v3260, %v3276
          %v3285 = vcombine.high %v3260, %v3276
          %v3287 = vunpack.c.l.s4 1934713408
          %v3288 = vunpack.c.0.s8 %v3287
          %v3289 = vlaneseq
          %v3290 = vshrl.u32 %v3289, 7
          %v3291 = vsub.s32 %v3288, %v3290
          %v3292 = vrot.slane %v3284, %v3291
          %v3294 = vunpack.c.l.s4 1934713408
          %v3295 = vunpack.c.0.s8 %v3294
          %v3296 = vlaneseq
          %v3297 = vshrl.u32 %v3296, 7
          %v3298 = vsub.s32 %v3295, %v3297
          %v3299 = vrot.slane %v3285, %v3298
          %v3300 = vcombine.low %v3267, %v3283
          %v3301 = vcombine.high %v3267, %v3283
          %v3303 = vunpack.c.l.s4 1934713408
          %v3304 = vunpack.c.0.s8 %v3303
          %v3305 = vlaneseq
          %v3306 = vshrl.u32 %v3305, 7
          %v3307 = vsub.s32 %v3304, %v3306
          %v3308 = vrot.slane %v3300, %v3307
          %v3310 = vunpack.c.l.s4 1934713408
          %v3311 = vunpack.c.0.s8 %v3310
          %v3312 = vlaneseq
          %v3313 = vshrl.u32 %v3312, 7
          %v3314 = vsub.s32 %v3311, %v3313
          %v3315 = vrot.slane %v3301, %v3314
          %v3316 = vcombine.high %v3292, 0
          %v3317 = vcombine.high %v3299, 0
          %v3318 = vcombine.high %v3308, 0
          %v3319 = vcombine.high %v3315, 0
          %3320 = vxpose.xlu0.c.b16.start [1/8] %v3088, 128
          %3321 = vxpose.xlu0.c.b16.cont [2/8] 0, 128
          %3322 = vxpose.xlu0.c.b16.cont [3/8] 0, 128
          %3323 = vxpose.xlu0.c.b16.cont [4/8] 0, 128
          %3324 = vxpose.xlu0.c.b16.cont [5/8] 0, 128
          %3325 = vxpose.xlu0.c.b16.cont [6/8] 0, 128
          %3326 = vxpose.xlu0.c.b16.cont [7/8] 0, 128
          %3327 = vxpose.xlu0.c.b16.end [8/8] 0, 128
          %v3328 = vpop.trf.xlu0
          %v3329 = vpop.trf.xlu0
          %v3330 = vpop.trf.xlu0
          %v3331 = vpop.trf.xlu0
          %v3332 = vpop.trf.xlu0
          %v3333 = vpop.trf.xlu0
          %v3334 = vpop.trf.xlu0
          %v3335 = vpop.trf.xlu0
          %3336 = vxpose.xlu0.c.b16.start [1/8] %v3156, 128
          %3337 = vxpose.xlu0.c.b16.cont [2/8] 0, 128
          %3338 = vxpose.xlu0.c.b16.cont [3/8] 0, 128
          %3339 = vxpose.xlu0.c.b16.cont [4/8] 0, 128
          %3340 = vxpose.xlu0.c.b16.cont [5/8] 0, 128
          %3341 = vxpose.xlu0.c.b16.cont [6/8] 0, 128
          %3342 = vxpose.xlu0.c.b16.cont [7/8] 0, 128
          %3343 = vxpose.xlu0.c.b16.end [8/8] 0, 128
          %v3344 = vpop.trf.xlu0
          %v3345 = vpop.trf.xlu0
          %v3346 = vpop.trf.xlu0
          %v3347 = vpop.trf.xlu0
          %v3348 = vpop.trf.xlu0
          %v3349 = vpop.trf.xlu0
          %v3350 = vpop.trf.xlu0
          %v3351 = vpop.trf.xlu0
          %3352 = vxpose.xlu0.c.b16.start [1/8] %v3112, 128
          %3353 = vxpose.xlu0.c.b16.cont [2/8] 0, 128
          %3354 = vxpose.xlu0.c.b16.cont [3/8] 0, 128
          %3355 = vxpose.xlu0.c.b16.cont [4/8] 0, 128
          %3356 = vxpose.xlu0.c.b16.cont [5/8] 0, 128
          %3357 = vxpose.xlu0.c.b16.cont [6/8] 0, 128
          %3358 = vxpose.xlu0.c.b16.cont [7/8] 0, 128
          %3359 = vxpose.xlu0.c.b16.end [8/8] 0, 128
          %v3360 = vpop.trf.xlu0
          %v3361 = vpop.trf.xlu0
          %v3362 = vpop.trf.xlu0
          %v3363 = vpop.trf.xlu0
          %v3364 = vpop.trf.xlu0
          %v3365 = vpop.trf.xlu0
          %v3366 = vpop.trf.xlu0
          %v3367 = vpop.trf.xlu0
          %3368 = vxpose.xlu0.c.b16.start [1/8] %v3180, 128
          %3369 = vxpose.xlu0.c.b16.cont [2/8] 0, 128
          %3370 = vxpose.xlu0.c.b16.cont [3/8] 0, 128
          %3371 = vxpose.xlu0.c.b16.cont [4/8] 0, 128
          %3372 = vxpose.xlu0.c.b16.cont [5/8] 0, 128
          %3373 = vxpose.xlu0.c.b16.cont [6/8] 0, 128
          %3374 = vxpose.xlu0.c.b16.cont [7/8] 0, 128
          %3375 = vxpose.xlu0.c.b16.end [8/8] 0, 128
          %v3376 = vpop.trf.xlu0
          %v3377 = vpop.trf.xlu0
          %v3378 = vpop.trf.xlu0
          %v3379 = vpop.trf.xlu0
          %v3380 = vpop.trf.xlu0
          %v3381 = vpop.trf.xlu0
          %v3382 = vpop.trf.xlu0
          %v3383 = vpop.trf.xlu0
          %3384 = vxpose.xlu0.c.b16.start [1/8] %v3095, 128
          %3385 = vxpose.xlu0.c.b16.cont [2/8] 0, 128
          %3386 = vxpose.xlu0.c.b16.cont [3/8] 0, 128
          %3387 = vxpose.xlu0.c.b16.cont [4/8] 0, 128
          %3388 = vxpose.xlu0.c.b16.cont [5/8] 0, 128
          %3389 = vxpose.xlu0.c.b16.cont [6/8] 0, 128
          %3390 = vxpose.xlu0.c.b16.cont [7/8] 0, 128
          %3391 = vxpose.xlu0.c.b16.end [8/8] 0, 128
          %v3392 = vpop.trf.xlu0
          %v3393 = vpop.trf.xlu0
          %v3394 = vpop.trf.xlu0
          %v3395 = vpop.trf.xlu0
          %v3396 = vpop.trf.xlu0
          %v3397 = vpop.trf.xlu0
          %v3398 = vpop.trf.xlu0
          %v3399 = vpop.trf.xlu0
          %3400 = vxpose.xlu0.c.b16.start [1/8] %v3163, 128
          %3401 = vxpose.xlu0.c.b16.cont [2/8] 0, 128
          %3402 = vxpose.xlu0.c.b16.cont [3/8] 0, 128
          %3403 = vxpose.xlu0.c.b16.cont [4/8] 0, 128
          %3404 = vxpose.xlu0.c.b16.cont [5/8] 0, 128
          %3405 = vxpose.xlu0.c.b16.cont [6/8] 0, 128
          %3406 = vxpose.xlu0.c.b16.cont [7/8] 0, 128
          %3407 = vxpose.xlu0.c.b16.end [8/8] 0, 128
          %v3408 = vpop.trf.xlu0
          %v3409 = vpop.trf.xlu0
          %v3410 = vpop.trf.xlu0
          %v3411 = vpop.trf.xlu0
          %v3412 = vpop.trf.xlu0
          %v3413 = vpop.trf.xlu0
          %v3414 = vpop.trf.xlu0
          %v3415 = vpop.trf.xlu0
          %3416 = vxpose.xlu0.c.b16.start [1/8] %v3113, 128
          %3417 = vxpose.xlu0.c.b16.cont [2/8] 0, 128
          %3418 = vxpose.xlu0.c.b16.cont [3/8] 0, 128
          %3419 = vxpose.xlu0.c.b16.cont [4/8] 0, 128
          %3420 = vxpose.xlu0.c.b16.cont [5/8] 0, 128
          %3421 = vxpose.xlu0.c.b16.cont [6/8] 0, 128
          %3422 = vxpose.xlu0.c.b16.cont [7/8] 0, 128
          %3423 = vxpose.xlu0.c.b16.end [8/8] 0, 128
          %v3424 = vpop.trf.xlu0
          %v3425 = vpop.trf.xlu0
          %v3426 = vpop.trf.xlu0
          %v3427 = vpop.trf.xlu0
          %v3428 = vpop.trf.xlu0
          %v3429 = vpop.trf.xlu0
          %v3430 = vpop.trf.xlu0
          %v3431 = vpop.trf.xlu0
          %3432 = vxpose.xlu0.c.b16.start [1/8] %v3181, 128
          %3433 = vxpose.xlu0.c.b16.cont [2/8] 0, 128
          %3434 = vxpose.xlu0.c.b16.cont [3/8] 0, 128
          %3435 = vxpose.xlu0.c.b16.cont [4/8] 0, 128
          %3436 = vxpose.xlu0.c.b16.cont [5/8] 0, 128
          %3437 = vxpose.xlu0.c.b16.cont [6/8] 0, 128
          %3438 = vxpose.xlu0.c.b16.cont [7/8] 0, 128
          %3439 = vxpose.xlu0.c.b16.end [8/8] 0, 128
          %v3440 = vpop.trf.xlu0
          %v3441 = vpop.trf.xlu0
          %v3442 = vpop.trf.xlu0
          %v3443 = vpop.trf.xlu0
          %v3444 = vpop.trf.xlu0
          %v3445 = vpop.trf.xlu0
          %v3446 = vpop.trf.xlu0
          %v3447 = vpop.trf.xlu0
          %3448 = vxpose.xlu0.c.b16.start [1/8] %v3104, 128
          %3449 = vxpose.xlu0.c.b16.cont [2/8] 0, 128
          %3450 = vxpose.xlu0.c.b16.cont [3/8] 0, 128
          %3451 = vxpose.xlu0.c.b16.cont [4/8] 0, 128
          %3452 = vxpose.xlu0.c.b16.cont [5/8] 0, 128
          %3453 = vxpose.xlu0.c.b16.cont [6/8] 0, 128
          %3454 = vxpose.xlu0.c.b16.cont [7/8] 0, 128
          %3455 = vxpose.xlu0.c.b16.end [8/8] 0, 128
          %v3456 = vpop.trf.xlu0
          %v3457 = vpop.trf.xlu0
          %v3458 = vpop.trf.xlu0
          %v3459 = vpop.trf.xlu0
          %v3460 = vpop.trf.xlu0
          %v3461 = vpop.trf.xlu0
          %v3462 = vpop.trf.xlu0
          %v3463 = vpop.trf.xlu0
          %3464 = vxpose.xlu0.c.b16.start [1/8] %v3172, 128
          %3465 = vxpose.xlu0.c.b16.cont [2/8] 0, 128
          %3466 = vxpose.xlu0.c.b16.cont [3/8] 0, 128
          %3467 = vxpose.xlu0.c.b16.cont [4/8] 0, 128
          %3468 = vxpose.xlu0.c.b16.cont [5/8] 0, 128
          %3469 = vxpose.xlu0.c.b16.cont [6/8] 0, 128
          %3470 = vxpose.xlu0.c.b16.cont [7/8] 0, 128
          %3471 = vxpose.xlu0.c.b16.end [8/8] 0, 128
          %v3472 = vpop.trf.xlu0
          %v3473 = vpop.trf.xlu0
          %v3474 = vpop.trf.xlu0
          %v3475 = vpop.trf.xlu0
          %v3476 = vpop.trf.xlu0
          %v3477 = vpop.trf.xlu0
          %v3478 = vpop.trf.xlu0
          %v3479 = vpop.trf.xlu0
          %3480 = vxpose.xlu0.c.b16.start [1/8] %v3114, 128
          %3481 = vxpose.xlu0.c.b16.cont [2/8] 0, 128
          %3482 = vxpose.xlu0.c.b16.cont [3/8] 0, 128
          %3483 = vxpose.xlu0.c.b16.cont [4/8] 0, 128
          %3484 = vxpose.xlu0.c.b16.cont [5/8] 0, 128
          %3485 = vxpose.xlu0.c.b16.cont [6/8] 0, 128
          %3486 = vxpose.xlu0.c.b16.cont [7/8] 0, 128
          %3487 = vxpose.xlu0.c.b16.end [8/8] 0, 128
          %v3488 = vpop.trf.xlu0
          %v3489 = vpop.trf.xlu0
          %v3490 = vpop.trf.xlu0
          %v3491 = vpop.trf.xlu0
          %v3492 = vpop.trf.xlu0
          %v3493 = vpop.trf.xlu0
          %v3494 = vpop.trf.xlu0
          %v3495 = vpop.trf.xlu0
          %3496 = vxpose.xlu0.c.b16.start [1/8] %v3182, 128
          %3497 = vxpose.xlu0.c.b16.cont [2/8] 0, 128
          %3498 = vxpose.xlu0.c.b16.cont [3/8] 0, 128
          %3499 = vxpose.xlu0.c.b16.cont [4/8] 0, 128
          %3500 = vxpose.xlu0.c.b16.cont [5/8] 0, 128
          %3501 = vxpose.xlu0.c.b16.cont [6/8] 0, 128
          %3502 = vxpose.xlu0.c.b16.cont [7/8] 0, 128
          %3503 = vxpose.xlu0.c.b16.end [8/8] 0, 128
          %v3504 = vpop.trf.xlu0
          %v3505 = vpop.trf.xlu0
          %v3506 = vpop.trf.xlu0
          %v3507 = vpop.trf.xlu0
          %v3508 = vpop.trf.xlu0
          %v3509 = vpop.trf.xlu0
          %v3510 = vpop.trf.xlu0
          %v3511 = vpop.trf.xlu0
          %3512 = vxpose.xlu0.c.b16.start [1/8] %v3111, 128
          %3513 = vxpose.xlu0.c.b16.cont [2/8] 0, 128
          %3514 = vxpose.xlu0.c.b16.cont [3/8] 0, 128
          %3515 = vxpose.xlu0.c.b16.cont [4/8] 0, 128
          %3516 = vxpose.xlu0.c.b16.cont [5/8] 0, 128
          %3517 = vxpose.xlu0.c.b16.cont [6/8] 0, 128
          %3518 = vxpose.xlu0.c.b16.cont [7/8] 0, 128
          %3519 = vxpose.xlu0.c.b16.end [8/8] 0, 128
          %v3520 = vpop.trf.xlu0
          %v3521 = vpop.trf.xlu0
          %v3522 = vpop.trf.xlu0
          %v3523 = vpop.trf.xlu0
          %v3524 = vpop.trf.xlu0
          %v3525 = vpop.trf.xlu0
          %v3526 = vpop.trf.xlu0
          %v3527 = vpop.trf.xlu0
          %3528 = vxpose.xlu0.c.b16.start [1/8] %v3179, 128
          %3529 = vxpose.xlu0.c.b16.cont [2/8] 0, 128
          %3530 = vxpose.xlu0.c.b16.cont [3/8] 0, 128
          %3531 = vxpose.xlu0.c.b16.cont [4/8] 0, 128
          %3532 = vxpose.xlu0.c.b16.cont [5/8] 0, 128
          %3533 = vxpose.xlu0.c.b16.cont [6/8] 0, 128
          %3534 = vxpose.xlu0.c.b16.cont [7/8] 0, 128
          %3535 = vxpose.xlu0.c.b16.end [8/8] 0, 128
          %v3536 = vpop.trf.xlu0
          %v3537 = vpop.trf.xlu0
          %v3538 = vpop.trf.xlu0
          %v3539 = vpop.trf.xlu0
          %v3540 = vpop.trf.xlu0
          %v3541 = vpop.trf.xlu0
          %v3542 = vpop.trf.xlu0
          %v3543 = vpop.trf.xlu0
          %3544 = vxpose.xlu0.c.b16.start [1/8] %v3115, 128
          %3545 = vxpose.xlu0.c.b16.cont [2/8] 0, 128
          %3546 = vxpose.xlu0.c.b16.cont [3/8] 0, 128
          %3547 = vxpose.xlu0.c.b16.cont [4/8] 0, 128
          %3548 = vxpose.xlu0.c.b16.cont [5/8] 0, 128
          %3549 = vxpose.xlu0.c.b16.cont [6/8] 0, 128
          %3550 = vxpose.xlu0.c.b16.cont [7/8] 0, 128
          %3551 = vxpose.xlu0.c.b16.end [8/8] 0, 128
          %v3552 = vpop.trf.xlu0
          %v3553 = vpop.trf.xlu0
          %v3554 = vpop.trf.xlu0
          %v3555 = vpop.trf.xlu0
          %v3556 = vpop.trf.xlu0
          %v3557 = vpop.trf.xlu0
          %v3558 = vpop.trf.xlu0
          %v3559 = vpop.trf.xlu0
          %3560 = vxpose.xlu0.c.b16.start [1/8] %v3183, 128
          %3561 = vxpose.xlu0.c.b16.cont [2/8] 0, 128
          %3562 = vxpose.xlu0.c.b16.cont [3/8] 0, 128
          %3563 = vxpose.xlu0.c.b16.cont [4/8] 0, 128
          %3564 = vxpose.xlu0.c.b16.cont [5/8] 0, 128
          %3565 = vxpose.xlu0.c.b16.cont [6/8] 0, 128
          %3566 = vxpose.xlu0.c.b16.cont [7/8] 0, 128
          %3567 = vxpose.xlu0.c.b16.end [8/8] 0, 128
          %v3568 = vpop.trf.xlu0
          %v3569 = vpop.trf.xlu0
          %v3570 = vpop.trf.xlu0
          %v3571 = vpop.trf.xlu0
          %v3572 = vpop.trf.xlu0
          %v3573 = vpop.trf.xlu0
          %v3574 = vpop.trf.xlu0
          %v3575 = vpop.trf.xlu0
          %3576 = vxpose.xlu0.c.b16.start [1/8] %v3224, 128
          %3577 = vxpose.xlu0.c.b16.cont [2/8] 0, 128
          %3578 = vxpose.xlu0.c.b16.cont [3/8] 0, 128
          %3579 = vxpose.xlu0.c.b16.cont [4/8] 0, 128
          %3580 = vxpose.xlu0.c.b16.cont [5/8] 0, 128
          %3581 = vxpose.xlu0.c.b16.cont [6/8] 0, 128
          %3582 = vxpose.xlu0.c.b16.cont [7/8] 0, 128
          %3583 = vxpose.xlu0.c.b16.end [8/8] 0, 128
          %v3584 = vpop.trf.xlu0
          %v3585 = vpop.trf.xlu0
          %v3586 = vpop.trf.xlu0
          %v3587 = vpop.trf.xlu0
          %v3588 = vpop.trf.xlu0
          %v3589 = vpop.trf.xlu0
          %v3590 = vpop.trf.xlu0
          %v3591 = vpop.trf.xlu0
          %3592 = vxpose.xlu0.c.b16.start [1/8] %v3292, 128
          %3593 = vxpose.xlu0.c.b16.cont [2/8] 0, 128
          %3594 = vxpose.xlu0.c.b16.cont [3/8] 0, 128
          %3595 = vxpose.xlu0.c.b16.cont [4/8] 0, 128
          %3596 = vxpose.xlu0.c.b16.cont [5/8] 0, 128
          %3597 = vxpose.xlu0.c.b16.cont [6/8] 0, 128
          %3598 = vxpose.xlu0.c.b16.cont [7/8] 0, 128
          %3599 = vxpose.xlu0.c.b16.end [8/8] 0, 128
          %v3600 = vpop.trf.xlu0
          %v3601 = vpop.trf.xlu0
          %v3602 = vpop.trf.xlu0
          %v3603 = vpop.trf.xlu0
          %v3604 = vpop.trf.xlu0
          %v3605 = vpop.trf.xlu0
          %v3606 = vpop.trf.xlu0
          %v3607 = vpop.trf.xlu0
          %3608 = vxpose.xlu0.c.b16.start [1/8] %v3248, 128
          %3609 = vxpose.xlu0.c.b16.cont [2/8] 0, 128
          %3610 = vxpose.xlu0.c.b16.cont [3/8] 0, 128
          %3611 = vxpose.xlu0.c.b16.cont [4/8] 0, 128
          %3612 = vxpose.xlu0.c.b16.cont [5/8] 0, 128
          %3613 = vxpose.xlu0.c.b16.cont [6/8] 0, 128
          %3614 = vxpose.xlu0.c.b16.cont [7/8] 0, 128
          %3615 = vxpose.xlu0.c.b16.end [8/8] 0, 128
          %v3616 = vpop.trf.xlu0
          %v3617 = vpop.trf.xlu0
          %v3618 = vpop.trf.xlu0
          %v3619 = vpop.trf.xlu0
          %v3620 = vpop.trf.xlu0
          %v3621 = vpop.trf.xlu0
          %v3622 = vpop.trf.xlu0
          %v3623 = vpop.trf.xlu0
          %3624 = vxpose.xlu0.c.b16.start [1/8] %v3316, 128
          %3625 = vxpose.xlu0.c.b16.cont [2/8] 0, 128
          %3626 = vxpose.xlu0.c.b16.cont [3/8] 0, 128
          %3627 = vxpose.xlu0.c.b16.cont [4/8] 0, 128
          %3628 = vxpose.xlu0.c.b16.cont [5/8] 0, 128
          %3629 = vxpose.xlu0.c.b16.cont [6/8] 0, 128
          %3630 = vxpose.xlu0.c.b16.cont [7/8] 0, 128
          %3631 = vxpose.xlu0.c.b16.end [8/8] 0, 128
          %v3632 = vpop.trf.xlu0
          %v3633 = vpop.trf.xlu0
          %v3634 = vpop.trf.xlu0
          %v3635 = vpop.trf.xlu0
          %v3636 = vpop.trf.xlu0
          %v3637 = vpop.trf.xlu0
          %v3638 = vpop.trf.xlu0
          %v3639 = vpop.trf.xlu0
          %3640 = vxpose.xlu0.c.b16.start [1/8] %v3231, 128
          %3641 = vxpose.xlu0.c.b16.cont [2/8] 0, 128
          %3642 = vxpose.xlu0.c.b16.cont [3/8] 0, 128
          %3643 = vxpose.xlu0.c.b16.cont [4/8] 0, 128
          %3644 = vxpose.xlu0.c.b16.cont [5/8] 0, 128
          %3645 = vxpose.xlu0.c.b16.cont [6/8] 0, 128
          %3646 = vxpose.xlu0.c.b16.cont [7/8] 0, 128
          %3647 = vxpose.xlu0.c.b16.end [8/8] 0, 128
          %v3648 = vpop.trf.xlu0
          %v3649 = vpop.trf.xlu0
          %v3650 = vpop.trf.xlu0
          %v3651 = vpop.trf.xlu0
          %v3652 = vpop.trf.xlu0
          %v3653 = vpop.trf.xlu0
          %v3654 = vpop.trf.xlu0
          %v3655 = vpop.trf.xlu0
          %3656 = vxpose.xlu0.c.b16.start [1/8] %v3299, 128
          %3657 = vxpose.xlu0.c.b16.cont [2/8] 0, 128
          %3658 = vxpose.xlu0.c.b16.cont [3/8] 0, 128
          %3659 = vxpose.xlu0.c.b16.cont [4/8] 0, 128
          %3660 = vxpose.xlu0.c.b16.cont [5/8] 0, 128
          %3661 = vxpose.xlu0.c.b16.cont [6/8] 0, 128
          %3662 = vxpose.xlu0.c.b16.cont [7/8] 0, 128
          %3663 = vxpose.xlu0.c.b16.end [8/8] 0, 128
          %v3664 = vpop.trf.xlu0
          %v3665 = vpop.trf.xlu0
          %v3666 = vpop.trf.xlu0
          %v3667 = vpop.trf.xlu0
          %v3668 = vpop.trf.xlu0
          %v3669 = vpop.trf.xlu0
          %v3670 = vpop.trf.xlu0
          %v3671 = vpop.trf.xlu0
          %3672 = vxpose.xlu0.c.b16.start [1/8] %v3249, 128
          %3673 = vxpose.xlu0.c.b16.cont [2/8] 0, 128
          %3674 = vxpose.xlu0.c.b16.cont [3/8] 0, 128
          %3675 = vxpose.xlu0.c.b16.cont [4/8] 0, 128
          %3676 = vxpose.xlu0.c.b16.cont [5/8] 0, 128
          %3677 = vxpose.xlu0.c.b16.cont [6/8] 0, 128
          %3678 = vxpose.xlu0.c.b16.cont [7/8] 0, 128
          %3679 = vxpose.xlu0.c.b16.end [8/8] 0, 128
          %v3680 = vpop.trf.xlu0
          %v3681 = vpop.trf.xlu0
          %v3682 = vpop.trf.xlu0
          %v3683 = vpop.trf.xlu0
          %v3684 = vpop.trf.xlu0
          %v3685 = vpop.trf.xlu0
          %v3686 = vpop.trf.xlu0
          %v3687 = vpop.trf.xlu0
          %3688 = vxpose.xlu0.c.b16.start [1/8] %v3317, 128
          %3689 = vxpose.xlu0.c.b16.cont [2/8] 0, 128
          %3690 = vxpose.xlu0.c.b16.cont [3/8] 0, 128
          %3691 = vxpose.xlu0.c.b16.cont [4/8] 0, 128
          %3692 = vxpose.xlu0.c.b16.cont [5/8] 0, 128
          %3693 = vxpose.xlu0.c.b16.cont [6/8] 0, 128
          %3694 = vxpose.xlu0.c.b16.cont [7/8] 0, 128
          %3695 = vxpose.xlu0.c.b16.end [8/8] 0, 128
          %v3696 = vpop.trf.xlu0
          %v3697 = vpop.trf.xlu0
          %v3698 = vpop.trf.xlu0
          %v3699 = vpop.trf.xlu0
          %v3700 = vpop.trf.xlu0
          %v3701 = vpop.trf.xlu0
          %v3702 = vpop.trf.xlu0
          %v3703 = vpop.trf.xlu0
          %3704 = vxpose.xlu0.c.b16.start [1/8] %v3240, 128
          %3705 = vxpose.xlu0.c.b16.cont [2/8] 0, 128
          %3706 = vxpose.xlu0.c.b16.cont [3/8] 0, 128
          %3707 = vxpose.xlu0.c.b16.cont [4/8] 0, 128
          %3708 = vxpose.xlu0.c.b16.cont [5/8] 0, 128
          %3709 = vxpose.xlu0.c.b16.cont [6/8] 0, 128
          %3710 = vxpose.xlu0.c.b16.cont [7/8] 0, 128
          %3711 = vxpose.xlu0.c.b16.end [8/8] 0, 128
          %v3712 = vpop.trf.xlu0
          %v3713 = vpop.trf.xlu0
          %v3714 = vpop.trf.xlu0
          %v3715 = vpop.trf.xlu0
          %v3716 = vpop.trf.xlu0
          %v3717 = vpop.trf.xlu0
          %v3718 = vpop.trf.xlu0
          %v3719 = vpop.trf.xlu0
          %3720 = vxpose.xlu0.c.b16.start [1/8] %v3308, 128
          %3721 = vxpose.xlu0.c.b16.cont [2/8] 0, 128
          %3722 = vxpose.xlu0.c.b16.cont [3/8] 0, 128
          %3723 = vxpose.xlu0.c.b16.cont [4/8] 0, 128
          %3724 = vxpose.xlu0.c.b16.cont [5/8] 0, 128
          %3725 = vxpose.xlu0.c.b16.cont [6/8] 0, 128
          %3726 = vxpose.xlu0.c.b16.cont [7/8] 0, 128
          %3727 = vxpose.xlu0.c.b16.end [8/8] 0, 128
          %v3728 = vpop.trf.xlu0
          %v3729 = vpop.trf.xlu0
          %v3730 = vpop.trf.xlu0
          %v3731 = vpop.trf.xlu0
          %v3732 = vpop.trf.xlu0
          %v3733 = vpop.trf.xlu0
          %v3734 = vpop.trf.xlu0
          %v3735 = vpop.trf.xlu0
          %3736 = vxpose.xlu0.c.b16.start [1/8] %v3250, 128
          %3737 = vxpose.xlu0.c.b16.cont [2/8] 0, 128
          %3738 = vxpose.xlu0.c.b16.cont [3/8] 0, 128
          %3739 = vxpose.xlu0.c.b16.cont [4/8] 0, 128
          %3740 = vxpose.xlu0.c.b16.cont [5/8] 0, 128
          %3741 = vxpose.xlu0.c.b16.cont [6/8] 0, 128
          %3742 = vxpose.xlu0.c.b16.cont [7/8] 0, 128
          %3743 = vxpose.xlu0.c.b16.end [8/8] 0, 128
          %v3744 = vpop.trf.xlu0
          %v3745 = vpop.trf.xlu0
          %v3746 = vpop.trf.xlu0
          %v3747 = vpop.trf.xlu0
          %v3748 = vpop.trf.xlu0
          %v3749 = vpop.trf.xlu0
          %v3750 = vpop.trf.xlu0
          %v3751 = vpop.trf.xlu0
          %3752 = vxpose.xlu0.c.b16.start [1/8] %v3318, 128
          %3753 = vxpose.xlu0.c.b16.cont [2/8] 0, 128
          %3754 = vxpose.xlu0.c.b16.cont [3/8] 0, 128
          %3755 = vxpose.xlu0.c.b16.cont [4/8] 0, 128
          %3756 = vxpose.xlu0.c.b16.cont [5/8] 0, 128
          %3757 = vxpose.xlu0.c.b16.cont [6/8] 0, 128
          %3758 = vxpose.xlu0.c.b16.cont [7/8] 0, 128
          %3759 = vxpose.xlu0.c.b16.end [8/8] 0, 128
          %v3760 = vpop.trf.xlu0
          %v3761 = vpop.trf.xlu0
          %v3762 = vpop.trf.xlu0
          %v3763 = vpop.trf.xlu0
          %v3764 = vpop.trf.xlu0
          %v3765 = vpop.trf.xlu0
          %v3766 = vpop.trf.xlu0
          %v3767 = vpop.trf.xlu0
          %3768 = vxpose.xlu0.c.b16.start [1/8] %v3247, 128
          %3769 = vxpose.xlu0.c.b16.cont [2/8] 0, 128
          %3770 = vxpose.xlu0.c.b16.cont [3/8] 0, 128
          %3771 = vxpose.xlu0.c.b16.cont [4/8] 0, 128
          %3772 = vxpose.xlu0.c.b16.cont [5/8] 0, 128
          %3773 = vxpose.xlu0.c.b16.cont [6/8] 0, 128
          %3774 = vxpose.xlu0.c.b16.cont [7/8] 0, 128
          %3775 = vxpose.xlu0.c.b16.end [8/8] 0, 128
          %v3776 = vpop.trf.xlu0
          %v3777 = vpop.trf.xlu0
          %v3778 = vpop.trf.xlu0
          %v3779 = vpop.trf.xlu0
          %v3780 = vpop.trf.xlu0
          %v3781 = vpop.trf.xlu0
          %v3782 = vpop.trf.xlu0
          %v3783 = vpop.trf.xlu0
          %3784 = vxpose.xlu0.c.b16.start [1/8] %v3315, 128
          %3785 = vxpose.xlu0.c.b16.cont [2/8] 0, 128
          %3786 = vxpose.xlu0.c.b16.cont [3/8] 0, 128
          %3787 = vxpose.xlu0.c.b16.cont [4/8] 0, 128
          %3788 = vxpose.xlu0.c.b16.cont [5/8] 0, 128
          %3789 = vxpose.xlu0.c.b16.cont [6/8] 0, 128
          %3790 = vxpose.xlu0.c.b16.cont [7/8] 0, 128
          %3791 = vxpose.xlu0.c.b16.end [8/8] 0, 128
          %v3792 = vpop.trf.xlu0
          %v3793 = vpop.trf.xlu0
          %v3794 = vpop.trf.xlu0
          %v3795 = vpop.trf.xlu0
          %v3796 = vpop.trf.xlu0
          %v3797 = vpop.trf.xlu0
          %v3798 = vpop.trf.xlu0
          %v3799 = vpop.trf.xlu0
          %3800 = vxpose.xlu0.c.b16.start [1/8] %v3251, 128
          %3801 = vxpose.xlu0.c.b16.cont [2/8] 0, 128
          %3802 = vxpose.xlu0.c.b16.cont [3/8] 0, 128
          %3803 = vxpose.xlu0.c.b16.cont [4/8] 0, 128
          %3804 = vxpose.xlu0.c.b16.cont [5/8] 0, 128
          %3805 = vxpose.xlu0.c.b16.cont [6/8] 0, 128
          %3806 = vxpose.xlu0.c.b16.cont [7/8] 0, 128
          %3807 = vxpose.xlu0.c.b16.end [8/8] 0, 128
          %v3808 = vpop.trf.xlu0
          %v3809 = vpop.trf.xlu0
          %v3810 = vpop.trf.xlu0
          %v3811 = vpop.trf.xlu0
          %v3812 = vpop.trf.xlu0
          %v3813 = vpop.trf.xlu0
          %v3814 = vpop.trf.xlu0
          %v3815 = vpop.trf.xlu0
          %3816 = vxpose.xlu0.c.b16.start [1/8] %v3319, 128
          %3817 = vxpose.xlu0.c.b16.cont [2/8] 0, 128
          %3818 = vxpose.xlu0.c.b16.cont [3/8] 0, 128
          %3819 = vxpose.xlu0.c.b16.cont [4/8] 0, 128
          %3820 = vxpose.xlu0.c.b16.cont [5/8] 0, 128
          %3821 = vxpose.xlu0.c.b16.cont [6/8] 0, 128
          %3822 = vxpose.xlu0.c.b16.cont [7/8] 0, 128
          %3823 = vxpose.xlu0.c.b16.end [8/8] 0, 128
          %v3824 = vpop.trf.xlu0
          %v3825 = vpop.trf.xlu0
          %v3826 = vpop.trf.xlu0
          %v3827 = vpop.trf.xlu0
          %v3828 = vpop.trf.xlu0
          %v3829 = vpop.trf.xlu0
          %v3830 = vpop.trf.xlu0
          %v3831 = vpop.trf.xlu0
          %v3832 = vcombine.low %v3328, %v3392
          %v3834 = vunpack.c.l.s4 1983009808
          %v3835 = vunpack.c.0.s8 %v3834
          %v3836 = vlaneseq
          %v3837 = vshrl.u32 %v3836, 7
          %v3838 = vsub.s32 %v3835, %v3837
          %v3839 = vrot.slane %v3832, %v3838
          %v3840 = vcombine.low %v3360, %v3424
          %v3842 = vunpack.c.l.s4 1983009808
          %v3843 = vunpack.c.0.s8 %v3842
          %v3844 = vlaneseq
          %v3845 = vshrl.u32 %v3844, 7
          %v3846 = vsub.s32 %v3843, %v3845
          %v3847 = vrot.slane %v3840, %v3846
          %v3848 = vcombine.low %v3456, %v3520
          %v3850 = vunpack.c.l.s4 1983009808
          %v3851 = vunpack.c.0.s8 %v3850
          %v3852 = vlaneseq
          %v3853 = vshrl.u32 %v3852, 7
          %v3854 = vsub.s32 %v3851, %v3853
          %v3855 = vrot.slane %v3848, %v3854
          %v3856 = vcombine.low %v3488, %v3552
          %v3858 = vunpack.c.l.s4 1983009808
          %v3859 = vunpack.c.0.s8 %v3858
          %v3860 = vlaneseq
          %v3861 = vshrl.u32 %v3860, 7
          %v3862 = vsub.s32 %v3859, %v3861
          %v3863 = vrot.slane %v3856, %v3862
          %v3864 = vcombine.low %v3839, %v3847
          %v3866 = vunpack.c.l.s4 1934713408
          %v3867 = vunpack.c.0.s8 %v3866
          %v3868 = vlaneseq
          %v3869 = vshrl.u32 %v3868, 7
          %v3870 = vsub.s32 %v3867, %v3869
          %v3871 = vrot.slane %v3864, %v3870
          %v3872 = vcombine.low %v3855, %v3863
          %v3874 = vunpack.c.l.s4 1934713408
          %v3875 = vunpack.c.0.s8 %v3874
          %v3876 = vlaneseq
          %v3877 = vshrl.u32 %v3876, 7
          %v3878 = vsub.s32 %v3875, %v3877
          %v3879 = vrot.slane %v3872, %v3878
          %v3880 = vcombine.low %v3871, %v3879
          %v3881 = vcombine.high %v3871, %v3879
          %v3882 = vcombine.low %v3344, %v3408
          %v3884 = vunpack.c.l.s4 1983009808
          %v3885 = vunpack.c.0.s8 %v3884
          %v3886 = vlaneseq
          %v3887 = vshrl.u32 %v3886, 7
          %v3888 = vsub.s32 %v3885, %v3887
          %v3889 = vrot.slane %v3882, %v3888
          %v3890 = vcombine.low %v3376, %v3440
          %v3892 = vunpack.c.l.s4 1983009808
          %v3893 = vunpack.c.0.s8 %v3892
          %v3894 = vlaneseq
          %v3895 = vshrl.u32 %v3894, 7
          %v3896 = vsub.s32 %v3893, %v3895
          %v3897 = vrot.slane %v3890, %v3896
          %v3898 = vcombine.low %v3472, %v3536
          %v3900 = vunpack.c.l.s4 1983009808
          %v3901 = vunpack.c.0.s8 %v3900
          %v3902 = vlaneseq
          %v3903 = vshrl.u32 %v3902, 7
          %v3904 = vsub.s32 %v3901, %v3903
          %v3905 = vrot.slane %v3898, %v3904
          %v3906 = vcombine.low %v3504, %v3568
          %v3908 = vunpack.c.l.s4 1983009808
          %v3909 = vunpack.c.0.s8 %v3908
          %v3910 = vlaneseq
          %v3911 = vshrl.u32 %v3910, 7
          %v3912 = vsub.s32 %v3909, %v3911
          %v3913 = vrot.slane %v3906, %v3912
          %v3914 = vcombine.low %v3889, %v3897
          %v3916 = vunpack.c.l.s4 1934713408
          %v3917 = vunpack.c.0.s8 %v3916
          %v3918 = vlaneseq
          %v3919 = vshrl.u32 %v3918, 7
          %v3920 = vsub.s32 %v3917, %v3919
          %v3921 = vrot.slane %v3914, %v3920
          %v3922 = vcombine.low %v3905, %v3913
          %v3924 = vunpack.c.l.s4 1934713408
          %v3925 = vunpack.c.0.s8 %v3924
          %v3926 = vlaneseq
          %v3927 = vshrl.u32 %v3926, 7
          %v3928 = vsub.s32 %v3925, %v3927
          %v3929 = vrot.slane %v3922, %v3928
          %v3930 = vcombine.low %v3921, %v3929
          %v3931 = vcombine.high %v3921, %v3929
          %v3932 = vcombine.low %v3584, %v3648
          %v3934 = vunpack.c.l.s4 1983009808
          %v3935 = vunpack.c.0.s8 %v3934
          %v3936 = vlaneseq
          %v3937 = vshrl.u32 %v3936, 7
          %v3938 = vsub.s32 %v3935, %v3937
          %v3939 = vrot.slane %v3932, %v3938
          %v3940 = vcombine.low %v3616, %v3680
          %v3942 = vunpack.c.l.s4 1983009808
          %v3943 = vunpack.c.0.s8 %v3942
          %v3944 = vlaneseq
          %v3945 = vshrl.u32 %v3944, 7
          %v3946 = vsub.s32 %v3943, %v3945
          %v3947 = vrot.slane %v3940, %v3946
          %v3948 = vcombine.low %v3712, %v3776
          %v3950 = vunpack.c.l.s4 1983009808
          %v3951 = vunpack.c.0.s8 %v3950
          %v3952 = vlaneseq
          %v3953 = vshrl.u32 %v3952, 7
          %v3954 = vsub.s32 %v3951, %v3953
          %v3955 = vrot.slane %v3948, %v3954
          %v3956 = vcombine.low %v3744, %v3808
          %v3958 = vunpack.c.l.s4 1983009808
          %v3959 = vunpack.c.0.s8 %v3958
          %v3960 = vlaneseq
          %v3961 = vshrl.u32 %v3960, 7
          %v3962 = vsub.s32 %v3959, %v3961
          %v3963 = vrot.slane %v3956, %v3962
          %v3964 = vcombine.low %v3939, %v3947
          %v3966 = vunpack.c.l.s4 1934713408
          %v3967 = vunpack.c.0.s8 %v3966
          %v3968 = vlaneseq
          %v3969 = vshrl.u32 %v3968, 7
          %v3970 = vsub.s32 %v3967, %v3969
          %v3971 = vrot.slane %v3964, %v3970
          %v3972 = vcombine.low %v3955, %v3963
          %v3974 = vunpack.c.l.s4 1934713408
          %v3975 = vunpack.c.0.s8 %v3974
          %v3976 = vlaneseq
          %v3977 = vshrl.u32 %v3976, 7
          %v3978 = vsub.s32 %v3975, %v3977
          %v3979 = vrot.slane %v3972, %v3978
          %v3980 = vcombine.low %v3971, %v3979
          %v3981 = vcombine.high %v3971, %v3979
          %v3982 = vcombine.low %v3600, %v3664
          %v3984 = vunpack.c.l.s4 1983009808
          %v3985 = vunpack.c.0.s8 %v3984
          %v3986 = vlaneseq
          %v3987 = vshrl.u32 %v3986, 7
          %v3988 = vsub.s32 %v3985, %v3987
          %v3989 = vrot.slane %v3982, %v3988
          %v3990 = vcombine.low %v3632, %v3696
          %v3992 = vunpack.c.l.s4 1983009808
          %v3993 = vunpack.c.0.s8 %v3992
          %v3994 = vlaneseq
          %v3995 = vshrl.u32 %v3994, 7
          %v3996 = vsub.s32 %v3993, %v3995
          %v3997 = vrot.slane %v3990, %v3996
          %v3998 = vcombine.low %v3728, %v3792
          %v4000 = vunpack.c.l.s4 1983009808
          %v4001 = vunpack.c.0.s8 %v4000
          %v4002 = vlaneseq
          %v4003 = vshrl.u32 %v4002, 7
          %v4004 = vsub.s32 %v4001, %v4003
          %v4005 = vrot.slane %v3998, %v4004
          %v4006 = vcombine.low %v3760, %v3824
          %v4008 = vunpack.c.l.s4 1983009808
          %v4009 = vunpack.c.0.s8 %v4008
          %v4010 = vlaneseq
          %v4011 = vshrl.u32 %v4010, 7
          %v4012 = vsub.s32 %v4009, %v4011
          %v4013 = vrot.slane %v4006, %v4012
          %v4014 = vcombine.low %v3989, %v3997
          %v4016 = vunpack.c.l.s4 1934713408
          %v4017 = vunpack.c.0.s8 %v4016
          %v4018 = vlaneseq
          %v4019 = vshrl.u32 %v4018, 7
          %v4020 = vsub.s32 %v4017, %v4019
          %v4021 = vrot.slane %v4014, %v4020
          %v4022 = vcombine.low %v4005, %v4013
          %v4024 = vunpack.c.l.s4 1934713408
          %v4025 = vunpack.c.0.s8 %v4024
          %v4026 = vlaneseq
          %v4027 = vshrl.u32 %v4026, 7
          %v4028 = vsub.s32 %v4025, %v4027
          %v4029 = vrot.slane %v4022, %v4028
          %v4030 = vcombine.low %v4021, %v4029
          %v4031 = vcombine.high %v4021, %v4029
          %v4034 = vpack.i.b16 %v3930, %v3880
          %v4035 = vshrl.u32 %v3880, 16
          %v4036 = vshrl.u32 %v3930, 16
          %v4037 = vpack.i.b16 %v4036, %v4035
          %v4040 = vpack.i.b16 %v3931, %v3881
          %v4041 = vshrl.u32 %v3881, 16
          %v4042 = vshrl.u32 %v3931, 16
          %v4043 = vpack.i.b16 %v4042, %v4041
          %v4046 = vpack.i.b16 %v4030, %v3980
          %v4047 = vshrl.u32 %v3980, 16
          %v4048 = vshrl.u32 %v4030, 16
          %v4049 = vpack.i.b16 %v4048, %v4047
          %v4052 = vpack.i.b16 %v4031, %v3981
          %v4053 = vshrl.u32 %v3981, 16
          %v4054 = vshrl.u32 %v4031, 16
          %v4055 = vpack.i.b16 %v4054, %v4053
          %v4057 = vsel %vm2807, %v4034, 0
          %v4060 = vsel %vm2807, %v4046, 0
          %v4063 = vsel %vm2807, %v2852, 0
          %4065 = vmatprep.subr.bf16.mxu0 0
          %4066 = vmatpush1.bf16.xpose.msra.mxu0 %v4063
          %4067 = vmatprep.subr.bf16.mxu0 0
          %4068 = vmatpush1.bf16.xpose.msra.mxu0 0
          %4069 = vmatprep.subr.bf16.mxu0 0
          %4070 = vmatpush1.bf16.xpose.msra.mxu0 0
          %4071 = vmatprep.subr.bf16.mxu0 0
          %4072 = vmatpush1.bf16.xpose.msra.mxu0 0
          %4073 = vmatprep.subr.bf16.mxu0 0
          %4074 = vmatpush1.bf16.xpose.msra.mxu0 0
          %4075 = vmatprep.subr.bf16.mxu0 0
          %4076 = vmatpush1.bf16.xpose.msra.mxu0 0
          %4077 = vmatprep.subr.bf16.mxu0 0
          %4078 = vmatpush1.bf16.xpose.msra.mxu0 0
          %4079 = vmatprep.subr.bf16.mxu0 0
          %4080 = vmatpush1.bf16.xpose.msra.mxu0 0
          %4081 = vmatprep.subr.bf16.mxu0 0
          %4082 = vmatpush1.bf16.xpose.msra.mxu0 0
          %4083 = vmatprep.subr.bf16.mxu0 0
          %4084 = vmatpush1.bf16.xpose.msra.mxu0 0
          %4085 = vmatprep.subr.bf16.mxu0 0
          %4086 = vmatpush1.bf16.xpose.msra.mxu0 0
          %4087 = vmatprep.subr.bf16.mxu0 0
          %4088 = vmatpush1.bf16.xpose.msra.mxu0 0
          %4089 = vmatprep.subr.bf16.mxu0 0
          %4090 = vmatpush1.bf16.xpose.msra.mxu0 0
          %4091 = vmatprep.subr.bf16.mxu0 0
          %4092 = vmatpush1.bf16.xpose.msra.mxu0 0
          %4093 = vmatprep.subr.bf16.mxu0 0
          %4094 = vmatpush1.bf16.xpose.msra.mxu0 0
          %4095 = vmatprep.subr.bf16.mxu0 0
          %4096 = vmatpush1.bf16.xpose.msra.mxu0 0
          %4097 = vmatprep.mubr.bf16.mxu0 0
          %4098 = vmatmul.mubr.bf16.gmra.mrb[0].mxu0 %v4057
          %v4099 = vpop.f32.mrb[0].mxu0
          %v4100 = vadd.f32 0.0, %v4099
          %v4101 = vpop.f32.mrb[0].mxu0
          %v4102 = vpop.f32.mrb[0].mxu0
          %v4103 = vadd.f32 0.0, %v4102
          %v4104 = vpop.f32.mrb[0].mxu0
          %4105 = vmatprep.mubr.bf16.mxu0 0
          %4106 = vmatmul.mubr.bf16.gmra.mrb[0].mxu0 %v4060
          %v4107 = vpop.f32.mrb[0].mxu0
          %v4108 = vadd.f32 0.0, %v4107
          %v4109 = vpop.f32.mrb[0].mxu0
          %v4110 = vpop.f32.mrb[0].mxu0
          %v4111 = vadd.f32 0.0, %v4110
          %v4112 = vpop.f32.mrb[0].mxu0
          %4113 = vdwg.mxu0
          %v4115 = vsel %vm2807, %v4037, 0
          %v4118 = vsel %vm2807, %v4049, 0
          %v4121 = vsel %vm2807, %v2853, 0
          %4123 = vmatprep.subr.bf16.mxu0 0
          %4124 = vmatpush1.bf16.xpose.msra.mxu0 %v4121
          %4125 = vmatprep.subr.bf16.mxu0 0
          %4126 = vmatpush1.bf16.xpose.msra.mxu0 0
          %4127 = vmatprep.subr.bf16.mxu0 0
          %4128 = vmatpush1.bf16.xpose.msra.mxu0 0
          %4129 = vmatprep.subr.bf16.mxu0 0
          %4130 = vmatpush1.bf16.xpose.msra.mxu0 0
          %4131 = vmatprep.subr.bf16.mxu0 0
          %4132 = vmatpush1.bf16.xpose.msra.mxu0 0
          %4133 = vmatprep.subr.bf16.mxu0 0
          %4134 = vmatpush1.bf16.xpose.msra.mxu0 0
          %4135 = vmatprep.subr.bf16.mxu0 0
          %4136 = vmatpush1.bf16.xpose.msra.mxu0 0
          %4137 = vmatprep.subr.bf16.mxu0 0
          %4138 = vmatpush1.bf16.xpose.msra.mxu0 0
          %4139 = vmatprep.subr.bf16.mxu0 0
          %4140 = vmatpush1.bf16.xpose.msra.mxu0 0
          %4141 = vmatprep.subr.bf16.mxu0 0
          %4142 = vmatpush1.bf16.xpose.msra.mxu0 0
          %4143 = vmatprep.subr.bf16.mxu0 0
          %4144 = vmatpush1.bf16.xpose.msra.mxu0 0
          %4145 = vmatprep.subr.bf16.mxu0 0
          %4146 = vmatpush1.bf16.xpose.msra.mxu0 0
          %4147 = vmatprep.subr.bf16.mxu0 0
          %4148 = vmatpush1.bf16.xpose.msra.mxu0 0
          %4149 = vmatprep.subr.bf16.mxu0 0
          %4150 = vmatpush1.bf16.xpose.msra.mxu0 0
          %4151 = vmatprep.subr.bf16.mxu0 0
          %4152 = vmatpush1.bf16.xpose.msra.mxu0 0
          %4153 = vmatprep.subr.bf16.mxu0 0
          %4154 = vmatpush1.bf16.xpose.msra.mxu0 0
          %4155 = vmatprep.mubr.bf16.mxu0 0
          %4156 = vmatmul.mubr.bf16.gmra.mrb[0].mxu0 %v4115
          %v4157 = vpop.f32.mrb[0].mxu0
          %v4158 = vadd.f32 0.0, %v4157
          %v4159 = vpop.f32.mrb[0].mxu0
          %v4160 = vpop.f32.mrb[0].mxu0
          %v4161 = vadd.f32 0.0, %v4160
          %v4162 = vpop.f32.mrb[0].mxu0
          %4163 = vmatprep.mubr.bf16.mxu0 0
          %4164 = vmatmul.mubr.bf16.gmra.mrb[0].mxu0 %v4118
          %v4165 = vpop.f32.mrb[0].mxu0
          %v4166 = vadd.f32 0.0, %v4165
          %v4167 = vpop.f32.mrb[0].mxu0
          %v4168 = vpop.f32.mrb[0].mxu0
          %v4169 = vadd.f32 0.0, %v4168
          %v4170 = vpop.f32.mrb[0].mxu0
          %4171 = vdwg.mxu0
          %v4173 = vsel %vm2807, %v4040, 0
          %v4176 = vsel %vm2807, %v4052, 0
          %v4179 = vsel %vm2807, %v2854, 0
          %4181 = vmatprep.subr.bf16.mxu0 0
          %4182 = vmatpush1.bf16.xpose.msra.mxu0 %v4179
          %4183 = vmatprep.subr.bf16.mxu0 0
          %4184 = vmatpush1.bf16.xpose.msra.mxu0 0
          %4185 = vmatprep.subr.bf16.mxu0 0
          %4186 = vmatpush1.bf16.xpose.msra.mxu0 0
          %4187 = vmatprep.subr.bf16.mxu0 0
          %4188 = vmatpush1.bf16.xpose.msra.mxu0 0
          %4189 = vmatprep.subr.bf16.mxu0 0
          %4190 = vmatpush1.bf16.xpose.msra.mxu0 0
          %4191 = vmatprep.subr.bf16.mxu0 0
          %4192 = vmatpush1.bf16.xpose.msra.mxu0 0
          %4193 = vmatprep.subr.bf16.mxu0 0
          %4194 = vmatpush1.bf16.xpose.msra.mxu0 0
          %4195 = vmatprep.subr.bf16.mxu0 0
          %4196 = vmatpush1.bf16.xpose.msra.mxu0 0
          %4197 = vmatprep.subr.bf16.mxu0 0
          %4198 = vmatpush1.bf16.xpose.msra.mxu0 0
          %4199 = vmatprep.subr.bf16.mxu0 0
          %4200 = vmatpush1.bf16.xpose.msra.mxu0 0
          %4201 = vmatprep.subr.bf16.mxu0 0
          %4202 = vmatpush1.bf16.xpose.msra.mxu0 0
          %4203 = vmatprep.subr.bf16.mxu0 0
          %4204 = vmatpush1.bf16.xpose.msra.mxu0 0
          %4205 = vmatprep.subr.bf16.mxu0 0
          %4206 = vmatpush1.bf16.xpose.msra.mxu0 0
          %4207 = vmatprep.subr.bf16.mxu0 0
          %4208 = vmatpush1.bf16.xpose.msra.mxu0 0
          %4209 = vmatprep.subr.bf16.mxu0 0
          %4210 = vmatpush1.bf16.xpose.msra.mxu0 0
          %4211 = vmatprep.subr.bf16.mxu0 0
          %4212 = vmatpush1.bf16.xpose.msra.mxu0 0
          %4213 = vmatprep.mubr.bf16.mxu0 0
          %4214 = vmatmul.mubr.bf16.gmra.mrb[0].mxu0 %v4173
          %v4215 = vpop.f32.mrb[0].mxu0
          %v4216 = vadd.f32 0.0, %v4215
          %v4217 = vpop.f32.mrb[0].mxu0
          %v4218 = vpop.f32.mrb[0].mxu0
          %v4219 = vadd.f32 0.0, %v4218
          %v4220 = vpop.f32.mrb[0].mxu0
          %4221 = vmatprep.mubr.bf16.mxu0 0
          %4222 = vmatmul.mubr.bf16.gmra.mrb[0].mxu0 %v4176
          %v4223 = vpop.f32.mrb[0].mxu0
          %v4224 = vadd.f32 0.0, %v4223
          %v4225 = vpop.f32.mrb[0].mxu0
          %v4226 = vpop.f32.mrb[0].mxu0
          %v4227 = vadd.f32 0.0, %v4226
          %v4228 = vpop.f32.mrb[0].mxu0
          %4229 = vdwg.mxu0
          %v4231 = vsel %vm2807, %v4043, 0
          %v4234 = vsel %vm2807, %v4055, 0
          %v4237 = vsel %vm2807, %v2855, 0
          %4239 = vmatprep.subr.bf16.mxu0 0
          %4240 = vmatpush1.bf16.xpose.msra.mxu0 %v4237
          %4241 = vmatprep.subr.bf16.mxu0 0
          %4242 = vmatpush1.bf16.xpose.msra.mxu0 0
          %4243 = vmatprep.subr.bf16.mxu0 0
          %4244 = vmatpush1.bf16.xpose.msra.mxu0 0
          %4245 = vmatprep.subr.bf16.mxu0 0
          %4246 = vmatpush1.bf16.xpose.msra.mxu0 0
          %4247 = vmatprep.subr.bf16.mxu0 0
          %4248 = vmatpush1.bf16.xpose.msra.mxu0 0
          %4249 = vmatprep.subr.bf16.mxu0 0
          %4250 = vmatpush1.bf16.xpose.msra.mxu0 0
          %4251 = vmatprep.subr.bf16.mxu0 0
          %4252 = vmatpush1.bf16.xpose.msra.mxu0 0
          %4253 = vmatprep.subr.bf16.mxu0 0
          %4254 = vmatpush1.bf16.xpose.msra.mxu0 0
          %4255 = vmatprep.subr.bf16.mxu0 0
          %4256 = vmatpush1.bf16.xpose.msra.mxu0 0
          %4257 = vmatprep.subr.bf16.mxu0 0
          %4258 = vmatpush1.bf16.xpose.msra.mxu0 0
          %4259 = vmatprep.subr.bf16.mxu0 0
          %4260 = vmatpush1.bf16.xpose.msra.mxu0 0
          %4261 = vmatprep.subr.bf16.mxu0 0
          %4262 = vmatpush1.bf16.xpose.msra.mxu0 0
          %4263 = vmatprep.subr.bf16.mxu0 0
          %4264 = vmatpush1.bf16.xpose.msra.mxu0 0
          %4265 = vmatprep.subr.bf16.mxu0 0
          %4266 = vmatpush1.bf16.xpose.msra.mxu0 0
          %4267 = vmatprep.subr.bf16.mxu0 0
          %4268 = vmatpush1.bf16.xpose.msra.mxu0 0
          %4269 = vmatprep.subr.bf16.mxu0 0
          %4270 = vmatpush1.bf16.xpose.msra.mxu0 0
          %4271 = vmatprep.mubr.bf16.mxu0 0
          %4272 = vmatmul.mubr.bf16.gmra.mrb[0].mxu0 %v4231
          %v4273 = vpop.f32.mrb[0].mxu0
          %v4274 = vadd.f32 0.0, %v4273
          %v4275 = vpop.f32.mrb[0].mxu0
          %v4276 = vpop.f32.mrb[0].mxu0
          %v4277 = vadd.f32 0.0, %v4276
          %v4278 = vpop.f32.mrb[0].mxu0
          %4279 = vmatprep.mubr.bf16.mxu0 0
          %4280 = vmatmul.mubr.bf16.gmra.mrb[0].mxu0 %v4234
          %v4281 = vpop.f32.mrb[0].mxu0
          %v4282 = vadd.f32 0.0, %v4281
          %v4283 = vpop.f32.mrb[0].mxu0
          %v4284 = vpop.f32.mrb[0].mxu0
          %v4285 = vadd.f32 0.0, %v4284
          %v4286 = vpop.f32.mrb[0].mxu0
          %4287 = vdwg.mxu0
          %4288 = vxpose.xlu0.b32.start [1/16] %v4100, 128
          %4289 = vxpose.xlu0.b32.cont [2/16] %v4103, 128
          %4290 = vxpose.xlu0.b32.cont [3/16] %v4108, 128
          %4291 = vxpose.xlu0.b32.cont [4/16] %v4111, 128
          %4292 = vxpose.xlu0.b32.cont [5/16] 0.0, 128
          %4293 = vxpose.xlu0.b32.cont [6/16] 0.0, 128
          %4294 = vxpose.xlu0.b32.cont [7/16] 0.0, 128
          %4295 = vxpose.xlu0.b32.cont [8/16] 0.0, 128
          %4296 = vxpose.xlu0.b32.cont [9/16] 0.0, 128
          %4297 = vxpose.xlu0.b32.cont [10/16] 0.0, 128
          %4298 = vxpose.xlu0.b32.cont [11/16] 0.0, 128
          %4299 = vxpose.xlu0.b32.cont [12/16] 0.0, 128
          %4300 = vxpose.xlu0.b32.cont [13/16] 0.0, 128
          %4301 = vxpose.xlu0.b32.cont [14/16] 0.0, 128
          %4302 = vxpose.xlu0.b32.cont [15/16] 0.0, 128
          %4303 = vxpose.xlu0.b32.end [16/16] 0.0, 128
          %v4304 = vpop.trf.xlu0
          %v4305 = vpop.trf.xlu0
          %v4306 = vpop.trf.xlu0
          %v4307 = vpop.trf.xlu0
          %v4308 = vpop.trf.xlu0
          %v4309 = vpop.trf.xlu0
          %v4310 = vpop.trf.xlu0
          %v4311 = vpop.trf.xlu0
          %v4312 = vpop.trf.xlu0
          %v4313 = vpop.trf.xlu0
          %v4314 = vpop.trf.xlu0
          %v4315 = vpop.trf.xlu0
          %v4316 = vpop.trf.xlu0
          %v4317 = vpop.trf.xlu0
          %v4318 = vpop.trf.xlu0
          %v4319 = vpop.trf.xlu0
          %4320 = vxpose.xlu0.b32.start [1/16] %v4158, 128
          %4321 = vxpose.xlu0.b32.cont [2/16] %v4161, 128
          %4322 = vxpose.xlu0.b32.cont [3/16] %v4166, 128
          %4323 = vxpose.xlu0.b32.cont [4/16] %v4169, 128
          %4324 = vxpose.xlu0.b32.cont [5/16] 0.0, 128
          %4325 = vxpose.xlu0.b32.cont [6/16] 0.0, 128
          %4326 = vxpose.xlu0.b32.cont [7/16] 0.0, 128
          %4327 = vxpose.xlu0.b32.cont [8/16] 0.0, 128
          %4328 = vxpose.xlu0.b32.cont [9/16] 0.0, 128
          %4329 = vxpose.xlu0.b32.cont [10/16] 0.0, 128
          %4330 = vxpose.xlu0.b32.cont [11/16] 0.0, 128
          %4331 = vxpose.xlu0.b32.cont [12/16] 0.0, 128
          %4332 = vxpose.xlu0.b32.cont [13/16] 0.0, 128
          %4333 = vxpose.xlu0.b32.cont [14/16] 0.0, 128
          %4334 = vxpose.xlu0.b32.cont [15/16] 0.0, 128
          %4335 = vxpose.xlu0.b32.end [16/16] 0.0, 128
          %v4336 = vpop.trf.xlu0
          %v4337 = vpop.trf.xlu0
          %v4338 = vpop.trf.xlu0
          %v4339 = vpop.trf.xlu0
          %v4340 = vpop.trf.xlu0
          %v4341 = vpop.trf.xlu0
          %v4342 = vpop.trf.xlu0
          %v4343 = vpop.trf.xlu0
          %v4344 = vpop.trf.xlu0
          %v4345 = vpop.trf.xlu0
          %v4346 = vpop.trf.xlu0
          %v4347 = vpop.trf.xlu0
          %v4348 = vpop.trf.xlu0
          %v4349 = vpop.trf.xlu0
          %v4350 = vpop.trf.xlu0
          %v4351 = vpop.trf.xlu0
          %4352 = vxpose.xlu0.b32.start [1/16] %v4216, 128
          %4353 = vxpose.xlu0.b32.cont [2/16] %v4219, 128
          %4354 = vxpose.xlu0.b32.cont [3/16] %v4224, 128
          %4355 = vxpose.xlu0.b32.cont [4/16] %v4227, 128
          %4356 = vxpose.xlu0.b32.cont [5/16] 0.0, 128
          %4357 = vxpose.xlu0.b32.cont [6/16] 0.0, 128
          %4358 = vxpose.xlu0.b32.cont [7/16] 0.0, 128
          %4359 = vxpose.xlu0.b32.cont [8/16] 0.0, 128
          %4360 = vxpose.xlu0.b32.cont [9/16] 0.0, 128
          %4361 = vxpose.xlu0.b32.cont [10/16] 0.0, 128
          %4362 = vxpose.xlu0.b32.cont [11/16] 0.0, 128
          %4363 = vxpose.xlu0.b32.cont [12/16] 0.0, 128
          %4364 = vxpose.xlu0.b32.cont [13/16] 0.0, 128
          %4365 = vxpose.xlu0.b32.cont [14/16] 0.0, 128
          %4366 = vxpose.xlu0.b32.cont [15/16] 0.0, 128
          %4367 = vxpose.xlu0.b32.end [16/16] 0.0, 128
          %v4368 = vpop.trf.xlu0
          %v4369 = vpop.trf.xlu0
          %v4370 = vpop.trf.xlu0
          %v4371 = vpop.trf.xlu0
          %v4372 = vpop.trf.xlu0
          %v4373 = vpop.trf.xlu0
          %v4374 = vpop.trf.xlu0
          %v4375 = vpop.trf.xlu0
          %v4376 = vpop.trf.xlu0
          %v4377 = vpop.trf.xlu0
          %v4378 = vpop.trf.xlu0
          %v4379 = vpop.trf.xlu0
          %v4380 = vpop.trf.xlu0
          %v4381 = vpop.trf.xlu0
          %v4382 = vpop.trf.xlu0
          %v4383 = vpop.trf.xlu0
          %4384 = vxpose.xlu0.b32.start [1/16] %v4274, 128
          %4385 = vxpose.xlu0.b32.cont [2/16] %v4277, 128
          %4386 = vxpose.xlu0.b32.cont [3/16] %v4282, 128
          %4387 = vxpose.xlu0.b32.cont [4/16] %v4285, 128
          %4388 = vxpose.xlu0.b32.cont [5/16] 0.0, 128
          %4389 = vxpose.xlu0.b32.cont [6/16] 0.0, 128
          %4390 = vxpose.xlu0.b32.cont [7/16] 0.0, 128
          %4391 = vxpose.xlu0.b32.cont [8/16] 0.0, 128
          %4392 = vxpose.xlu0.b32.cont [9/16] 0.0, 128
          %4393 = vxpose.xlu0.b32.cont [10/16] 0.0, 128
          %4394 = vxpose.xlu0.b32.cont [11/16] 0.0, 128
          %4395 = vxpose.xlu0.b32.cont [12/16] 0.0, 128
          %4396 = vxpose.xlu0.b32.cont [13/16] 0.0, 128
          %4397 = vxpose.xlu0.b32.cont [14/16] 0.0, 128
          %4398 = vxpose.xlu0.b32.cont [15/16] 0.0, 128
          %4399 = vxpose.xlu0.b32.end [16/16] 0.0, 128
          %v4400 = vpop.trf.xlu0
          %v4401 = vpop.trf.xlu0
          %v4402 = vpop.trf.xlu0
          %v4403 = vpop.trf.xlu0
          %v4404 = vpop.trf.xlu0
          %v4405 = vpop.trf.xlu0
          %v4406 = vpop.trf.xlu0
          %v4407 = vpop.trf.xlu0
          %v4408 = vpop.trf.xlu0
          %v4409 = vpop.trf.xlu0
          %v4410 = vpop.trf.xlu0
          %v4411 = vpop.trf.xlu0
          %v4412 = vpop.trf.xlu0
          %v4413 = vpop.trf.xlu0
          %v4414 = vpop.trf.xlu0
          %v4415 = vpop.trf.xlu0
          %v4416 = vcombine.low %v4304, %v4368
          %v4417 = vcombine.high %v4304, %v4368
          %v4419 = vunpack.c.l.s4 1983009808
          %v4420 = vunpack.c.0.s8 %v4419
          %v4421 = vlaneseq
          %v4422 = vshrl.u32 %v4421, 7
          %v4423 = vsub.s32 %v4420, %v4422
          %v4424 = vrot.slane %v4416, %v4423
          %v4426 = vunpack.c.l.s4 1983009808
          %v4427 = vunpack.c.0.s8 %v4426
          %v4428 = vlaneseq
          %v4429 = vshrl.u32 %v4428, 7
          %v4430 = vsub.s32 %v4427, %v4429
          %v4431 = vrot.slane %v4417, %v4430
          %v4432 = vcombine.low %v4336, %v4400
          %v4433 = vcombine.high %v4336, %v4400
          %v4435 = vunpack.c.l.s4 1983009808
          %v4436 = vunpack.c.0.s8 %v4435
          %v4437 = vlaneseq
          %v4438 = vshrl.u32 %v4437, 7
          %v4439 = vsub.s32 %v4436, %v4438
          %v4440 = vrot.slane %v4432, %v4439
          %v4442 = vunpack.c.l.s4 1983009808
          %v4443 = vunpack.c.0.s8 %v4442
          %v4444 = vlaneseq
          %v4445 = vshrl.u32 %v4444, 7
          %v4446 = vsub.s32 %v4443, %v4445
          %v4447 = vrot.slane %v4433, %v4446
          %v4448 = vcombine.low %v4424, %v4440
          %v4449 = vcombine.high %v4424, %v4440
          %v4451 = vunpack.c.l.s4 1934713408
          %v4452 = vunpack.c.0.s8 %v4451
          %v4453 = vlaneseq
          %v4454 = vshrl.u32 %v4453, 7
          %v4455 = vsub.s32 %v4452, %v4454
          %v4456 = vrot.slane %v4448, %v4455
          %v4458 = vunpack.c.l.s4 1934713408
          %v4459 = vunpack.c.0.s8 %v4458
          %v4460 = vlaneseq
          %v4461 = vshrl.u32 %v4460, 7
          %v4462 = vsub.s32 %v4459, %v4461
          %v4463 = vrot.slane %v4449, %v4462
          %v4464 = vcombine.low %v4431, %v4447
          %v4465 = vcombine.high %v4431, %v4447
          %v4467 = vunpack.c.l.s4 1934713408
          %v4468 = vunpack.c.0.s8 %v4467
          %v4469 = vlaneseq
          %v4470 = vshrl.u32 %v4469, 7
          %v4471 = vsub.s32 %v4468, %v4470
          %v4472 = vrot.slane %v4464, %v4471
          %v4474 = vunpack.c.l.s4 1934713408
          %v4475 = vunpack.c.0.s8 %v4474
          %v4476 = vlaneseq
          %v4477 = vshrl.u32 %v4476, 7
          %v4478 = vsub.s32 %v4475, %v4477
          %v4479 = vrot.slane %v4465, %v4478
          %v4480 = vcombine.high %v4456, 0.0
          %v4481 = vcombine.high %v4463, 0.0
          %v4482 = vcombine.high %v4472, 0.0
          %v4483 = vcombine.high %v4479, 0.0
          %v4484 = vcombine.low %v4456, %v4463
          %v4486 = vunpack.c.l.s4 1983009808
          %v4487 = vunpack.c.0.s8 %v4486
          %v4488 = vlaneseq
          %v4489 = vshrl.u32 %v4488, 7
          %v4490 = vsub.s32 %v4487, %v4489
          %v4491 = vrot.slane %v4484, %v4490
          %v4492 = vcombine.low %v4480, %v4481
          %v4494 = vunpack.c.l.s4 1983009808
          %v4495 = vunpack.c.0.s8 %v4494
          %v4496 = vlaneseq
          %v4497 = vshrl.u32 %v4496, 7
          %v4498 = vsub.s32 %v4495, %v4497
          %v4499 = vrot.slane %v4492, %v4498
          %v4500 = vcombine.low %v4472, %v4479
          %v4502 = vunpack.c.l.s4 1983009808
          %v4503 = vunpack.c.0.s8 %v4502
          %v4504 = vlaneseq
          %v4505 = vshrl.u32 %v4504, 7
          %v4506 = vsub.s32 %v4503, %v4505
          %v4507 = vrot.slane %v4500, %v4506
          %v4508 = vcombine.low %v4482, %v4483
          %v4510 = vunpack.c.l.s4 1983009808
          %v4511 = vunpack.c.0.s8 %v4510
          %v4512 = vlaneseq
          %v4513 = vshrl.u32 %v4512, 7
          %v4514 = vsub.s32 %v4511, %v4513
          %v4515 = vrot.slane %v4508, %v4514
          %v4516 = vcombine.low %v4491, %v4499
          %v4517 = vcombine.high %v4491, %v4499
          %v4519 = vunpack.c.l.s4 1934713408
          %v4520 = vunpack.c.0.s8 %v4519
          %v4521 = vlaneseq
          %v4522 = vshrl.u32 %v4521, 7
          %v4523 = vsub.s32 %v4520, %v4522
          %v4524 = vrot.slane %v4516, %v4523
          %v4526 = vunpack.c.l.s4 1934713408
          %v4527 = vunpack.c.0.s8 %v4526
          %v4528 = vlaneseq
          %v4529 = vshrl.u32 %v4528, 7
          %v4530 = vsub.s32 %v4527, %v4529
          %v4531 = vrot.slane %v4517, %v4530
          %v4532 = vcombine.low %v4507, %v4515
          %v4533 = vcombine.high %v4507, %v4515
          %v4535 = vunpack.c.l.s4 1934713408
          %v4536 = vunpack.c.0.s8 %v4535
          %v4537 = vlaneseq
          %v4538 = vshrl.u32 %v4537, 7
          %v4539 = vsub.s32 %v4536, %v4538
          %v4540 = vrot.slane %v4532, %v4539
          %v4542 = vunpack.c.l.s4 1934713408
          %v4543 = vunpack.c.0.s8 %v4542
          %v4544 = vlaneseq
          %v4545 = vshrl.u32 %v4544, 7
          %v4546 = vsub.s32 %v4543, %v4545
          %v4547 = vrot.slane %v4533, %v4546
          %v4548 = vcombine.low %v4524, %v4540
          %v4549 = vcombine.high %v4524, %v4540
          %v4550 = vcombine.low %v4531, %v4547
          %v4551 = vcombine.high %v4531, %v4547
          %4553 = vrot.lane.b32.xlu0 %v4549, 32
          %v4554 = vpop.permute.xlu0 %4553
          %4557 = vrot.lane.b32.xlu0 %v4550, 64
          %v4558 = vpop.permute.xlu0 %4557
          %4561 = vrot.lane.b32.xlu0 %v4551, 96
          %v4562 = vpop.permute.xlu0 %4561
          %v4564 = vsel %vm2626, %v4548, %v4554
          %vm4565 = vcmask 523264
          %v4566 = vsel %vm4565, %v4564, %v4558
          %vm4567 = vcmask 785408
          %v4568 = vsel %vm4567, %v4566, %v4562
          %s4569 = smul.u32 %s916, 128
          %s4570 = scalar_lea.vmem [#allocation10], %s4569
          %v4571 = vld [vmem:[%s4570] sm:$0xff]
          %v4572 = vld [vmem:[%s4570 + $0x8] sm:$0xff]
          %v4573 = vld [vmem:[%s4570 + $0x10] sm:$0xff]
          %v4574 = vld [vmem:[%s4570 + $0x18] sm:$0xff]
          %v4575 = vld [vmem:[%s4570 + $0x20] sm:$0xff]
          %v4576 = vld [vmem:[%s4570 + $0x28] sm:$0xff]
          %v4577 = vld [vmem:[%s4570 + $0x30] sm:$0xff]
          %v4578 = vld [vmem:[%s4570 + $0x38] sm:$0xff]
          %v4579 = vld [vmem:[%s4570 + $0x40] sm:$0xff]
          %v4580 = vld [vmem:[%s4570 + $0x48] sm:$0xff]
          %v4581 = vld [vmem:[%s4570 + $0x50] sm:$0xff]
          %v4582 = vld [vmem:[%s4570 + $0x58] sm:$0xff]
          %v4583 = vld [vmem:[%s4570 + $0x60] sm:$0xff]
          %v4584 = vld [vmem:[%s4570 + $0x68] sm:$0xff]
          %v4585 = vld [vmem:[%s4570 + $0x70] sm:$0xff]
          %v4586 = vld [vmem:[%s4570 + $0x78] sm:$0xff]
          %v4587 = vpack.c.bf16 %v4568, %v4568
          %v4588 = vpack.c.bf16 %v4572, %v4571
          %v4589 = vpack.c.bf16 %v4574, %v4573
          %v4590 = vpack.c.bf16 %v4576, %v4575
          %v4591 = vpack.c.bf16 %v4578, %v4577
          %v4592 = vpack.c.bf16 %v4580, %v4579
          %v4593 = vpack.c.bf16 %v4582, %v4581
          %v4594 = vpack.c.bf16 %v4584, %v4583
          %v4595 = vpack.c.bf16 %v4586, %v4585
          %s4596 = scalar_lea.vmem %s7, %s916
          %v4597 = vld [vmem:[%s4596] sm:$0x1]
          %v4599 = vlaneseq
          %v4600 = vshrl.u32 %v4599, 7
          %v4601 = vsub.s32 0, %v4600
          %v4602 = vrot.slane %v4597, %v4601
          %4604 = vmatprep.subr.bf16.mxu0 0
          %4605 = vmatpush1.bf16.msra.mxu0 %v4588
          %4606 = vmatprep.subr.bf16.mxu0 0
          %4607 = vmatpush1.bf16.msra.mxu0 %v4589
          %4608 = vmatprep.subr.bf16.mxu0 0
          %4609 = vmatpush1.bf16.msra.mxu0 %v4590
          %4610 = vmatprep.subr.bf16.mxu0 0
          %4611 = vmatpush1.bf16.msra.mxu0 %v4591
          %4612 = vmatprep.subr.bf16.mxu0 0
          %4613 = vmatpush1.bf16.msra.mxu0 %v4592
          %4614 = vmatprep.subr.bf16.mxu0 0
          %4615 = vmatpush1.bf16.msra.mxu0 %v4593
          %4616 = vmatprep.subr.bf16.mxu0 0
          %4617 = vmatpush1.bf16.msra.mxu0 %v4594
          %4618 = vmatprep.subr.bf16.mxu0 0
          %4619 = vmatpush1.bf16.msra.mxu0 %v4595
          %4620 = vmatprep.subr.bf16.mxu0 0
          %4621 = vmatpush1.bf16.msra.mxu0 0
          %4622 = vmatprep.subr.bf16.mxu0 0
          %4623 = vmatpush1.bf16.msra.mxu0 0
          %4624 = vmatprep.subr.bf16.mxu0 0
          %4625 = vmatpush1.bf16.msra.mxu0 0
          %4626 = vmatprep.subr.bf16.mxu0 0
          %4627 = vmatpush1.bf16.msra.mxu0 0
          %4628 = vmatprep.subr.bf16.mxu0 0
          %4629 = vmatpush1.bf16.msra.mxu0 0
          %4630 = vmatprep.subr.bf16.mxu0 0
          %4631 = vmatpush1.bf16.msra.mxu0 0
          %4632 = vmatprep.subr.bf16.mxu0 0
          %4633 = vmatpush1.bf16.msra.mxu0 0
          %4634 = vmatprep.subr.bf16.mxu0 0
          %4635 = vmatpush1.bf16.msra.mxu0 0
          %4636 = vmatprep.mubr.bf16.mxu0 0
          %4637 = vmatmul.mubr.bf16.gmra.mrb[0].mxu0 %v4587
          %v4638 = vpop.f32.mrb[0].mxu0
          %v4639 = vadd.f32 %v4602, %v4638
          %v4640 = vpop.f32.mrb[0].mxu0
          %v4641 = vpop.f32.mrb[0].mxu0
          %v4642 = vpop.f32.mrb[0].mxu0
          %4643 = vdwg.mxu0
          %v4644 = vadd.f32 %v921, %v4639
          %s4645 = scalar_lea.vmem %s8, %s916
          %v4646 = vld [vmem:[%s4645] sm:$0x1]
          %s4647 = scalar_lea.vmem %s9, %s916
          %v4648 = vld [vmem:[%s4647] sm:$0x1]
          %4649 = vadd.xlane.f32.xlu0 %v4644
          %v4650 = vpop.xlane.xlu0 %4649
          %v4651 = vrcp.pop 128.0
          %v4652 = vmul.f32 %v4650, %v4651
          %v4653 = vsub.f32 %v4644, %v4652
          %v4654 = vmul.f32 %v4653, %v4653
          %4655 = vadd.xlane.f32.xlu0 %v4654
          %v4656 = vpop.xlane.xlu0 %4655
          %v4657 = vmul.f32 %v4656, %v4651
          %v4658 = vadd.f32 %v4657, 1e-05
          %v4659 = vrsqrt.pop %v4658
          %v4660 = vmul.f32 %v4653, %v4659
          %v4662 = vlaneseq
          %v4663 = vshrl.u32 %v4662, 7
          %v4664 = vsub.s32 0, %v4663
          %v4665 = vrot.slane %v4646, %v4664
          %v4667 = vmul.f32 %v4660, %v4665
          %v4669 = vlaneseq
          %v4670 = vshrl.u32 %v4669, 7
          %v4671 = vsub.s32 0, %v4670
          %v4672 = vrot.slane %v4648, %v4671
          %v4674 = vadd.f32 %v4667, %v4672
          %s4675 = smul.u32 %s916, 32
          %s4676 = smul.addr %s4675, 8
          %s4677 = scalar_lea.vmem [#allocation11], %s4676
          %v4678 = vld [vmem:[%s4677] sm:$0xff]
          %v4679 = vld [vmem:[%s4677 + $0x8] sm:$0xff]
          %v4680 = vld [vmem:[%s4677 + $0x10] sm:$0xff]
          %v4681 = vld [vmem:[%s4677 + $0x18] sm:$0xff]
          %v4682 = vld [vmem:[%s4677 + $0x20] sm:$0xff]
          %v4683 = vld [vmem:[%s4677 + $0x28] sm:$0xff]
          %v4684 = vld [vmem:[%s4677 + $0x30] sm:$0xff]
          %v4685 = vld [vmem:[%s4677 + $0x38] sm:$0xff]
          %v4686 = vld [vmem:[%s4677 + $0x40] sm:$0xff]
          %v4687 = vld [vmem:[%s4677 + $0x48] sm:$0xff]
          %v4688 = vld [vmem:[%s4677 + $0x50] sm:$0xff]
          %v4689 = vld [vmem:[%s4677 + $0x58] sm:$0xff]
          %v4690 = vld [vmem:[%s4677 + $0x60] sm:$0xff]
          %v4691 = vld [vmem:[%s4677 + $0x68] sm:$0xff]
          %v4692 = vld [vmem:[%s4677 + $0x70] sm:$0xff]
          %v4693 = vld [vmem:[%s4677 + $0x78] sm:$0xff]
          %v4694 = vld [vmem:[%s4677 + $0x80] sm:$0xff]
          %v4695 = vld [vmem:[%s4677 + $0x88] sm:$0xff]
          %v4696 = vld [vmem:[%s4677 + $0x90] sm:$0xff]
          %v4697 = vld [vmem:[%s4677 + $0x98] sm:$0xff]
          %v4698 = vld [vmem:[%s4677 + $0xa0] sm:$0xff]
          %v4699 = vld [vmem:[%s4677 + $0xa8] sm:$0xff]
          %v4700 = vld [vmem:[%s4677 + $0xb0] sm:$0xff]
          %v4701 = vld [vmem:[%s4677 + $0xb8] sm:$0xff]
          %v4702 = vld [vmem:[%s4677 + $0xc0] sm:$0xff]
          %v4703 = vld [vmem:[%s4677 + $0xc8] sm:$0xff]
          %v4704 = vld [vmem:[%s4677 + $0xd0] sm:$0xff]
          %v4705 = vld [vmem:[%s4677 + $0xd8] sm:$0xff]
          %v4706 = vld [vmem:[%s4677 + $0xe0] sm:$0xff]
          %v4707 = vld [vmem:[%s4677 + $0xe8] sm:$0xff]
          %v4708 = vld [vmem:[%s4677 + $0xf0] sm:$0xff]
          %v4709 = vld [vmem:[%s4677 + $0xf8] sm:$0xff]
          %v4710 = vpack.c.bf16 %v4674, %v4674
          %v4711 = vpack.c.bf16 %v4680, %v4678
          %v4712 = vpack.c.bf16 %v4681, %v4679
          %v4713 = vpack.c.bf16 %v4684, %v4682
          %v4714 = vpack.c.bf16 %v4685, %v4683
          %v4715 = vpack.c.bf16 %v4688, %v4686
          %v4716 = vpack.c.bf16 %v4689, %v4687
          %v4717 = vpack.c.bf16 %v4692, %v4690
          %v4718 = vpack.c.bf16 %v4693, %v4691
          %v4719 = vpack.c.bf16 %v4696, %v4694
          %v4720 = vpack.c.bf16 %v4697, %v4695
          %v4721 = vpack.c.bf16 %v4700, %v4698
          %v4722 = vpack.c.bf16 %v4701, %v4699
          %v4723 = vpack.c.bf16 %v4704, %v4702
          %v4724 = vpack.c.bf16 %v4705, %v4703
          %v4725 = vpack.c.bf16 %v4708, %v4706
          %v4726 = vpack.c.bf16 %v4709, %v4707
          %s4727 = smul.u32 %s916, 2
          %s4728 = scalar_lea.vmem %s11, %s4727
          %v4729 = vld [vmem:[%s4728] sm:$0x3]
          %v4731 = vlaneseq
          %v4732 = vshrl.u32 %v4731, 7
          %v4733 = vsub.s32 0, %v4732
          %v4734 = vrot.slane %v4729, %v4733
          %v4735 = vlaneseq
          %v4736 = vshrl.u32 %v4735, 7
          %v4737 = vsub.s32 1, %v4736
          %v4738 = vrot.slane %v4729, %v4737
          %4741 = vmatprep.subr.bf16.mxu0 %v4712
          %4742 = vmatpush1.bf16.msra.mxu0 %v4711
          %4743 = vmatprep.subr.bf16.mxu0 %v4714
          %4744 = vmatpush1.bf16.msra.mxu0 %v4713
          %4745 = vmatprep.subr.bf16.mxu0 %v4716
          %4746 = vmatpush1.bf16.msra.mxu0 %v4715
          %4747 = vmatprep.subr.bf16.mxu0 %v4718
          %4748 = vmatpush1.bf16.msra.mxu0 %v4717
          %4749 = vmatprep.subr.bf16.mxu0 %v4720
          %4750 = vmatpush1.bf16.msra.mxu0 %v4719
          %4751 = vmatprep.subr.bf16.mxu0 %v4722
          %4752 = vmatpush1.bf16.msra.mxu0 %v4721
          %4753 = vmatprep.subr.bf16.mxu0 %v4724
          %4754 = vmatpush1.bf16.msra.mxu0 %v4723
          %4755 = vmatprep.subr.bf16.mxu0 %v4726
          %4756 = vmatpush1.bf16.msra.mxu0 %v4725
          %4757 = vmatprep.subr.bf16.mxu0 0
          %4758 = vmatpush1.bf16.msra.mxu0 0
          %4759 = vmatprep.subr.bf16.mxu0 0
          %4760 = vmatpush1.bf16.msra.mxu0 0
          %4761 = vmatprep.subr.bf16.mxu0 0
          %4762 = vmatpush1.bf16.msra.mxu0 0
          %4763 = vmatprep.subr.bf16.mxu0 0
          %4764 = vmatpush1.bf16.msra.mxu0 0
          %4765 = vmatprep.subr.bf16.mxu0 0
          %4766 = vmatpush1.bf16.msra.mxu0 0
          %4767 = vmatprep.subr.bf16.mxu0 0
          %4768 = vmatpush1.bf16.msra.mxu0 0
          %4769 = vmatprep.subr.bf16.mxu0 0
          %4770 = vmatpush1.bf16.msra.mxu0 0
          %4771 = vmatprep.subr.bf16.mxu0 0
          %4772 = vmatpush1.bf16.msra.mxu0 0
          %4773 = vmatprep.mubr.bf16.mxu0 0
          %4774 = vmatmul.mubr.bf16.gmra.mrb[0].mxu0 %v4710
          %v4775 = vpop.f32.mrb[0].mxu0
          %v4776 = vadd.f32 %v4734, %v4775
          %v4777 = vpop.f32.mrb[0].mxu0
          %v4778 = vadd.f32 %v4738, %v4777
          %v4779 = vpop.f32.mrb[0].mxu0
          %v4780 = vpop.f32.mrb[0].mxu0
          %4781 = vdwg.mxu0
          %v4782 = vmax.f32 %v4776, 0.0
          %v4783 = vmax.f32 %v4778, 0.0
          %s4784 = smul.u32 %s916, 256
          %s4785 = scalar_lea.vmem [#allocation13], %s4784
          %v4786 = vld [vmem:[%s4785] sm:$0xff]
          %v4787 = vld [vmem:[%s4785 + $0x8] sm:$0xff]
          %v4788 = vld [vmem:[%s4785 + $0x10] sm:$0xff]
          %v4789 = vld [vmem:[%s4785 + $0x18] sm:$0xff]
          %v4790 = vld [vmem:[%s4785 + $0x20] sm:$0xff]
          %v4791 = vld [vmem:[%s4785 + $0x28] sm:$0xff]
          %v4792 = vld [vmem:[%s4785 + $0x30] sm:$0xff]
          %v4793 = vld [vmem:[%s4785 + $0x38] sm:$0xff]
          %v4794 = vld [vmem:[%s4785 + $0x40] sm:$0xff]
          %v4795 = vld [vmem:[%s4785 + $0x48] sm:$0xff]
          %v4796 = vld [vmem:[%s4785 + $0x50] sm:$0xff]
          %v4797 = vld [vmem:[%s4785 + $0x58] sm:$0xff]
          %v4798 = vld [vmem:[%s4785 + $0x60] sm:$0xff]
          %v4799 = vld [vmem:[%s4785 + $0x68] sm:$0xff]
          %v4800 = vld [vmem:[%s4785 + $0x70] sm:$0xff]
          %v4801 = vld [vmem:[%s4785 + $0x78] sm:$0xff]
          %v4802 = vld [vmem:[%s4785 + $0x80] sm:$0xff]
          %v4803 = vld [vmem:[%s4785 + $0x88] sm:$0xff]
          %v4804 = vld [vmem:[%s4785 + $0x90] sm:$0xff]
          %v4805 = vld [vmem:[%s4785 + $0x98] sm:$0xff]
          %v4806 = vld [vmem:[%s4785 + $0xa0] sm:$0xff]
          %v4807 = vld [vmem:[%s4785 + $0xa8] sm:$0xff]
          %v4808 = vld [vmem:[%s4785 + $0xb0] sm:$0xff]
          %v4809 = vld [vmem:[%s4785 + $0xb8] sm:$0xff]
          %v4810 = vld [vmem:[%s4785 + $0xc0] sm:$0xff]
          %v4811 = vld [vmem:[%s4785 + $0xc8] sm:$0xff]
          %v4812 = vld [vmem:[%s4785 + $0xd0] sm:$0xff]
          %v4813 = vld [vmem:[%s4785 + $0xd8] sm:$0xff]
          %v4814 = vld [vmem:[%s4785 + $0xe0] sm:$0xff]
          %v4815 = vld [vmem:[%s4785 + $0xe8] sm:$0xff]
          %v4816 = vld [vmem:[%s4785 + $0xf0] sm:$0xff]
          %v4817 = vld [vmem:[%s4785 + $0xf8] sm:$0xff]
          %v4818 = vpack.c.bf16 %v4782, %v4782
          %v4819 = vpack.c.bf16 %v4783, %v4783
          %v4820 = vpack.c.bf16 %v4787, %v4786
          %v4821 = vpack.c.bf16 %v4789, %v4788
          %v4822 = vpack.c.bf16 %v4791, %v4790
          %v4823 = vpack.c.bf16 %v4793, %v4792
          %v4824 = vpack.c.bf16 %v4795, %v4794
          %v4825 = vpack.c.bf16 %v4797, %v4796
          %v4826 = vpack.c.bf16 %v4799, %v4798
          %v4827 = vpack.c.bf16 %v4801, %v4800
          %v4828 = vpack.c.bf16 %v4803, %v4802
          %v4829 = vpack.c.bf16 %v4805, %v4804
          %v4830 = vpack.c.bf16 %v4807, %v4806
          %v4831 = vpack.c.bf16 %v4809, %v4808
          %v4832 = vpack.c.bf16 %v4811, %v4810
          %v4833 = vpack.c.bf16 %v4813, %v4812
          %v4834 = vpack.c.bf16 %v4815, %v4814
          %v4835 = vpack.c.bf16 %v4817, %v4816
          %s4836 = scalar_lea.vmem %s13, %s916
          %v4837 = vld [vmem:[%s4836] sm:$0x1]
          %v4839 = vlaneseq
          %v4840 = vshrl.u32 %v4839, 7
          %v4841 = vsub.s32 0, %v4840
          %v4842 = vrot.slane %v4837, %v4841
          %4844 = vmatprep.subr.bf16.mxu0 0
          %4845 = vmatpush1.bf16.msra.mxu0 %v4820
          %4846 = vmatprep.subr.bf16.mxu0 0
          %4847 = vmatpush1.bf16.msra.mxu0 %v4821
          %4848 = vmatprep.subr.bf16.mxu0 0
          %4849 = vmatpush1.bf16.msra.mxu0 %v4822
          %4850 = vmatprep.subr.bf16.mxu0 0
          %4851 = vmatpush1.bf16.msra.mxu0 %v4823
          %4852 = vmatprep.subr.bf16.mxu0 0
          %4853 = vmatpush1.bf16.msra.mxu0 %v4824
          %4854 = vmatprep.subr.bf16.mxu0 0
          %4855 = vmatpush1.bf16.msra.mxu0 %v4825
          %4856 = vmatprep.subr.bf16.mxu0 0
          %4857 = vmatpush1.bf16.msra.mxu0 %v4826
          %4858 = vmatprep.subr.bf16.mxu0 0
          %4859 = vmatpush1.bf16.msra.mxu0 %v4827
          %4860 = vmatprep.subr.bf16.mxu0 0
          %4861 = vmatpush1.bf16.msra.mxu0 %v4828
          %4862 = vmatprep.subr.bf16.mxu0 0
          %4863 = vmatpush1.bf16.msra.mxu0 %v4829
          %4864 = vmatprep.subr.bf16.mxu0 0
          %4865 = vmatpush1.bf16.msra.mxu0 %v4830
          %4866 = vmatprep.subr.bf16.mxu0 0
          %4867 = vmatpush1.bf16.msra.mxu0 %v4831
          %4868 = vmatprep.subr.bf16.mxu0 0
          %4869 = vmatpush1.bf16.msra.mxu0 %v4832
          %4870 = vmatprep.subr.bf16.mxu0 0
          %4871 = vmatpush1.bf16.msra.mxu0 %v4833
          %4872 = vmatprep.subr.bf16.mxu0 0
          %4873 = vmatpush1.bf16.msra.mxu0 %v4834
          %4874 = vmatprep.subr.bf16.mxu0 0
          %4875 = vmatpush1.bf16.msra.mxu0 %v4835
          %4876 = vmatprep.mubr.bf16.mxu0 %v4819
          %4877 = vmatmul.mubr.bf16.gmra.mrb[0].mxu0 %v4818
          %v4878 = vpop.f32.mrb[0].mxu0
          %v4879 = vadd.f32 %v4842, %v4878
          %v4880 = vpop.f32.mrb[0].mxu0
          %v4881 = vpop.f32.mrb[0].mxu0
          %v4882 = vpop.f32.mrb[0].mxu0
          %4883 = vdwg.mxu0
          %v4884 = vadd.f32 %v4674, %v4879
          %s4885 = scalar_lea.vmem %s14, %s916
          %v4886 = vld [vmem:[%s4885] sm:$0x1]
          %s4887 = scalar_lea.vmem %s15, %s916
          %v4888 = vld [vmem:[%s4887] sm:$0x1]
          %4889 = vadd.xlane.f32.xlu0 %v4884
          %v4890 = vpop.xlane.xlu0 %4889
          %v4891 = vmul.f32 %v4890, %v4651
          %v4892 = vsub.f32 %v4884, %v4891
          %v4893 = vmul.f32 %v4892, %v4892
          %4894 = vadd.xlane.f32.xlu0 %v4893
          %v4895 = vpop.xlane.xlu0 %4894
          %v4896 = vmul.f32 %v4895, %v4651
          %v4897 = vadd.f32 %v4896, 1e-05
          %v4898 = vrsqrt.pop %v4897
          %v4899 = vmul.f32 %v4892, %v4898
          %v4901 = vlaneseq
          %v4902 = vshrl.u32 %v4901, 7
          %v4903 = vsub.s32 0, %v4902
          %v4904 = vrot.slane %v4886, %v4903
          %v4906 = vmul.f32 %v4899, %v4904
          %v4908 = vlaneseq
          %v4909 = vshrl.u32 %v4908, 7
          %v4910 = vsub.s32 0, %v4909
          %v4911 = vrot.slane %v4888, %v4910
          %v4913 = vadd.f32 %v4906, %v4911
        $region117: #{tpu_custom_call.1} parent=83 // loop_footer
          %s920 = sadd.s32 1, %s916
        $region118: #{tpu_custom_call.1} parent=83 // loop_footer_branch
          %915 = sbr.rel target = $region114
        $region119: #{tpu_custom_call.1} parent=83 // loop_exit
          _
        %4914 = vst [vmem:[%s622] sm:$0xff] %v921
        %s4915 = sand.u32 %s385, 1
        %s4916 = scalar_lea.sflag [#allocation4], %s4915
        %s4917 = sand.u32 %s385, 1
        %s4918 = smul.addr %s4917, 8
        %s4919 = scalar_lea.vmem [#allocation14], %s4918
        // Predicated region
        $region120: #{tpu_custom_call.1} parent=83 // pred_check
          %p4920 = pneg %p395
        $region121: #{tpu_custom_call.1} parent=83 // pred_check_branch
          %4922 = sbr.rel (%p4920) target = $region123
        $region122: #{tpu_custom_call.1} parent=83 // pred_region
          %s4924 = ssub.s32 128, 128
          %4925 = vsyncadd %s4916, %s4924
          %s4926 = smul.addr %s36, 128
          %s4927 = scalar_lea.hbm %s16, %s4926
          %s4929 = sshll.u32 %s4919, 4
          %s4930 = int_to_ptr.vmem [resolvable:$true] %s4929
          %4932 = dma.vmem_to_hbm [thread:$0]  %s4930, 128, %s4927, %s4916
        $region123: #{tpu_custom_call.1} parent=83 // pred_fallthru
          _
      $region84: #{tpu_custom_call.1} parent=5 // pred_fallthru
        _
      %p4933 = scmp.le.s32.totalorder 2, %s31
      // Predicated region
      $region124: #{tpu_custom_call.1} parent=5 // pred_check
        %p4934 = pneg %p4933
      $region125: #{tpu_custom_call.1} parent=5 // pred_check_branch
        %4936 = sbr.rel (%p4934) target = $region127
      $region126: #{tpu_custom_call.1} parent=5 // pred_region
        %s4937 = ssub.s32 %s31, 2
        // Predicated region
        $region128: #{tpu_custom_call.1} parent=126 // pred_check
          %p4938 = pneg %p401
        $region129: #{tpu_custom_call.1} parent=126 // pred_check_branch
          %4940 = sbr.rel (%p4938) target = $region131
        $region130: #{tpu_custom_call.1} parent=126 // pred_region
          %s4941 = sand.u32 %s386, 1
          %s4942 = scalar_lea.sflag [#allocation4], %s4941
          %s4943 = sand.u32 %s386, 1
          %s4944 = smul.addr %s4943, 8
          %s4945 = scalar_lea.vmem [#allocation14], %s4944
          %4946 = dma.done %s4942, 128
        $region131: #{tpu_custom_call.1} parent=126 // pred_fallthru
          _
      $region127: #{tpu_custom_call.1} parent=5 // pred_fallthru
        _
    $region6: #{tpu_custom_call.1} parent=1 // loop_footer
      %s35 = sadd.s32 1, %s31
    $region7: #{tpu_custom_call.1} parent=1 // loop_footer_branch
      %30 = sbr.rel target = $region3
    $region8: #{tpu_custom_call.1} parent=1 // loop_exit
      _
    %4947 = vsyncpa [#allocation3], 1
    %s4948 = scalar_lea.sflag [#allocation3], 1
    %4949 = vsyncpa %s4948, 1
    %4950 = vsyncpa [#allocation6], 1
    %4951 = vsyncpa [#allocation9], 1
    %4952 = vsyncpa [#allocation12], 1
    %4953 = vsyncpa [#allocation4], 1
    %s4954 = scalar_lea.sflag [#allocation4], 1
    %4955 = vsyncpa %s4954, 1

</llo_original>
